<compile_context>
chip_gen: v5e
topology: v5e:2x2
jax: 0.10.0
libtpu: 0.0.40
codegen_flags: <defaults>
</compile_context>

<pallas_src>
import functools

import jax
import jax.numpy as jnp
from jax import lax
from jax.experimental import pallas as pl
from jax.experimental.pallas import tpu as pltpu

EPS = 1e-6


# ---------------------------------------------------------------------------
# helpers
# ---------------------------------------------------------------------------
def _round_up(x, m):
    return (x + m - 1) // m * m


def _pick_tile(n, candidates=(256, 128)):
    for t in candidates:
        if n >= t and n % t == 0:
            return t
    # TODO(synk): pad N at awkward resolutions instead of a full-N fallback.
    return n


def _vmem_limit(estimate_bytes):
    # Raise the scoped-VMEM limit above the v5e (16 MiB) / v6e (32 MiB)
    # defaults when the tiles need it, capped at 48 MiB so it stays safely
    # under v7x's 64 MiB of physical VMEM.
    return int(min(max(2 * estimate_bytes + (8 << 20), 32 << 20), 48 << 20))


# ---------------------------------------------------------------------------
# Kernel A: GroupNorm normalize (per-channel scale/shift precomputed) fused
# with the q/k/v 1x1-conv projections as one wide (TN, C) @ (C, 3C) matmul.
# Grid = (B, N // TN); everything bf16 on the MXU, f32 accumulation.
# ---------------------------------------------------------------------------
def _norm_qkv_kernel(x_ref, scale_ref, shift_ref, wqkv_ref, bqkv_ref,
                     q_ref, k_ref, v_ref):
    Cp = x_ref.shape[-1]
    x = x_ref[0]                                        # (TN, Cp) f32
    hn = x * scale_ref[0] + shift_ref[0]                # GroupNorm + affine
    qkv = jnp.dot(hn.astype(jnp.bfloat16), wqkv_ref[...],
                  preferred_element_type=jnp.float32) + bqkv_ref[...]
    # 128-lane-aligned static slices (Cp is a multiple of 128).
    q_ref[0] = qkv[:, :Cp].astype(jnp.bfloat16)
    k_ref[0] = qkv[:, Cp:2 * Cp].astype(jnp.bfloat16)
    v_ref[0] = qkv[:, 2 * Cp:].astype(jnp.bfloat16)


def norm_qkv(x, scale_c, shift_c, wqkv, bqkv):
    B, N, Cp = x.shape
    TN = _pick_tile(N, (512, 256, 128))
    est = (2 * TN * Cp * 4                 # x blocks (double-buffered)
           + 3 * 2 * TN * Cp * 2           # q/k/v bf16 output blocks
           + Cp * 3 * Cp * 2 + 3 * Cp * 4  # fused weight + bias
           + 2 * TN * 3 * Cp * 4)          # f32 qkv intermediate, slack
    out_sd = jax.ShapeDtypeStruct((B, N, Cp), jnp.bfloat16)
    return pl.pallas_call(
        _norm_qkv_kernel,
        out_shape=(out_sd, out_sd, out_sd),
        grid=(B, N // TN),
        in_specs=[
            pl.BlockSpec((1, TN, Cp), lambda b, i: (b, i, 0)),   # x tile
            pl.BlockSpec((1, 1, Cp), lambda b, i: (b, 0, 0)),    # GN scale
            pl.BlockSpec((1, 1, Cp), lambda b, i: (b, 0, 0)),    # GN shift
            pl.BlockSpec((Cp, 3 * Cp), lambda b, i: (0, 0)),     # W_qkv (bf16)
            pl.BlockSpec((1, 3 * Cp), lambda b, i: (0, 0)),      # b_qkv (f32)
        ],
        out_specs=[
            pl.BlockSpec((1, TN, Cp), lambda b, i: (b, i, 0)),
            pl.BlockSpec((1, TN, Cp), lambda b, i: (b, i, 0)),
            pl.BlockSpec((1, TN, Cp), lambda b, i: (b, i, 0)),
        ],
        compiler_params=pltpu.CompilerParams(
            dimension_semantics=("parallel", "parallel"),
            vmem_limit_bytes=_vmem_limit(est)),
    )(x, scale_c, shift_c, wqkv, bqkv)


# ---------------------------------------------------------------------------
# Kernel B: flash-style spatial self-attention fused with proj_out and the
# residual add.  Grid = (B, N // TQ, N // TK): query blocks are parallel,
# the K/V axis is innermost / "arbitrary"; running max, denominator and
# output accumulator live in VMEM scratch.  Softmax normalization is deferred
# until after the P@V accumulation.
# ---------------------------------------------------------------------------
def _flash_attn_proj_res_kernel(q_ref, k_ref, v_ref, xres_ref, wp_ref, bp_ref,
                                o_ref, m_sc, l_sc, acc_sc, *, scale):
    kv = pl.program_id(2)

    @pl.when(kv == 0)
    def _():
        m_sc[...] = jnp.full(m_sc.shape, -jnp.inf, jnp.float32)
        l_sc[...] = jnp.zeros(l_sc.shape, jnp.float32)
        acc_sc[...] = jnp.zeros(acc_sc.shape, jnp.float32)

    q = q_ref[0]                                        # (TQ, Cp) bf16
    k = k_ref[0]                                        # (TK, Cp) bf16
    v = v_ref[0]                                        # (TK, Cp) bf16

    # scores (TQ, TK) = q @ k^T, bf16 operands, f32 accumulation.
    s = lax.dot_general(q, k, (((1,), (1,)), ((), ())),
                        preferred_element_type=jnp.float32) * scale
    m_prev = m_sc[...]
    m_new = jnp.maximum(m_prev, jnp.max(s, axis=-1, keepdims=True))
    alpha = jnp.exp(m_prev - m_new)
    p = jnp.exp(s - m_new)                              # unnormalized, f32
    l_sc[...] = alpha * l_sc[...] + jnp.sum(p, axis=-1, keepdims=True)
    acc_sc[...] = alpha * acc_sc[...] + jnp.dot(
        p.astype(jnp.bfloat16), v, preferred_element_type=jnp.float32)
    m_sc[...] = m_new

    @pl.when(kv == pl.num_programs(2) - 1)
    def _():
        # Deferred normalization: one (TQ, Cp) multiply, reciprocal on the EUP.
        attn = acc_sc[...] * pl.reciprocal(l_sc[...], approx=True)
        h = jnp.dot(attn.astype(jnp.bfloat16), wp_ref[...],
                    preferred_element_type=jnp.float32) + bp_ref[...]
        o_ref[0] = (h + xres_ref[0]).astype(o_ref.dtype)


def attn_proj_residual(q, k, v, x, wp, bp, *, scale):
    B, N, Cp = q.shape
    TQ = _pick_tile(N, (256, 128))
    TK = _pick_tile(N, (256, 128))
    kernel = functools.partial(_flash_attn_proj_res_kernel, scale=scale)
    est = (2 * TQ * Cp * 2           # q bf16
           + 2 * 2 * TK * Cp * 2     # k + v bf16
           + 2 * TQ * Cp * 4         # residual x
           + 2 * TQ * Cp * 4         # output
           + Cp * Cp * 2 + Cp * 4    # proj weight + bias
           + TQ * Cp * 4 + 2 * TQ * 4      # scratch
           + 2 * TQ * TK * 4)        # score / exp temporaries
    return pl.pallas_call(
        kernel,
        out_shape=jax.ShapeDtypeStruct((B, N, Cp), jnp.float32),
        grid=(B, N // TQ, N // TK),
        in_specs=[
            pl.BlockSpec((1, TQ, Cp), lambda b, i, j: (b, i, 0)),   # q block
            pl.BlockSpec((1, TK, Cp), lambda b, i, j: (b, j, 0)),   # k block
            pl.BlockSpec((1, TK, Cp), lambda b, i, j: (b, j, 0)),   # v block
            pl.BlockSpec((1, TQ, Cp), lambda b, i, j: (b, i, 0)),   # residual x
            pl.BlockSpec((Cp, Cp), lambda b, i, j: (0, 0)),         # proj_out W
            pl.BlockSpec((1, Cp), lambda b, i, j: (0, 0)),          # proj_out b
        ],
        out_specs=pl.BlockSpec((1, TQ, Cp), lambda b, i, j: (b, i, 0)),
        scratch_shapes=[pltpu.VMEM((TQ, 1), jnp.float32),     # running max
                        pltpu.VMEM((TQ, 1), jnp.float32),     # running denom
                        pltpu.VMEM((TQ, Cp), jnp.float32)],   # accumulator
        compiler_params=pltpu.CompilerParams(
            dimension_semantics=("parallel", "parallel", "arbitrary"),
            vmem_limit_bytes=_vmem_limit(est)),
    )(q, k, v, x, wp, bp)


# ---------------------------------------------------------------------------
# Full AttnBlock forward (NCHW in / NCHW out).  1x1-conv weights are stored as
# (Cin, Cout), i.e. the transpose of PyTorch's Conv2d weight[:, :, 0, 0].
# ---------------------------------------------------------------------------
def attn_block_forward(x_nchw, params, num_groups=32):
    # TODO(synk): keep activations NHWC end-to-end in the surrounding graph so
    # the two transposes (an extra HBM round trip each) disappear.
    B, C, H, W = x_nchw.shape
    N = H * W
    G = num_groups
    Cp = _round_up(C, 128)
    pad = Cp - C

    x = jnp.transpose(x_nchw, (0, 2, 3, 1)).reshape(B, N, C).astype(jnp.float32)

    # GroupNorm statistics pre-pass in plain f32 JAX (cheap reduction), folded
    # into per-channel scale/shift so the kernel only does a fused multiply-add.
    xr = x.reshape(B, N, G, C // G)
    mean_g = jnp.mean(xr, axis=(1, 3))                                   # (B, G)
    var_g = jnp.mean(jnp.square(xr - mean_g[:, None, :, None]), axis=(1, 3))
    rstd_g = lax.rsqrt(var_g + EPS)
    mean_c = jnp.repeat(mean_g, C // G, axis=1)                          # (B, C)
    rstd_c = jnp.repeat(rstd_g, C // G, axis=1)
    scale_c = rstd_c * params["gamma"][None, :]
    shift_c = params["beta"][None, :] - mean_c * scale_c

    # Zero-pad channels to a multiple of 128: lane-dense stores and aligned
    # in-kernel slices; padded channels stay exactly zero end-to-end.
    padc = (lambda a: jnp.pad(a, ((0, 0),) * (a.ndim - 1) + ((0, pad),))
            if pad else (lambda a: a))
    pad2 = (lambda w: jnp.pad(w, ((0, pad), (0, pad)))) if pad else (lambda w: w)

    x_p = padc(x)
    scale_p = padc(scale_c).reshape(B, 1, Cp)
    shift_p = padc(shift_c).reshape(B, 1, Cp)

    wqkv = jnp.concatenate(
        [pad2(params["wq"]), pad2(params["wk"]), pad2(params["wv"])],
        axis=1).astype(jnp.bfloat16)                                     # (Cp, 3Cp)
    bqkv = jnp.concatenate(
        [padc(params["bq"][None, :]), padc(params["bk"][None, :]),
         padc(params["bv"][None, :])], axis=1)                           # (1, 3Cp)
    wp = pad2(params["wp"]).astype(jnp.bfloat16)                         # (Cp, Cp)
    bp = padc(params["bp"][None, :])                                     # (1, Cp)

    q, k, v = norm_qkv(x_p, scale_p, shift_p, wqkv, bqkv)
    out = attn_proj_residual(q, k, v, x_p, wp, bp, scale=float(C) ** (-0.5))

    if pad:
        out = out[:, :, :C]
    return jnp.transpose(out.reshape(B, H, W, C), (0, 3, 1, 2))


# ---------------------------------------------------------------------------
# Pure-JAX f32 reference for verification
# ---------------------------------------------------------------------------
def attn_block_ref(x_nchw, p, num_groups=32):
    B, C, H, W = x_nchw.shape
    N = H * W
    G = num_groups
    hp = lax.Precision.HIGHEST
    x = jnp.transpose(x_nchw, (0, 2, 3, 1)).reshape(B, N, C)

    xr = x.reshape(B, N, G, C // G)
    mean = xr.mean(axis=(1, 3), keepdims=True)
    var = ((xr - mean) ** 2).mean(axis=(1, 3), keepdims=True)
    hn = ((xr - mean) / jnp.sqrt(var + EPS)).reshape(B, N, C)
    hn = hn * p["gamma"].reshape(1, 1, C) + p["beta"].reshape(1, 1, C)

    q = jnp.einsum("bnc,cd->bnd", hn, p["wq"], precision=hp) + p["bq"]
    k = jnp.einsum("bnc,cd->bnd", hn, p["wk"], precision=hp) + p["bk"]
    v = jnp.einsum("bnc,cd->bnd", hn, p["wv"], precision=hp) + p["bv"]

    s = jnp.einsum("bic,bjc->bij", q, k, precision=hp) * (float(C) ** (-0.5))
    w = jax.nn.softmax(s, axis=-1)
    a = jnp.einsum("bij,bjc->bic", w, v, precision=hp)
    h = jnp.einsum("bnc,cd->bnd", a, p["wp"], precision=hp) + p["bp"]

    out = x + h
    return jnp.transpose(out.reshape(B, H, W, C), (0, 3, 1, 2))


if __name__ == "__main__":
    B, C, H, W, G = 2, 64, 16, 16, 32   # num_groups=32 (module default) => C >= 32

    key = jax.random.PRNGKey(0)
    ks = jax.random.split(key, 11)
    params = {
        "gamma": 1.0 + 0.1 * jax.random.normal(ks[0], (C,), jnp.float32),
        "beta": 0.1 * jax.random.normal(ks[1], (C,), jnp.float32),
        "wq": 0.2 * jax.random.normal(ks[2], (C, C), jnp.float32),
        "bq": 0.1 * jax.random.normal(ks[3], (C,), jnp.float32),
        "wk": 0.2 * jax.random.normal(ks[4], (C, C), jnp.float32),
        "bk": 0.1 * jax.random.normal(ks[5], (C,), jnp.float32),
        "wv": 0.2 * jax.random.normal(ks[6], (C, C), jnp.float32),
        "bv": 0.1 * jax.random.normal(ks[7], (C,), jnp.float32),
        "wp": 0.2 * jax.random.normal(ks[8], (C, C), jnp.float32),
        "bp": 0.1 * jax.random.normal(ks[9], (C,), jnp.float32),
    }

    x_nchw = jax.random.normal(ks[10], (B, C, H, W), jnp.float32)

    fwd = jax.jit(functools.partial(attn_block_forward, num_groups=G))
    out = jax.block_until_ready(fwd(x_nchw, params))

    ref = attn_block_ref(x_nchw, params, num_groups=G)
    assert out.shape == x_nchw.shape
    max_err = float(jnp.max(jnp.abs(out - ref)))
    ref_mag = float(jnp.max(jnp.abs(ref)))
    # Matmul operands are bf16 (f32 accumulation), so the tolerance is scaled
    # to bf16 precision relative to the output magnitude.
    assert max_err <= 0.05 * max(ref_mag, 1.0), (
        f"max abs err {max_err} vs ref magnitude {ref_mag}")

    print("KERNEL_OK")
</pallas_src>

<mosaic_0001>
module attributes {stable_mosaic.version = 11 : i64} {
  func.func @_norm_qkv_kernel(%arg0: i32, %arg1: i32, %arg2: memref<1x256x128xf32, #tpu.memory_space<vmem>>, %arg3: memref<1x1x128xf32, #tpu.memory_space<vmem>>, %arg4: memref<1x1x128xf32, #tpu.memory_space<vmem>>, %arg5: memref<128x384xbf16, #tpu.memory_space<vmem>>, %arg6: memref<1x384xf32, #tpu.memory_space<vmem>>, %arg7: memref<1x256x128xbf16, #tpu.memory_space<vmem>>, %arg8: memref<1x256x128xbf16, #tpu.memory_space<vmem>>, %arg9: memref<1x256x128xbf16, #tpu.memory_space<vmem>>) attributes {dimension_semantics = [#tpu.dimension_semantics<parallel>, #tpu.dimension_semantics<parallel>], iteration_bounds = array<i64: 2, 1>, scalar_prefetch = 0 : i64, scratch_operands = 0 : i64, tpu.core_type = #tpu.core_type<tc>, window_params = [{transform_indices = @transform_0, window_bounds = array<i64: 1, 256, 128>}, {transform_indices = @transform_1, window_bounds = array<i64: 1, 1, 128>}, {transform_indices = @transform_2, window_bounds = array<i64: 1, 1, 128>}, {pipeline_mode = #tpu.pipeline_mode<synchronous>, transform_indices = @transform_3, window_bounds = array<i64: 128, 384>}, {pipeline_mode = #tpu.pipeline_mode<synchronous>, transform_indices = @transform_4, window_bounds = array<i64: 1, 384>}, {transform_indices = @transform_5, window_bounds = array<i64: 1, 256, 128>}, {transform_indices = @transform_6, window_bounds = array<i64: 1, 256, 128>}, {transform_indices = @transform_7, window_bounds = array<i64: 1, 256, 128>}]} {
    %c0 = arith.constant 0 : index
    %c0_0 = arith.constant 0 : index
    %c0_1 = arith.constant 0 : index
    %0 = vector.load %arg2[%c0, %c0_0, %c0_1] : memref<1x256x128xf32, #tpu.memory_space<vmem>>, vector<1x256x128xf32>
    %1 = vector.shape_cast %0 : vector<1x256x128xf32> to vector<256x128xf32>
    %c0_2 = arith.constant 0 : index
    %c0_3 = arith.constant 0 : index
    %c0_4 = arith.constant 0 : index
    %2 = vector.load %arg3[%c0_2, %c0_3, %c0_4] : memref<1x1x128xf32, #tpu.memory_space<vmem>>, vector<1x1x128xf32>
    %3 = vector.shape_cast %2 : vector<1x1x128xf32> to vector<1x128xf32>
    %4 = vector.broadcast %3 : vector<1x128xf32> to vector<256x128xf32>
    %5 = arith.mulf %1, %4 : vector<256x128xf32>
    %c0_5 = arith.constant 0 : index
    %c0_6 = arith.constant 0 : index
    %c0_7 = arith.constant 0 : index
    %6 = vector.load %arg4[%c0_5, %c0_6, %c0_7] : memref<1x1x128xf32, #tpu.memory_space<vmem>>, vector<1x1x128xf32>
    %7 = vector.shape_cast %6 : vector<1x1x128xf32> to vector<1x128xf32>
    %8 = vector.broadcast %7 : vector<1x128xf32> to vector<256x128xf32>
    %9 = arith.addf %5, %8 : vector<256x128xf32>
    %10 = arith.truncf %9 : vector<256x128xf32> to vector<256x128xbf16>
    %c0_8 = arith.constant 0 : index
    %c0_9 = arith.constant 0 : index
    %11 = vector.load %arg5[%c0_8, %c0_9] : memref<128x384xbf16, #tpu.memory_space<vmem>>, vector<128x384xbf16>
    %cst = arith.constant dense<0.000000e+00> : vector<256x384xf32>
    %12 = tpu.matmul %10, %11, %cst {dimension_numbers = #tpu.dot_dimension_numbers<[1], [0], [0], [1], [0, 0, 1, 1], [], []>} : vector<256x128xbf16>, vector<128x384xbf16>, vector<256x384xf32> -> vector<256x384xf32>
    %c0_10 = arith.constant 0 : index
    %c0_11 = arith.constant 0 : index
    %13 = vector.load %arg6[%c0_10, %c0_11] : memref<1x384xf32, #tpu.memory_space<vmem>>, vector<1x384xf32>
    %14 = vector.broadcast %13 : vector<1x384xf32> to vector<256x384xf32>
    %15 = arith.addf %12, %14 : vector<256x384xf32>
    %16 = vector.extract_strided_slice %15 {offsets = [0, 0], sizes = [256, 128], strides = [1, 1]} : vector<256x384xf32> to vector<256x128xf32>
    %17 = arith.truncf %16 : vector<256x128xf32> to vector<256x128xbf16>
    %c0_12 = arith.constant 0 : index
    %c0_13 = arith.constant 0 : index
    %c0_14 = arith.constant 0 : index
    %18 = vector.load %arg7[%c0_12, %c0_13, %c0_14] : memref<1x256x128xbf16, #tpu.memory_space<vmem>>, vector<1x256x128xbf16>
    %19 = vector.shape_cast %18 : vector<1x256x128xbf16> to vector<256x128xbf16>
    %20 = vector.shape_cast %17 : vector<256x128xbf16> to vector<1x256x128xbf16>
    tpu.vector_store %arg7[%c0_12, %c0_13, %c0_14], %20 {strides = array<i32>} : memref<1x256x128xbf16, #tpu.memory_space<vmem>>, vector<1x256x128xbf16>,
    %21 = vector.extract_strided_slice %15 {offsets = [0, 128], sizes = [256, 128], strides = [1, 1]} : vector<256x384xf32> to vector<256x128xf32>
    %22 = arith.truncf %21 : vector<256x128xf32> to vector<256x128xbf16>
    %c0_15 = arith.constant 0 : index
    %c0_16 = arith.constant 0 : index
    %c0_17 = arith.constant 0 : index
    %23 = vector.load %arg8[%c0_15, %c0_16, %c0_17] : memref<1x256x128xbf16, #tpu.memory_space<vmem>>, vector<1x256x128xbf16>
    %24 = vector.shape_cast %23 : vector<1x256x128xbf16> to vector<256x128xbf16>
    %25 = vector.shape_cast %22 : vector<256x128xbf16> to vector<1x256x128xbf16>
    tpu.vector_store %arg8[%c0_15, %c0_16, %c0_17], %25 {strides = array<i32>} : memref<1x256x128xbf16, #tpu.memory_space<vmem>>, vector<1x256x128xbf16>,
    %26 = vector.extract_strided_slice %15 {offsets = [0, 256], sizes = [256, 128], strides = [1, 1]} : vector<256x384xf32> to vector<256x128xf32>
    %27 = arith.truncf %26 : vector<256x128xf32> to vector<256x128xbf16>
    %c0_18 = arith.constant 0 : index
    %c0_19 = arith.constant 0 : index
    %c0_20 = arith.constant 0 : index
    %28 = vector.load %arg9[%c0_18, %c0_19, %c0_20] : memref<1x256x128xbf16, #tpu.memory_space<vmem>>, vector<1x256x128xbf16>
    %29 = vector.shape_cast %28 : vector<1x256x128xbf16> to vector<256x128xbf16>
    %30 = vector.shape_cast %27 : vector<256x128xbf16> to vector<1x256x128xbf16>
    tpu.vector_store %arg9[%c0_18, %c0_19, %c0_20], %30 {strides = array<i32>} : memref<1x256x128xbf16, #tpu.memory_space<vmem>>, vector<1x256x128xbf16>,
    return
  }
  func.func @transform_0(%arg0: i32, %arg1: i32) -> (i32, i32, i32) {
    %c0_i32 = arith.constant 0 : i32
    %c0_i32_0 = arith.constant 0 : i32
    return %arg0, %arg1, %c0_i32 : i32, i32, i32
  }
  func.func @transform_1(%arg0: i32, %arg1: i32) -> (i32, i32, i32) {
    %c0_i32 = arith.constant 0 : i32
    %c0_i32_0 = arith.constant 0 : i32
    %c0_i32_1 = arith.constant 0 : i32
    return %arg0, %c0_i32, %c0_i32_0 : i32, i32, i32
  }
  func.func @transform_2(%arg0: i32, %arg1: i32) -> (i32, i32, i32) {
    %c0_i32 = arith.constant 0 : i32
    %c0_i32_0 = arith.constant 0 : i32
    %c0_i32_1 = arith.constant 0 : i32
    return %arg0, %c0_i32, %c0_i32_0 : i32, i32, i32
  }
  func.func @transform_3(%arg0: i32, %arg1: i32) -> (i32, i32) {
    %c0_i32 = arith.constant 0 : i32
    %c0_i32_0 = arith.constant 0 : i32
    %c0_i32_1 = arith.constant 0 : i32
    return %c0_i32, %c0_i32_0 : i32, i32
  }
  func.func @transform_4(%arg0: i32, %arg1: i32) -> (i32, i32) {
    %c0_i32 = arith.constant 0 : i32
    %c0_i32_0 = arith.constant 0 : i32
    %c0_i32_1 = arith.constant 0 : i32
    return %c0_i32, %c0_i32_0 : i32, i32
  }
  func.func @transform_5(%arg0: i32, %arg1: i32) -> (i32, i32, i32) {
    %c0_i32 = arith.constant 0 : i32
    %c0_i32_0 = arith.constant 0 : i32
    return %arg0, %arg1, %c0_i32 : i32, i32, i32
  }
  func.func @transform_6(%arg0: i32, %arg1: i32) -> (i32, i32, i32) {
    %c0_i32 = arith.constant 0 : i32
    %c0_i32_0 = arith.constant 0 : i32
    return %arg0, %arg1, %c0_i32 : i32, i32, i32
  }
  func.func @transform_7(%arg0: i32, %arg1: i32) -> (i32, i32, i32) {
    %c0_i32 = arith.constant 0 : i32
    %c0_i32_0 = arith.constant 0 : i32
    return %arg0, %arg1, %c0_i32 : i32, i32, i32
  }
}

module attributes {stable_mosaic.version = 11 : i64} {
  func.func @_flash_attn_proj_res_kernel(%arg0: i32, %arg1: i32, %arg2: i32, %arg3: memref<1x256x128xbf16, #tpu.memory_space<vmem>>, %arg4: memref<1x256x128xbf16, #tpu.memory_space<vmem>>, %arg5: memref<1x256x128xbf16, #tpu.memory_space<vmem>>, %arg6: memref<1x256x128xf32, #tpu.memory_space<vmem>>, %arg7: memref<128x128xbf16, #tpu.memory_space<vmem>>, %arg8: memref<1x128xf32, #tpu.memory_space<vmem>>, %arg9: memref<1x256x128xf32, #tpu.memory_space<vmem>>, %arg10: memref<256x1xf32, #tpu.memory_space<vmem>>, %arg11: memref<256x1xf32, #tpu.memory_space<vmem>>, %arg12: memref<256x128xf32, #tpu.memory_space<vmem>>) attributes {dimension_semantics = [#tpu.dimension_semantics<parallel>, #tpu.dimension_semantics<parallel>, #tpu.dimension_semantics<arbitrary>], iteration_bounds = array<i64: 2, 1, 1>, scalar_prefetch = 0 : i64, scratch_operands = 3 : i64, tpu.core_type = #tpu.core_type<tc>, window_params = [{transform_indices = @transform_0, window_bounds = array<i64: 1, 256, 128>}, {transform_indices = @transform_1, window_bounds = array<i64: 1, 256, 128>}, {transform_indices = @transform_2, window_bounds = array<i64: 1, 256, 128>}, {transform_indices = @transform_3, window_bounds = array<i64: 1, 256, 128>}, {pipeline_mode = #tpu.pipeline_mode<synchronous>, transform_indices = @transform_4, window_bounds = array<i64: 128, 128>}, {pipeline_mode = #tpu.pipeline_mode<synchronous>, transform_indices = @transform_5, window_bounds = array<i64: 1, 128>}, {transform_indices = @transform_6, window_bounds = array<i64: 1, 256, 128>}]} {
    %c0_i32 = arith.constant 0 : i32
    %0 = arith.cmpi eq, %arg2, %c0_i32 : i32
    %1 = arith.extui %0 : i1 to i32
    %c0_i32_0 = arith.constant 0 : i32
    %2 = arith.cmpi ne, %1, %c0_i32_0 : i32
    scf.if %2 {
      %cst_27 = arith.constant 0xFF800000 : f32
      %38 = vector.broadcast %cst_27 : f32 to vector<256x1xf32>
      %c0_28 = arith.constant 0 : index
      %c0_29 = arith.constant 0 : index
      %39 = vector.load %arg10[%c0_28, %c0_29] : memref<256x1xf32, #tpu.memory_space<vmem>>, vector<256x1xf32>
      tpu.vector_store %arg10[%c0_28, %c0_29], %38 {strides = array<i32>} : memref<256x1xf32, #tpu.memory_space<vmem>>, vector<256x1xf32>,
      %cst_30 = arith.constant 0.000000e+00 : f32
      %40 = vector.broadcast %cst_30 : f32 to vector<256x1xf32>
      %c0_31 = arith.constant 0 : index
      %c0_32 = arith.constant 0 : index
      %41 = vector.load %arg11[%c0_31, %c0_32] : memref<256x1xf32, #tpu.memory_space<vmem>>, vector<256x1xf32>
      tpu.vector_store %arg11[%c0_31, %c0_32], %40 {strides = array<i32>} : memref<256x1xf32, #tpu.memory_space<vmem>>, vector<256x1xf32>,
      %cst_33 = arith.constant 0.000000e+00 : f32
      %42 = vector.broadcast %cst_33 : f32 to vector<256x128xf32>
      %c0_34 = arith.constant 0 : index
      %c0_35 = arith.constant 0 : index
      %43 = vector.load %arg12[%c0_34, %c0_35] : memref<256x128xf32, #tpu.memory_space<vmem>>, vector<256x128xf32>
      tpu.vector_store %arg12[%c0_34, %c0_35], %42 {strides = array<i32>} : memref<256x128xf32, #tpu.memory_space<vmem>>, vector<256x128xf32>,
    } else {
    }
    %c0 = arith.constant 0 : index
    %c0_1 = arith.constant 0 : index
    %c0_2 = arith.constant 0 : index
    %3 = vector.load %arg3[%c0, %c0_1, %c0_2] : memref<1x256x128xbf16, #tpu.memory_space<vmem>>, vector<1x256x128xbf16>
    %4 = vector.shape_cast %3 : vector<1x256x128xbf16> to vector<256x128xbf16>
    %c0_3 = arith.constant 0 : index
    %c0_4 = arith.constant 0 : index
    %c0_5 = arith.constant 0 : index
    %5 = vector.load %arg4[%c0_3, %c0_4, %c0_5] : memref<1x256x128xbf16, #tpu.memory_space<vmem>>, vector<1x256x128xbf16>
    %6 = vector.shape_cast %5 : vector<1x256x128xbf16> to vector<256x128xbf16>
    %c0_6 = arith.constant 0 : index
    %c0_7 = arith.constant 0 : index
    %c0_8 = arith.constant 0 : index
    %7 = vector.load %arg5[%c0_6, %c0_7, %c0_8] : memref<1x256x128xbf16, #tpu.memory_space<vmem>>, vector<1x256x128xbf16>
    %8 = vector.shape_cast %7 : vector<1x256x128xbf16> to vector<256x128xbf16>
    %cst = arith.constant dense<0.000000e+00> : vector<256x256xf32>
    %9 = tpu.matmul %4, %6, %cst {dimension_numbers = #tpu.dot_dimension_numbers<[1], [1], [0], [0], [0, 0, 1, 0], [], []>} : vector<256x128xbf16>, vector<256x128xbf16>, vector<256x256xf32> -> vector<256x256xf32>
    %cst_9 = arith.constant 1.250000e-01 : f32
    %10 = vector.broadcast %cst_9 : f32 to vector<256x256xf32>
    %11 = arith.mulf %9, %10 : vector<256x256xf32>
    %c0_10 = arith.constant 0 : index
    %c0_11 = arith.constant 0 : index
    %12 = vector.load %arg10[%c0_10, %c0_11] : memref<256x1xf32, #tpu.memory_space<vmem>>, vector<256x1xf32>
    %cst_12 = arith.constant dense<0xFF800000> : vector<256xf32>
    %13 = vector.multi_reduction <maximumf>, %11, %cst_12 [1] : vector<256x256xf32> to vector<256xf32>
    %14 = vector.shape_cast %13 : vector<256xf32> to vector<256x1xf32>
    %15 = arith.maximumf %12, %14 : vector<256x1xf32>
    %16 = arith.subf %12, %15 : vector<256x1xf32>
    %17 = math.exp %16 : vector<256x1xf32>
    %18 = vector.broadcast %15 : vector<256x1xf32> to vector<256x256xf32>
    %19 = arith.subf %11, %18 : vector<256x256xf32>
    %20 = math.exp %19 : vector<256x256xf32>
    %c0_13 = arith.constant 0 : index
    %c0_14 = arith.constant 0 : index
    %21 = vector.load %arg11[%c0_13, %c0_14] : memref<256x1xf32, #tpu.memory_space<vmem>>, vector<256x1xf32>
    %22 = arith.mulf %17, %21 : vector<256x1xf32>
    %cst_15 = arith.constant dense<0.000000e+00> : vector<256xf32>
    %23 = vector.multi_reduction <add>, %20, %cst_15 [1] : vector<256x256xf32> to vector<256xf32>
    %24 = vector.shape_cast %23 : vector<256xf32> to vector<256x1xf32>
    %25 = arith.addf %22, %24 : vector<256x1xf32>
    %c0_16 = arith.constant 0 : index
    %c0_17 = arith.constant 0 : index
    %26 = vector.load %arg11[%c0_16, %c0_17] : memref<256x1xf32, #tpu.memory_space<vmem>>, vector<256x1xf32>
    tpu.vector_store %arg11[%c0_16, %c0_17], %25 {strides = array<i32>} : memref<256x1xf32, #tpu.memory_space<vmem>>, vector<256x1xf32>,
    %c0_18 = arith.constant 0 : index
    %c0_19 = arith.constant 0 : index
    %27 = vector.load %arg12[%c0_18, %c0_19] : memref<256x128xf32, #tpu.memory_space<vmem>>, vector<256x128xf32>
    %28 = vector.broadcast %17 : vector<256x1xf32> to vector<256x128xf32>
    %29 = arith.mulf %28, %27 : vector<256x128xf32>
    %30 = arith.truncf %20 : vector<256x256xf32> to vector<256x256xbf16>
    %cst_20 = arith.constant dense<0.000000e+00> : vector<256x128xf32>
    %31 = tpu.matmul %30, %8, %cst_20 {dimension_numbers = #tpu.dot_dimension_numbers<[1], [0], [0], [1], [0, 0, 1, 1], [], []>} : vector<256x256xbf16>, vector<256x128xbf16>, vector<256x128xf32> -> vector<256x128xf32>
    %32 = arith.addf %29, %31 : vector<256x128xf32>
    %c0_21 = arith.constant 0 : index
    %c0_22 = arith.constant 0 : index
    %33 = vector.load %arg12[%c0_21, %c0_22] : memref<256x128xf32, #tpu.memory_space<vmem>>, vector<256x128xf32>
    tpu.vector_store %arg12[%c0_21, %c0_22], %32 {strides = array<i32>} : memref<256x128xf32, #tpu.memory_space<vmem>>, vector<256x128xf32>,
    %c0_23 = arith.constant 0 : index
    %c0_24 = arith.constant 0 : index
    %34 = vector.load %arg10[%c0_23, %c0_24] : memref<256x1xf32, #tpu.memory_space<vmem>>, vector<256x1xf32>
    tpu.vector_store %arg10[%c0_23, %c0_24], %15 {strides = array<i32>} : memref<256x1xf32, #tpu.memory_space<vmem>>, vector<256x1xf32>,
    %c0_i32_25 = arith.constant 0 : i32
    %35 = arith.cmpi eq, %arg2, %c0_i32_25 : i32
    %36 = arith.extui %35 : i1 to i32
    %c0_i32_26 = arith.constant 0 : i32
    %37 = arith.cmpi ne, %36, %c0_i32_26 : i32
    scf.if %37 {
      %c0_27 = arith.constant 0 : index
      %c0_28 = arith.constant 0 : index
      %38 = vector.load %arg12[%c0_27, %c0_28] : memref<256x128xf32, #tpu.memory_space<vmem>>, vector<256x128xf32>
      %c0_29 = arith.constant 0 : index
      %c0_30 = arith.constant 0 : index
      %39 = vector.load %arg11[%c0_29, %c0_30] : memref<256x1xf32, #tpu.memory_space<vmem>>, vector<256x1xf32>
      %40 = tpu.reciprocal %39 {approx = true} : vector<256x1xf32> -> vector<256x1xf32>
      %41 = vector.broadcast %40 : vector<256x1xf32> to vector<256x128xf32>
      %42 = arith.mulf %38, %41 : vector<256x128xf32>
      %43 = arith.truncf %42 : vector<256x128xf32> to vector<256x128xbf16>
      %c0_31 = arith.constant 0 : index
      %c0_32 = arith.constant 0 : index
      %44 = vector.load %arg7[%c0_31, %c0_32] : memref<128x128xbf16, #tpu.memory_space<vmem>>, vector<128x128xbf16>
      %cst_33 = arith.constant dense<0.000000e+00> : vector<256x128xf32>
      %45 = tpu.matmul %43, %44, %cst_33 {dimension_numbers = #tpu.dot_dimension_numbers<[1], [0], [0], [1], [0, 0, 1, 1], [], []>} : vector<256x128xbf16>, vector<128x128xbf16>, vector<256x128xf32> -> vector<256x128xf32>
      %c0_34 = arith.constant 0 : index
      %c0_35 = arith.constant 0 : index
      %46 = vector.load %arg8[%c0_34, %c0_35] : memref<1x128xf32, #tpu.memory_space<vmem>>, vector<1x128xf32>
      %47 = vector.broadcast %46 : vector<1x128xf32> to vector<256x128xf32>
      %48 = arith.addf %45, %47 : vector<256x128xf32>
      %c0_36 = arith.constant 0 : index
      %c0_37 = arith.constant 0 : index
      %c0_38 = arith.constant 0 : index
      %49 = vector.load %arg6[%c0_36, %c0_37, %c0_38] : memref<1x256x128xf32, #tpu.memory_space<vmem>>, vector<1x256x128xf32>
      %50 = vector.shape_cast %49 : vector<1x256x128xf32> to vector<256x128xf32>
      %51 = arith.addf %48, %50 : vector<256x128xf32>
      %c0_39 = arith.constant 0 : index
      %c0_40 = arith.constant 0 : index
      %c0_41 = arith.constant 0 : index
      %52 = vector.load %arg9[%c0_39, %c0_40, %c0_41] : memref<1x256x128xf32, #tpu.memory_space<vmem>>, vector<1x256x128xf32>
      %53 = vector.shape_cast %52 : vector<1x256x128xf32> to vector<256x128xf32>
      %54 = vector.shape_cast %51 : vector<256x128xf32> to vector<1x256x128xf32>
      tpu.vector_store %arg9[%c0_39, %c0_40, %c0_41], %54 {strides = array<i32>} : memref<1x256x128xf32, #tpu.memory_space<vmem>>, vector<1x256x128xf32>,
    } else {
    }
    return
  }
  func.func @transform_0(%arg0: i32, %arg1: i32, %arg2: i32) -> (i32, i32, i32) {
    %c0_i32 = arith.constant 0 : i32
    %c0_i32_0 = arith.constant 0 : i32
    return %arg0, %arg1, %c0_i32 : i32, i32, i32
  }
  func.func @transform_1(%arg0: i32, %arg1: i32, %arg2: i32) -> (i32, i32, i32) {
    %c0_i32 = arith.constant 0 : i32
    %c0_i32_0 = arith.constant 0 : i32
    return %arg0, %arg2, %c0_i32 : i32, i32, i32
  }
  func.func @transform_2(%arg0: i32, %arg1: i32, %arg2: i32) -> (i32, i32, i32) {
    %c0_i32 = arith.constant 0 : i32
    %c0_i32_0 = arith.constant 0 : i32
    return %arg0, %arg2, %c0_i32 : i32, i32, i32
  }
  func.func @transform_3(%arg0: i32, %arg1: i32, %arg2: i32) -> (i32, i32, i32) {
    %c0_i32 = arith.constant 0 : i32
    %c0_i32_0 = arith.constant 0 : i32
    return %arg0, %arg1, %c0_i32 : i32, i32, i32
  }
  func.func @transform_4(%arg0: i32, %arg1: i32, %arg2: i32) -> (i32, i32) {
    %c0_i32 = arith.constant 0 : i32
    %c0_i32_0 = arith.constant 0 : i32
    %c0_i32_1 = arith.constant 0 : i32
    return %c0_i32, %c0_i32_0 : i32, i32
  }
  func.func @transform_5(%arg0: i32, %arg1: i32, %arg2: i32) -> (i32, i32) {
    %c0_i32 = arith.constant 0 : i32
    %c0_i32_0 = arith.constant 0 : i32
    %c0_i32_1 = arith.constant 0 : i32
    return %c0_i32, %c0_i32_0 : i32, i32
  }
  func.func @transform_6(%arg0: i32, %arg1: i32, %arg2: i32) -> (i32, i32, i32) {
    %c0_i32 = arith.constant 0 : i32
    %c0_i32_0 = arith.constant 0 : i32
    return %arg0, %arg1, %c0_i32 : i32, i32, i32
  }
}

</mosaic_0001>

<llo_original>
// kernel: attn_block_forward.2
$region0: #{attn_block_forward.2}
  #allocation0 [shape = 'u32[]', space=smem, size = 0x4, offset = 0x4, fixed_abs, tag = 'smem constant byte address 0x4 - core index']
  #allocation1 [shape = 'u32[72,128]{1,0:T(1,128)}', space=vmem, size = 0x9000, scoped, tag = 'internal scratch']
  %s0 = inlined_call_operand.vmem [shape: f32[2,256,128], index: 0, kind: input, shape index: {}]
  %s1 = inlined_call_operand.vmem [shape: f32[2,1,128], index: 1, kind: input, shape index: {}]
  %s2 = inlined_call_operand.vmem [shape: f32[2,1,128], index: 2, kind: input, shape index: {}]
  %s3 = inlined_call_operand.vmem [shape: bf16[128,384], index: 3, kind: input, shape index: {}]
  %s4 = inlined_call_operand.vmem [shape: f32[1,384], index: 4, kind: input, shape index: {}]
  %s5 = inlined_call_operand.vmem [shape: bf16[2,256,128], index: 5, kind: output, shape index: {0}]
  %s6 = inlined_call_operand.vmem [shape: bf16[2,256,128], index: 6, kind: output, shape index: {1}]
  %s7 = inlined_call_operand.vmem [shape: bf16[2,256,128], index: 7, kind: output, shape index: {2}]
  %8 = xla_tuple %s5, %s6, %s7
  %s9 = sld [smem:[#allocation0]]
  $region69: #{attn_block_forward.2} parent=0
    _
  %s11 = ssub.s32 1, %s9
  %s12 = scalar_select 0, %s11, %s9
  loop: start=0, step=1, limit=4
  $region2: #{attn_block_forward.2} parent=0 // loop_pre_header
    _
  $region3: #{attn_block_forward.2} parent=0 // loop_header
    %s14 = sphi 0, %s18
    %p15 = scmp.ge.s32.totalorder %s14, 4
    %s21 = sphi 0, %s33
    %s22 = sphi 0, %s29
    %s23 = sphi 0, %s21
    %s24 = sphi 0, %s22
    %s25 = sphi 0, %s23
    %s26 = sphi 0, %s24
    %s38 = sphi 0, %s40
    %s41 = sphi 0, %s38
    %s42 = sphi 0, %s41
    %s58 = sphi 0, %s42
    %s64 = sphi 0, %s66
    %s67 = sphi 0, %s64
    %s68 = sphi 0, %s67
    %s84 = sphi 0, %s68
    %s90 = sphi 0, %s92
    %s93 = sphi 0, %s90
    %s94 = sphi 0, %s93
    %s110 = sphi 0, %s94
    %s114 = sphi 0, %s114
    %s116 = sphi 0, %s114
    %s117 = sphi 0, %s116
    %s131 = sphi 0, %s117
    %s135 = sphi 0, %s135
    %s137 = sphi 0, %s135
    %s138 = sphi 0, %s137
    %s152 = sphi 0, %s138
    %s160 = sphi 0, %s162
    %s163 = sphi 0, %s160
    %s164 = sphi 0, %s163
    %s180 = sphi 0, %s164
    %s188 = sphi 0, %s190
    %s191 = sphi 0, %s188
    %s192 = sphi 0, %s191
    %s208 = sphi 0, %s192
    %s216 = sphi 0, %s218
    %s219 = sphi 0, %s216
    %s220 = sphi 0, %s219
    %s236 = sphi 0, %s220
  $region4: #{attn_block_forward.2} parent=0 // loop_header_branch
    %17 = sbr.rel (%p15) target = $region8
  $region5: #{attn_block_forward.2} parent=0 // loop_body
    %s19 = ssub.s32 %s14, 1
    %s20 = ssub.s32 %s14, 2
    %s27 = sadd.s32 1, %s22
    %p28 = scmp.ge.s32.totalorder %s27, 1
    %s29 = scalar_select %p28, 0, %s27
    %s30 = sadd.s32 1, %s21
    %s31 = scalar_select %p28, %s30, %s21
    %p32 = scmp.ge.s32.totalorder %s31, 2
    %s33 = scalar_select %p32, 0, %s31
    %s34 = ssub.s32 %s21, %s33
    %s35 = ssub.s32 %s22, %s29
    %s36 = sor.u32 %s34, %s35
    %p37 = scmp.eq.s32.totalorder %s36, 0
    %s39 = sadd.s32 %s38, 1
    %s40 = scalar_select %p37, %s38, %s39
    %p43 = pneg %p37
    %p44 = scmp.eq.s32.totalorder %s14, 1
    %p45 = por %p43, %p44
    %p46 = scmp.ne.s32.totalorder %s38, %s41
    %p47 = scmp.eq.s32.totalorder %s14, 0
    %p48 = por %p46, %p47
    %p49 = scmp.ne.s32.totalorder %s38, %s41
    %p50 = scmp.eq.s32.totalorder %s19, 1
    %p51 = por %p49, %p50
    %p52 = scmp.ne.s32.totalorder %s41, %s42
    %p53 = scmp.eq.s32.totalorder %s19, 0
    %p54 = por %p52, %p53
    %p55 = scmp.ne.s32.totalorder %s41, %s42
    %p56 = scmp.eq.s32.totalorder %s20, 1
    %p57 = por %p55, %p56
    %p59 = scmp.ne.s32.totalorder %s42, %s58
    %p60 = scmp.eq.s32.totalorder %s20, 0
    %p61 = por %p59, %p60
    %s62 = ssub.s32 %s21, %s33
    %p63 = scmp.eq.s32.totalorder %s62, 0
    %s65 = sadd.s32 %s64, 1
    %s66 = scalar_select %p63, %s64, %s65
    %p69 = pneg %p63
    %p70 = scmp.eq.s32.totalorder %s14, 1
    %p71 = por %p69, %p70
    %p72 = scmp.ne.s32.totalorder %s64, %s67
    %p73 = scmp.eq.s32.totalorder %s14, 0
    %p74 = por %p72, %p73
    %p75 = scmp.ne.s32.totalorder %s64, %s67
    %p76 = scmp.eq.s32.totalorder %s19, 1
    %p77 = por %p75, %p76
    %p78 = scmp.ne.s32.totalorder %s67, %s68
    %p79 = scmp.eq.s32.totalorder %s19, 0
    %p80 = por %p78, %p79
    %p81 = scmp.ne.s32.totalorder %s67, %s68
    %p82 = scmp.eq.s32.totalorder %s20, 1
    %p83 = por %p81, %p82
    %p85 = scmp.ne.s32.totalorder %s68, %s84
    %p86 = scmp.eq.s32.totalorder %s20, 0
    %p87 = por %p85, %p86
    %s88 = ssub.s32 %s21, %s33
    %p89 = scmp.eq.s32.totalorder %s88, 0
    %s91 = sadd.s32 %s90, 1
    %s92 = scalar_select %p89, %s90, %s91
    %p95 = pneg %p89
    %p96 = scmp.eq.s32.totalorder %s14, 1
    %p97 = por %p95, %p96
    %p98 = scmp.ne.s32.totalorder %s90, %s93
    %p99 = scmp.eq.s32.totalorder %s14, 0
    %p100 = por %p98, %p99
    %p101 = scmp.ne.s32.totalorder %s90, %s93
    %p102 = scmp.eq.s32.totalorder %s19, 1
    %p103 = por %p101, %p102
    %p104 = scmp.ne.s32.totalorder %s93, %s94
    %p105 = scmp.eq.s32.totalorder %s19, 0
    %p106 = por %p104, %p105
    %p107 = scmp.ne.s32.totalorder %s93, %s94
    %p108 = scmp.eq.s32.totalorder %s20, 1
    %p109 = por %p107, %p108
    %p111 = scmp.ne.s32.totalorder %s94, %s110
    %p112 = scmp.eq.s32.totalorder %s20, 0
    %p113 = por %p111, %p112
    %s115 = sadd.s32 %s114, 1
    %p118 = scmp.eq.s32.totalorder %s14, 1
    %p119 = scmp.ne.s32.totalorder %s114, %s116
    %p120 = scmp.eq.s32.totalorder %s14, 0
    %p121 = por %p119, %p120
    %p122 = scmp.ne.s32.totalorder %s114, %s116
    %p123 = scmp.eq.s32.totalorder %s19, 1
    %p124 = por %p122, %p123
    %p125 = scmp.ne.s32.totalorder %s116, %s117
    %p126 = scmp.eq.s32.totalorder %s19, 0
    %p127 = por %p125, %p126
    %p128 = scmp.ne.s32.totalorder %s116, %s117
    %p129 = scmp.eq.s32.totalorder %s20, 1
    %p130 = por %p128, %p129
    %p132 = scmp.ne.s32.totalorder %s117, %s131
    %p133 = scmp.eq.s32.totalorder %s20, 0
    %p134 = por %p132, %p133
    %s136 = sadd.s32 %s135, 1
    %p139 = scmp.eq.s32.totalorder %s14, 1
    %p140 = scmp.ne.s32.totalorder %s135, %s137
    %p141 = scmp.eq.s32.totalorder %s14, 0
    %p142 = por %p140, %p141
    %p143 = scmp.ne.s32.totalorder %s135, %s137
    %p144 = scmp.eq.s32.totalorder %s19, 1
    %p145 = por %p143, %p144
    %p146 = scmp.ne.s32.totalorder %s137, %s138
    %p147 = scmp.eq.s32.totalorder %s19, 0
    %p148 = por %p146, %p147
    %p149 = scmp.ne.s32.totalorder %s137, %s138
    %p150 = scmp.eq.s32.totalorder %s20, 1
    %p151 = por %p149, %p150
    %p153 = scmp.ne.s32.totalorder %s138, %s152
    %p154 = scmp.eq.s32.totalorder %s20, 0
    %p155 = por %p153, %p154
    %s156 = ssub.s32 %s21, %s33
    %s157 = ssub.s32 %s22, %s29
    %s158 = sor.u32 %s156, %s157
    %p159 = scmp.eq.s32.totalorder %s158, 0
    %s161 = sadd.s32 %s160, 1
    %s162 = scalar_select %p159, %s160, %s161
    %p165 = pneg %p159
    %p166 = scmp.eq.s32.totalorder %s14, 1
    %p167 = por %p165, %p166
    %p168 = scmp.ne.s32.totalorder %s160, %s163
    %p169 = scmp.eq.s32.totalorder %s14, 0
    %p170 = por %p168, %p169
    %p171 = scmp.ne.s32.totalorder %s160, %s163
    %p172 = scmp.eq.s32.totalorder %s19, 1
    %p173 = por %p171, %p172
    %p174 = scmp.ne.s32.totalorder %s163, %s164
    %p175 = scmp.eq.s32.totalorder %s19, 0
    %p176 = por %p174, %p175
    %p177 = scmp.ne.s32.totalorder %s163, %s164
    %p178 = scmp.eq.s32.totalorder %s20, 1
    %p179 = por %p177, %p178
    %p181 = scmp.ne.s32.totalorder %s164, %s180
    %p182 = scmp.eq.s32.totalorder %s20, 0
    %p183 = por %p181, %p182
    %s184 = ssub.s32 %s21, %s33
    %s185 = ssub.s32 %s22, %s29
    %s186 = sor.u32 %s184, %s185
    %p187 = scmp.eq.s32.totalorder %s186, 0
    %s189 = sadd.s32 %s188, 1
    %s190 = scalar_select %p187, %s188, %s189
    %p193 = pneg %p187
    %p194 = scmp.eq.s32.totalorder %s14, 1
    %p195 = por %p193, %p194
    %p196 = scmp.ne.s32.totalorder %s188, %s191
    %p197 = scmp.eq.s32.totalorder %s14, 0
    %p198 = por %p196, %p197
    %p199 = scmp.ne.s32.totalorder %s188, %s191
    %p200 = scmp.eq.s32.totalorder %s19, 1
    %p201 = por %p199, %p200
    %p202 = scmp.ne.s32.totalorder %s191, %s192
    %p203 = scmp.eq.s32.totalorder %s19, 0
    %p204 = por %p202, %p203
    %p205 = scmp.ne.s32.totalorder %s191, %s192
    %p206 = scmp.eq.s32.totalorder %s20, 1
    %p207 = por %p205, %p206
    %p209 = scmp.ne.s32.totalorder %s192, %s208
    %p210 = scmp.eq.s32.totalorder %s20, 0
    %p211 = por %p209, %p210
    %s212 = ssub.s32 %s21, %s33
    %s213 = ssub.s32 %s22, %s29
    %s214 = sor.u32 %s212, %s213
    %p215 = scmp.eq.s32.totalorder %s214, 0
    %s217 = sadd.s32 %s216, 1
    %s218 = scalar_select %p215, %s216, %s217
    %p221 = pneg %p215
    %p222 = scmp.eq.s32.totalorder %s14, 1
    %p223 = por %p221, %p222
    %p224 = scmp.ne.s32.totalorder %s216, %s219
    %p225 = scmp.eq.s32.totalorder %s14, 0
    %p226 = por %p224, %p225
    %p227 = scmp.ne.s32.totalorder %s216, %s219
    %p228 = scmp.eq.s32.totalorder %s19, 1
    %p229 = por %p227, %p228
    %p230 = scmp.ne.s32.totalorder %s219, %s220
    %p231 = scmp.eq.s32.totalorder %s19, 0
    %p232 = por %p230, %p231
    %p233 = scmp.ne.s32.totalorder %s219, %s220
    %p234 = scmp.eq.s32.totalorder %s20, 1
    %p235 = por %p233, %p234
    %p237 = scmp.ne.s32.totalorder %s220, %s236
    %p238 = scmp.eq.s32.totalorder %s20, 0
    %p239 = por %p237, %p238
    %p240 = scmp.le.s32.totalorder 1, %s14
    %p241 = scmp.lt.s32.totalorder %s14, 3
    %p242 = pnand %p240, %p241
    %p243 = pneg %p242
    // Predicated region
    $region9: #{attn_block_forward.2} parent=5 // pred_check
      _
    $region10: #{attn_block_forward.2} parent=5 // pred_check_branch
      %245 = sbr.rel (%p242) target = $region12
    $region11: #{attn_block_forward.2} parent=5 // pred_region
      %s246 = ssub.s32 %s14, 1
      // Predicated region
      $region13: #{attn_block_forward.2} parent=11 // pred_check
        %p247 = pneg %p127
      $region14: #{attn_block_forward.2} parent=11 // pred_check_branch
        %249 = sbr.rel (%p247) target = $region16
      $region15: #{attn_block_forward.2} parent=11 // pred_region
        _
      $region16: #{attn_block_forward.2} parent=11 // pred_fallthru
        _
      // Predicated region
      $region17: #{attn_block_forward.2} parent=11 // pred_check
        %p250 = pneg %p148
      $region18: #{attn_block_forward.2} parent=11 // pred_check_branch
        %252 = sbr.rel (%p250) target = $region20
      $region19: #{attn_block_forward.2} parent=11 // pred_region
        _
      $region20: #{attn_block_forward.2} parent=11 // pred_fallthru
        _
    $region12: #{attn_block_forward.2} parent=5 // pred_fallthru
      _
    %p253 = scmp.lt.s32.totalorder %s14, 2
    // Predicated region
    $region21: #{attn_block_forward.2} parent=5 // pred_check
      %p254 = pneg %p253
    $region22: #{attn_block_forward.2} parent=5 // pred_check_branch
      %256 = sbr.rel (%p254) target = $region24
    $region23: #{attn_block_forward.2} parent=5 // pred_region
      // Predicated region
      $region25: #{attn_block_forward.2} parent=23 // pred_check
        %p257 = pneg %p48
      $region26: #{attn_block_forward.2} parent=23 // pred_check_branch
        %259 = sbr.rel (%p257) target = $region28
      $region27: #{attn_block_forward.2} parent=23 // pred_region
        %s260 = smul.u32 32, %s22
        %p261 = scmp.lt.s32.totalorder %s21, 1
        %s262 = scalar_select %p261, %s21, 1
        %p263 = scmp.lt.s32.totalorder %s260, 31
        %s264 = scalar_select %p263, %s260, 31
        %s265 = smul.addr %s262, 32
        %s266 = sadd.s32 %s264, %s265
        %s267 = smul.addr %s266, 8
        %s268 = scalar_lea.vmem %s0, %s267
        %s269 = smul.u32 32, %s22
      $region28: #{attn_block_forward.2} parent=23 // pred_fallthru
        _
      // Predicated region
      $region29: #{attn_block_forward.2} parent=23 // pred_check
        %p270 = pneg %p74
      $region30: #{attn_block_forward.2} parent=23 // pred_check_branch
        %272 = sbr.rel (%p270) target = $region32
      $region31: #{attn_block_forward.2} parent=23 // pred_region
        %p273 = scmp.lt.s32.totalorder %s21, 1
        %s274 = scalar_select %p273, %s21, 1
        %s275 = scalar_lea.vmem %s1, %s274
      $region32: #{attn_block_forward.2} parent=23 // pred_fallthru
        _
      // Predicated region
      $region33: #{attn_block_forward.2} parent=23 // pred_check
        %p276 = pneg %p100
      $region34: #{attn_block_forward.2} parent=23 // pred_check_branch
        %278 = sbr.rel (%p276) target = $region36
      $region35: #{attn_block_forward.2} parent=23 // pred_region
        %p279 = scmp.lt.s32.totalorder %s21, 1
        %s280 = scalar_select %p279, %s21, 1
        %s281 = scalar_lea.vmem %s2, %s280
      $region36: #{attn_block_forward.2} parent=23 // pred_fallthru
        _
    $region24: #{attn_block_forward.2} parent=5 // pred_fallthru
      _
    %p282 = scmp.le.s32.totalorder 1, %s14
    %p283 = scmp.lt.s32.totalorder %s14, 3
    %p284 = pnand %p282, %p283
    %p285 = pneg %p284
    // Predicated region
    $region37: #{attn_block_forward.2} parent=5 // pred_check
      _
    $region38: #{attn_block_forward.2} parent=5 // pred_check_branch
      %287 = sbr.rel (%p284) target = $region40
    $region39: #{attn_block_forward.2} parent=5 // pred_region
      %s288 = ssub.s32 %s14, 1
      %s289 = smul.u32 32, %s24
      %p290 = scmp.lt.s32.totalorder %s23, 1
      %s291 = scalar_select %p290, %s23, 1
      %p292 = scmp.lt.s32.totalorder %s289, 31
      %s293 = scalar_select %p292, %s289, 31
      %s294 = smul.addr %s291, 32
      %s295 = sadd.s32 %s293, %s294
      %s296 = smul.addr %s295, 8
      %s297 = scalar_lea.vmem %s0, %s296
      %p298 = pneg %p54
      %p299 = pneg %p51
      %p300 = scmp.lt.s32.totalorder %s23, 1
      %s301 = scalar_select %p300, %s23, 1
      %s302 = scalar_lea.vmem %s1, %s301
      %p303 = pneg %p80
      %p304 = pneg %p77
      %p305 = scmp.lt.s32.totalorder %s23, 1
      %s306 = scalar_select %p305, %s23, 1
      %s307 = scalar_lea.vmem %s2, %s306
      %p308 = pneg %p106
      %p309 = pneg %p103
      %p310 = pneg %p127
      %p311 = pneg %p124
      %p312 = pneg %p148
      %p313 = pneg %p145
      %p314 = pneg %p176
      %p315 = pneg %p173
      %s316 = smul.u32 32, %s24
      %p317 = scmp.lt.s32.totalorder %s23, 1
      %s318 = scalar_select %p317, %s23, 1
      %p319 = scmp.lt.s32.totalorder %s316, 31
      %s320 = scalar_select %p319, %s316, 31
      %s321 = smul.addr %s318, 32
      %s322 = sadd.s32 %s320, %s321
      %s323 = smul.addr %s322, 4
      %s324 = scalar_lea.vmem %s5, %s323
      %p325 = pneg %p204
      %p326 = pneg %p201
      %s327 = smul.u32 32, %s24
      %p328 = scmp.lt.s32.totalorder %s23, 1
      %s329 = scalar_select %p328, %s23, 1
      %p330 = scmp.lt.s32.totalorder %s327, 31
      %s331 = scalar_select %p330, %s327, 31
      %s332 = smul.addr %s329, 32
      %s333 = sadd.s32 %s331, %s332
      %s334 = smul.addr %s333, 4
      %s335 = scalar_lea.vmem %s6, %s334
      %p336 = pneg %p232
      %p337 = pneg %p229
      %s338 = smul.u32 32, %s24
      %p339 = scmp.lt.s32.totalorder %s23, 1
      %s340 = scalar_select %p339, %s23, 1
      %p341 = scmp.lt.s32.totalorder %s338, 31
      %s342 = scalar_select %p341, %s338, 31
      %s343 = smul.addr %s340, 32
      %s344 = sadd.s32 %s342, %s343
      %s345 = smul.addr %s344, 4
      %s346 = scalar_lea.vmem %s7, %s345
      %s347 = smul.u32 32, %s24
      %p348 = scmp.lt.s32.totalorder %s23, 1
      %s349 = scalar_select %p348, %s23, 1
      %p350 = scmp.lt.s32.totalorder %s347, 31
      %s351 = scalar_select %p350, %s347, 31
      %s352 = smul.addr %s349, 32
      %s353 = sadd.s32 %s351, %s352
      %s354 = smul.addr %s353, 8
      %s355 = scalar_lea.vmem %s0, %s354
      %s356 = smul.u32 32, %s24
      %p357 = scmp.lt.s32.totalorder %s23, 1
      %s358 = scalar_select %p357, %s23, 1
      %s359 = scalar_lea.vmem %s1, %s358
      %p360 = scmp.lt.s32.totalorder %s23, 1
      %s361 = scalar_select %p360, %s23, 1
      %s362 = scalar_lea.vmem %s2, %s361
      %s363 = smul.u32 32, %s24
      %p364 = scmp.lt.s32.totalorder %s23, 1
      %s365 = scalar_select %p364, %s23, 1
      %p366 = scmp.lt.s32.totalorder %s363, 31
      %s367 = scalar_select %p366, %s363, 31
      %s368 = smul.addr %s365, 32
      %s369 = sadd.s32 %s367, %s368
      %s370 = smul.addr %s369, 4
      %s371 = scalar_lea.vmem %s5, %s370
      %s372 = smul.u32 32, %s24
      %s373 = smul.u32 32, %s24
      %p374 = scmp.lt.s32.totalorder %s23, 1
      %s375 = scalar_select %p374, %s23, 1
      %p376 = scmp.lt.s32.totalorder %s373, 31
      %s377 = scalar_select %p376, %s373, 31
      %s378 = smul.addr %s375, 32
      %s379 = sadd.s32 %s377, %s378
      %s380 = smul.addr %s379, 4
      %s381 = scalar_lea.vmem %s6, %s380
      %s382 = smul.u32 32, %s24
      %s383 = smul.u32 32, %s24
      %p384 = scmp.lt.s32.totalorder %s23, 1
      %s385 = scalar_select %p384, %s23, 1
      %p386 = scmp.lt.s32.totalorder %s383, 31
      %s387 = scalar_select %p386, %s383, 31
      %s388 = smul.addr %s385, 32
      %s389 = sadd.s32 %s387, %s388
      %s390 = smul.addr %s389, 4
      %s391 = scalar_lea.vmem %s7, %s390
      %s392 = smul.u32 32, %s24
      %v393 = vld [vmem:[%s355] sm:$0xff]
      %v394 = vld [vmem:[%s355 + $0x8] sm:$0xff]
      %v395 = vld [vmem:[%s355 + $0x10] sm:$0xff]
      %v396 = vld [vmem:[%s355 + $0x18] sm:$0xff]
      %v397 = vld [vmem:[%s355 + $0x20] sm:$0xff]
      %v398 = vld [vmem:[%s355 + $0x28] sm:$0xff]
      %v399 = vld [vmem:[%s355 + $0x30] sm:$0xff]
      %v400 = vld [vmem:[%s355 + $0x38] sm:$0xff]
      %v401 = vld [vmem:[%s355 + $0x40] sm:$0xff]
      %v402 = vld [vmem:[%s355 + $0x48] sm:$0xff]
      %v403 = vld [vmem:[%s355 + $0x50] sm:$0xff]
      %v404 = vld [vmem:[%s355 + $0x58] sm:$0xff]
      %v405 = vld [vmem:[%s355 + $0x60] sm:$0xff]
      %v406 = vld [vmem:[%s355 + $0x68] sm:$0xff]
      %v407 = vld [vmem:[%s355 + $0x70] sm:$0xff]
      %v408 = vld [vmem:[%s355 + $0x78] sm:$0xff]
      %v409 = vld [vmem:[%s355 + $0x80] sm:$0xff]
      %v410 = vld [vmem:[%s355 + $0x88] sm:$0xff]
      %v411 = vld [vmem:[%s355 + $0x90] sm:$0xff]
      %v412 = vld [vmem:[%s355 + $0x98] sm:$0xff]
      %v413 = vld [vmem:[%s355 + $0xa0] sm:$0xff]
      %v414 = vld [vmem:[%s355 + $0xa8] sm:$0xff]
      %v415 = vld [vmem:[%s355 + $0xb0] sm:$0xff]
      %v416 = vld [vmem:[%s355 + $0xb8] sm:$0xff]
      %v417 = vld [vmem:[%s355 + $0xc0] sm:$0xff]
      %v418 = vld [vmem:[%s355 + $0xc8] sm:$0xff]
      %v419 = vld [vmem:[%s355 + $0xd0] sm:$0xff]
      %v420 = vld [vmem:[%s355 + $0xd8] sm:$0xff]
      %v421 = vld [vmem:[%s355 + $0xe0] sm:$0xff]
      %v422 = vld [vmem:[%s355 + $0xe8] sm:$0xff]
      %v423 = vld [vmem:[%s355 + $0xf0] sm:$0xff]
      %v424 = vld [vmem:[%s355 + $0xf8] sm:$0xff]
      %v425 = vld [vmem:[%s359] sm:$0x1]
      %v427 = vperm.slane %v425, 0
      %v429 = vmul.f32 %v393, %v427
      %v430 = vmul.f32 %v394, %v427
      %v431 = vmul.f32 %v395, %v427
      %v432 = vmul.f32 %v396, %v427
      %v433 = vmul.f32 %v397, %v427
      %v434 = vmul.f32 %v398, %v427
      %v435 = vmul.f32 %v399, %v427
      %v436 = vmul.f32 %v400, %v427
      %v437 = vmul.f32 %v401, %v427
      %v438 = vmul.f32 %v402, %v427
      %v439 = vmul.f32 %v403, %v427
      %v440 = vmul.f32 %v404, %v427
      %v441 = vmul.f32 %v405, %v427
      %v442 = vmul.f32 %v406, %v427
      %v443 = vmul.f32 %v407, %v427
      %v444 = vmul.f32 %v408, %v427
      %v445 = vmul.f32 %v409, %v427
      %v446 = vmul.f32 %v410, %v427
      %v447 = vmul.f32 %v411, %v427
      %v448 = vmul.f32 %v412, %v427
      %v449 = vmul.f32 %v413, %v427
      %v450 = vmul.f32 %v414, %v427
      %v451 = vmul.f32 %v415, %v427
      %v452 = vmul.f32 %v416, %v427
      %v453 = vmul.f32 %v417, %v427
      %v454 = vmul.f32 %v418, %v427
      %v455 = vmul.f32 %v419, %v427
      %v456 = vmul.f32 %v420, %v427
      %v457 = vmul.f32 %v421, %v427
      %v458 = vmul.f32 %v422, %v427
      %v459 = vmul.f32 %v423, %v427
      %v460 = vmul.f32 %v424, %v427
      %v461 = vld [vmem:[%s362] sm:$0x1]
      %v463 = vperm.slane %v461, 0
      %v465 = vadd.f32 %v429, %v463
      %v466 = vadd.f32 %v430, %v463
      %v467 = vadd.f32 %v431, %v463
      %v468 = vadd.f32 %v432, %v463
      %v469 = vadd.f32 %v433, %v463
      %v470 = vadd.f32 %v434, %v463
      %v471 = vadd.f32 %v435, %v463
      %v472 = vadd.f32 %v436, %v463
      %v473 = vadd.f32 %v437, %v463
      %v474 = vadd.f32 %v438, %v463
      %v475 = vadd.f32 %v439, %v463
      %v476 = vadd.f32 %v440, %v463
      %v477 = vadd.f32 %v441, %v463
      %v478 = vadd.f32 %v442, %v463
      %v479 = vadd.f32 %v443, %v463
      %v480 = vadd.f32 %v444, %v463
      %v481 = vadd.f32 %v445, %v463
      %v482 = vadd.f32 %v446, %v463
      %v483 = vadd.f32 %v447, %v463
      %v484 = vadd.f32 %v448, %v463
      %v485 = vadd.f32 %v449, %v463
      %v486 = vadd.f32 %v450, %v463
      %v487 = vadd.f32 %v451, %v463
      %v488 = vadd.f32 %v452, %v463
      %v489 = vadd.f32 %v453, %v463
      %v490 = vadd.f32 %v454, %v463
      %v491 = vadd.f32 %v455, %v463
      %v492 = vadd.f32 %v456, %v463
      %v493 = vadd.f32 %v457, %v463
      %v494 = vadd.f32 %v458, %v463
      %v495 = vadd.f32 %v459, %v463
      %v496 = vadd.f32 %v460, %v463
      %v497 = vpack.c.bf16 %v466, %v465
      %v498 = vpack.c.bf16 %v468, %v467
      %v499 = vpack.c.bf16 %v470, %v469
      %v500 = vpack.c.bf16 %v472, %v471
      %v501 = vpack.c.bf16 %v474, %v473
      %v502 = vpack.c.bf16 %v476, %v475
      %v503 = vpack.c.bf16 %v478, %v477
      %v504 = vpack.c.bf16 %v480, %v479
      %v505 = vpack.c.bf16 %v482, %v481
      %v506 = vpack.c.bf16 %v484, %v483
      %v507 = vpack.c.bf16 %v486, %v485
      %v508 = vpack.c.bf16 %v488, %v487
      %v509 = vpack.c.bf16 %v490, %v489
      %v510 = vpack.c.bf16 %v492, %v491
      %v511 = vpack.c.bf16 %v494, %v493
      %v512 = vpack.c.bf16 %v496, %v495
      %v513 = vld [vmem:[%s3] sm:$0xff]
      %v514 = vld [vmem:[%s3 + $0x8] sm:$0xf]
      %v515 = vld [vmem:[%s3 + $0xc] sm:$0xff]
      %v516 = vld [vmem:[%s3 + $0x14] sm:$0xf]
      %v517 = vld [vmem:[%s3 + $0x18] sm:$0xff]
      %v518 = vld [vmem:[%s3 + $0x20] sm:$0xf]
      %v519 = vld [vmem:[%s3 + $0x24] sm:$0xff]
      %v520 = vld [vmem:[%s3 + $0x2c] sm:$0xf]
      %v521 = vld [vmem:[%s3 + $0x30] sm:$0xff]
      %v522 = vld [vmem:[%s3 + $0x38] sm:$0xf]
      %v523 = vld [vmem:[%s3 + $0x3c] sm:$0xff]
      %v524 = vld [vmem:[%s3 + $0x44] sm:$0xf]
      %v525 = vld [vmem:[%s3 + $0x48] sm:$0xff]
      %v526 = vld [vmem:[%s3 + $0x50] sm:$0xf]
      %v527 = vld [vmem:[%s3 + $0x54] sm:$0xff]
      %v528 = vld [vmem:[%s3 + $0x5c] sm:$0xf]
      %v529 = vld [vmem:[%s3 + $0x60] sm:$0xff]
      %v530 = vld [vmem:[%s3 + $0x68] sm:$0xf]
      %v531 = vld [vmem:[%s3 + $0x6c] sm:$0xff]
      %v532 = vld [vmem:[%s3 + $0x74] sm:$0xf]
      %v533 = vld [vmem:[%s3 + $0x78] sm:$0xff]
      %v534 = vld [vmem:[%s3 + $0x80] sm:$0xf]
      %v535 = vld [vmem:[%s3 + $0x84] sm:$0xff]
      %v536 = vld [vmem:[%s3 + $0x8c] sm:$0xf]
      %v537 = vld [vmem:[%s3 + $0x90] sm:$0xff]
      %v538 = vld [vmem:[%s3 + $0x98] sm:$0xf]
      %v539 = vld [vmem:[%s3 + $0x9c] sm:$0xff]
      %v540 = vld [vmem:[%s3 + $0xa4] sm:$0xf]
      %v541 = vld [vmem:[%s3 + $0xa8] sm:$0xff]
      %v542 = vld [vmem:[%s3 + $0xb0] sm:$0xf]
      %v543 = vld [vmem:[%s3 + $0xb4] sm:$0xff]
      %v544 = vld [vmem:[%s3 + $0xbc] sm:$0xf]
      %v545 = vld [vmem:[%s4] sm:$0x7]
      %v547 = vperm.slane %v545, 0
      %v548 = vperm.slane %v545, 1
      %v549 = vperm.slane %v545, 2
      %v585 = vunpack.c.l.b16 %v513
      %v586 = vunpack.c.h.b16 %v513
      %v587 = vunpack.c.l.b16 %v514
      %v588 = vunpack.c.l.b16 %v515
      %v589 = vunpack.c.h.b16 %v515
      %v590 = vunpack.c.l.b16 %v516
      %v591 = vunpack.c.l.b16 %v517
      %v592 = vunpack.c.h.b16 %v517
      %v593 = vunpack.c.l.b16 %v518
      %v594 = vunpack.c.l.b16 %v519
      %v595 = vunpack.c.h.b16 %v519
      %v596 = vunpack.c.l.b16 %v520
      %v597 = vunpack.c.l.b16 %v521
      %v598 = vunpack.c.h.b16 %v521
      %v599 = vunpack.c.l.b16 %v522
      %v600 = vunpack.c.l.b16 %v523
      %v601 = vunpack.c.h.b16 %v523
      %v602 = vunpack.c.l.b16 %v524
      %v603 = vunpack.c.l.b16 %v525
      %v604 = vunpack.c.h.b16 %v525
      %v605 = vunpack.c.l.b16 %v526
      %v606 = vunpack.c.l.b16 %v527
      %v607 = vunpack.c.h.b16 %v527
      %v608 = vunpack.c.l.b16 %v528
      %v609 = vunpack.c.l.b16 %v529
      %v610 = vunpack.c.h.b16 %v529
      %v611 = vunpack.c.l.b16 %v530
      %v612 = vunpack.c.l.b16 %v531
      %v613 = vunpack.c.h.b16 %v531
      %v614 = vunpack.c.l.b16 %v532
      %v615 = vunpack.c.l.b16 %v533
      %v616 = vunpack.c.h.b16 %v533
      %v617 = vunpack.c.l.b16 %v534
      %v618 = vunpack.c.l.b16 %v535
      %v619 = vunpack.c.h.b16 %v535
      %v620 = vunpack.c.l.b16 %v536
      %v621 = vunpack.c.l.b16 %v537
      %v622 = vunpack.c.h.b16 %v537
      %v623 = vunpack.c.l.b16 %v538
      %v624 = vunpack.c.l.b16 %v539
      %v625 = vunpack.c.h.b16 %v539
      %v626 = vunpack.c.l.b16 %v540
      %v627 = vunpack.c.l.b16 %v541
      %v628 = vunpack.c.h.b16 %v541
      %v629 = vunpack.c.l.b16 %v542
      %v630 = vunpack.c.l.b16 %v543
      %v631 = vunpack.c.h.b16 %v543
      %v632 = vunpack.c.l.b16 %v544
      %v633 = vpack.c.b16 %v588, %v585
      %v634 = vpack.c.b16 %v589, %v586
      %v635 = vpack.c.b16 %v590, %v587
      %v636 = vpack.c.b16 %v594, %v591
      %v637 = vpack.c.b16 %v595, %v592
      %v638 = vpack.c.b16 %v596, %v593
      %v639 = vpack.c.b16 %v600, %v597
      %v640 = vpack.c.b16 %v601, %v598
      %v641 = vpack.c.b16 %v602, %v599
      %v642 = vpack.c.b16 %v606, %v603
      %v643 = vpack.c.b16 %v607, %v604
      %v644 = vpack.c.b16 %v608, %v605
      %v645 = vpack.c.b16 %v612, %v609
      %v646 = vpack.c.b16 %v613, %v610
      %v647 = vpack.c.b16 %v614, %v611
      %v648 = vpack.c.b16 %v618, %v615
      %v649 = vpack.c.b16 %v619, %v616
      %v650 = vpack.c.b16 %v620, %v617
      %v651 = vpack.c.b16 %v624, %v621
      %v652 = vpack.c.b16 %v625, %v622
      %v653 = vpack.c.b16 %v626, %v623
      %v654 = vpack.c.b16 %v630, %v627
      %v655 = vpack.c.b16 %v631, %v628
      %v656 = vpack.c.b16 %v632, %v629
      %681 = vmatpush.bf16.msra.mxu0 %v654
      %682 = vmatpush.bf16.msra.mxu0 %v651
      %683 = vmatpush.bf16.msra.mxu0 %v648
      %684 = vmatpush.bf16.msra.mxu0 %v645
      %685 = vmatpush.bf16.msra.mxu0 %v642
      %686 = vmatpush.bf16.msra.mxu0 %v639
      %687 = vmatpush.bf16.msra.mxu0 %v636
      %688 = vmatpush.bf16.msra.mxu0 %v633
      %689 = vmatmul.bf16.gmra.mxu0 %v497
      %v690 = vpop.f32.mrf.mxu0
      %v691 = vadd.f32 %v547, %v690
      %v692 = vpop.f32.mrf.mxu0
      %v693 = vadd.f32 %v547, %v692
      %694 = vmatmul.bf16.gmra.mxu0 %v498
      %v695 = vpop.f32.mrf.mxu0
      %v696 = vadd.f32 %v547, %v695
      %v697 = vpop.f32.mrf.mxu0
      %v698 = vadd.f32 %v547, %v697
      %699 = vmatmul.bf16.gmra.mxu0 %v499
      %v700 = vpop.f32.mrf.mxu0
      %v701 = vadd.f32 %v547, %v700
      %v702 = vpop.f32.mrf.mxu0
      %v703 = vadd.f32 %v547, %v702
      %704 = vmatmul.bf16.gmra.mxu0 %v500
      %v705 = vpop.f32.mrf.mxu0
      %v706 = vadd.f32 %v547, %v705
      %v707 = vpop.f32.mrf.mxu0
      %v708 = vadd.f32 %v547, %v707
      %709 = vmatmul.bf16.gmra.mxu0 %v501
      %v710 = vpop.f32.mrf.mxu0
      %v711 = vadd.f32 %v547, %v710
      %v712 = vpop.f32.mrf.mxu0
      %v713 = vadd.f32 %v547, %v712
      %714 = vmatmul.bf16.gmra.mxu0 %v502
      %v715 = vpop.f32.mrf.mxu0
      %v716 = vadd.f32 %v547, %v715
      %v717 = vpop.f32.mrf.mxu0
      %v718 = vadd.f32 %v547, %v717
      %719 = vmatmul.bf16.gmra.mxu0 %v503
      %v720 = vpop.f32.mrf.mxu0
      %v721 = vadd.f32 %v547, %v720
      %v722 = vpop.f32.mrf.mxu0
      %v723 = vadd.f32 %v547, %v722
      %724 = vmatmul.bf16.gmra.mxu0 %v504
      %v725 = vpop.f32.mrf.mxu0
      %v726 = vadd.f32 %v547, %v725
      %v727 = vpop.f32.mrf.mxu0
      %v728 = vadd.f32 %v547, %v727
      %729 = vmatmul.bf16.gmra.mxu0 %v505
      %v730 = vpop.f32.mrf.mxu0
      %v731 = vadd.f32 %v547, %v730
      %v732 = vpop.f32.mrf.mxu0
      %v733 = vadd.f32 %v547, %v732
      %734 = vmatmul.bf16.gmra.mxu0 %v506
      %v735 = vpop.f32.mrf.mxu0
      %v736 = vadd.f32 %v547, %v735
      %v737 = vpop.f32.mrf.mxu0
      %v738 = vadd.f32 %v547, %v737
      %739 = vmatmul.bf16.gmra.mxu0 %v507
      %v740 = vpop.f32.mrf.mxu0
      %v741 = vadd.f32 %v547, %v740
      %v742 = vpop.f32.mrf.mxu0
      %v743 = vadd.f32 %v547, %v742
      %744 = vmatmul.bf16.gmra.mxu0 %v508
      %v745 = vpop.f32.mrf.mxu0
      %v746 = vadd.f32 %v547, %v745
      %v747 = vpop.f32.mrf.mxu0
      %v748 = vadd.f32 %v547, %v747
      %749 = vmatmul.bf16.gmra.mxu0 %v509
      %v750 = vpop.f32.mrf.mxu0
      %v751 = vadd.f32 %v547, %v750
      %v752 = vpop.f32.mrf.mxu0
      %v753 = vadd.f32 %v547, %v752
      %754 = vmatmul.bf16.gmra.mxu0 %v510
      %v755 = vpop.f32.mrf.mxu0
      %v756 = vadd.f32 %v547, %v755
      %v757 = vpop.f32.mrf.mxu0
      %v758 = vadd.f32 %v547, %v757
      %759 = vmatmul.bf16.gmra.mxu0 %v511
      %v760 = vpop.f32.mrf.mxu0
      %v761 = vadd.f32 %v547, %v760
      %v762 = vpop.f32.mrf.mxu0
      %v763 = vadd.f32 %v547, %v762
      %764 = vmatmul.bf16.gmra.mxu0 %v512
      %v765 = vpop.f32.mrf.mxu0
      %v766 = vadd.f32 %v547, %v765
      %v767 = vpop.f32.mrf.mxu0
      %v768 = vadd.f32 %v547, %v767
      %769 = vdwg.mxu0
      %770 = vmatpush.bf16.msra.mxu0 %v655
      %771 = vmatpush.bf16.msra.mxu0 %v652
      %772 = vmatpush.bf16.msra.mxu0 %v649
      %773 = vmatpush.bf16.msra.mxu0 %v646
      %774 = vmatpush.bf16.msra.mxu0 %v643
      %775 = vmatpush.bf16.msra.mxu0 %v640
      %776 = vmatpush.bf16.msra.mxu0 %v637
      %777 = vmatpush.bf16.msra.mxu0 %v634
      %778 = vmatmul.bf16.gmra.mxu0 %v497
      %v779 = vpop.f32.mrf.mxu0
      %v780 = vadd.f32 %v548, %v779
      %v781 = vpop.f32.mrf.mxu0
      %v782 = vadd.f32 %v548, %v781
      %783 = vmatmul.bf16.gmra.mxu0 %v498
      %v784 = vpop.f32.mrf.mxu0
      %v785 = vadd.f32 %v548, %v784
      %v786 = vpop.f32.mrf.mxu0
      %v787 = vadd.f32 %v548, %v786
      %788 = vmatmul.bf16.gmra.mxu0 %v499
      %v789 = vpop.f32.mrf.mxu0
      %v790 = vadd.f32 %v548, %v789
      %v791 = vpop.f32.mrf.mxu0
      %v792 = vadd.f32 %v548, %v791
      %793 = vmatmul.bf16.gmra.mxu0 %v500
      %v794 = vpop.f32.mrf.mxu0
      %v795 = vadd.f32 %v548, %v794
      %v796 = vpop.f32.mrf.mxu0
      %v797 = vadd.f32 %v548, %v796
      %798 = vmatmul.bf16.gmra.mxu0 %v501
      %v799 = vpop.f32.mrf.mxu0
      %v800 = vadd.f32 %v548, %v799
      %v801 = vpop.f32.mrf.mxu0
      %v802 = vadd.f32 %v548, %v801
      %803 = vmatmul.bf16.gmra.mxu0 %v502
      %v804 = vpop.f32.mrf.mxu0
      %v805 = vadd.f32 %v548, %v804
      %v806 = vpop.f32.mrf.mxu0
      %v807 = vadd.f32 %v548, %v806
      %808 = vmatmul.bf16.gmra.mxu0 %v503
      %v809 = vpop.f32.mrf.mxu0
      %v810 = vadd.f32 %v548, %v809
      %v811 = vpop.f32.mrf.mxu0
      %v812 = vadd.f32 %v548, %v811
      %813 = vmatmul.bf16.gmra.mxu0 %v504
      %v814 = vpop.f32.mrf.mxu0
      %v815 = vadd.f32 %v548, %v814
      %v816 = vpop.f32.mrf.mxu0
      %v817 = vadd.f32 %v548, %v816
      %818 = vmatmul.bf16.gmra.mxu0 %v505
      %v819 = vpop.f32.mrf.mxu0
      %v820 = vadd.f32 %v548, %v819
      %v821 = vpop.f32.mrf.mxu0
      %v822 = vadd.f32 %v548, %v821
      %823 = vmatmul.bf16.gmra.mxu0 %v506
      %v824 = vpop.f32.mrf.mxu0
      %v825 = vadd.f32 %v548, %v824
      %v826 = vpop.f32.mrf.mxu0
      %v827 = vadd.f32 %v548, %v826
      %828 = vmatmul.bf16.gmra.mxu0 %v507
      %v829 = vpop.f32.mrf.mxu0
      %v830 = vadd.f32 %v548, %v829
      %v831 = vpop.f32.mrf.mxu0
      %v832 = vadd.f32 %v548, %v831
      %833 = vmatmul.bf16.gmra.mxu0 %v508
      %v834 = vpop.f32.mrf.mxu0
      %v835 = vadd.f32 %v548, %v834
      %v836 = vpop.f32.mrf.mxu0
      %v837 = vadd.f32 %v548, %v836
      %838 = vmatmul.bf16.gmra.mxu0 %v509
      %v839 = vpop.f32.mrf.mxu0
      %v840 = vadd.f32 %v548, %v839
      %v841 = vpop.f32.mrf.mxu0
      %v842 = vadd.f32 %v548, %v841
      %843 = vmatmul.bf16.gmra.mxu0 %v510
      %v844 = vpop.f32.mrf.mxu0
      %v845 = vadd.f32 %v548, %v844
      %v846 = vpop.f32.mrf.mxu0
      %v847 = vadd.f32 %v548, %v846
      %848 = vmatmul.bf16.gmra.mxu0 %v511
      %v849 = vpop.f32.mrf.mxu0
      %v850 = vadd.f32 %v548, %v849
      %v851 = vpop.f32.mrf.mxu0
      %v852 = vadd.f32 %v548, %v851
      %853 = vmatmul.bf16.gmra.mxu0 %v512
      %v854 = vpop.f32.mrf.mxu0
      %v855 = vadd.f32 %v548, %v854
      %v856 = vpop.f32.mrf.mxu0
      %v857 = vadd.f32 %v548, %v856
      %858 = vdwg.mxu0
      %859 = vmatpush.bf16.msra.mxu0 %v656
      %860 = vmatpush.bf16.msra.mxu0 %v653
      %861 = vmatpush.bf16.msra.mxu0 %v650
      %862 = vmatpush.bf16.msra.mxu0 %v647
      %863 = vmatpush.bf16.msra.mxu0 %v644
      %864 = vmatpush.bf16.msra.mxu0 %v641
      %865 = vmatpush.bf16.msra.mxu0 %v638
      %866 = vmatpush.bf16.msra.mxu0 %v635
      %867 = vmatmul.bf16.gmra.mxu0 %v497
      %v868 = vpop.f32.mrf.mxu0
      %v869 = vadd.f32 %v549, %v868
      %v870 = vpop.f32.mrf.mxu0
      %v871 = vadd.f32 %v549, %v870
      %872 = vmatmul.bf16.gmra.mxu0 %v498
      %v873 = vpop.f32.mrf.mxu0
      %v874 = vadd.f32 %v549, %v873
      %v875 = vpop.f32.mrf.mxu0
      %v876 = vadd.f32 %v549, %v875
      %877 = vmatmul.bf16.gmra.mxu0 %v499
      %v878 = vpop.f32.mrf.mxu0
      %v879 = vadd.f32 %v549, %v878
      %v880 = vpop.f32.mrf.mxu0
      %v881 = vadd.f32 %v549, %v880
      %882 = vmatmul.bf16.gmra.mxu0 %v500
      %v883 = vpop.f32.mrf.mxu0
      %v884 = vadd.f32 %v549, %v883
      %v885 = vpop.f32.mrf.mxu0
      %v886 = vadd.f32 %v549, %v885
      %887 = vmatmul.bf16.gmra.mxu0 %v501
      %v888 = vpop.f32.mrf.mxu0
      %v889 = vadd.f32 %v549, %v888
      %v890 = vpop.f32.mrf.mxu0
      %v891 = vadd.f32 %v549, %v890
      %892 = vmatmul.bf16.gmra.mxu0 %v502
      %v893 = vpop.f32.mrf.mxu0
      %v894 = vadd.f32 %v549, %v893
      %v895 = vpop.f32.mrf.mxu0
      %v896 = vadd.f32 %v549, %v895
      %897 = vmatmul.bf16.gmra.mxu0 %v503
      %v898 = vpop.f32.mrf.mxu0
      %v899 = vadd.f32 %v549, %v898
      %v900 = vpop.f32.mrf.mxu0
      %v901 = vadd.f32 %v549, %v900
      %902 = vmatmul.bf16.gmra.mxu0 %v504
      %v903 = vpop.f32.mrf.mxu0
      %v904 = vadd.f32 %v549, %v903
      %v905 = vpop.f32.mrf.mxu0
      %v906 = vadd.f32 %v549, %v905
      %907 = vmatmul.bf16.gmra.mxu0 %v505
      %v908 = vpop.f32.mrf.mxu0
      %v909 = vadd.f32 %v549, %v908
      %v910 = vpop.f32.mrf.mxu0
      %v911 = vadd.f32 %v549, %v910
      %912 = vmatmul.bf16.gmra.mxu0 %v506
      %v913 = vpop.f32.mrf.mxu0
      %v914 = vadd.f32 %v549, %v913
      %v915 = vpop.f32.mrf.mxu0
      %v916 = vadd.f32 %v549, %v915
      %917 = vmatmul.bf16.gmra.mxu0 %v507
      %v918 = vpop.f32.mrf.mxu0
      %v919 = vadd.f32 %v549, %v918
      %v920 = vpop.f32.mrf.mxu0
      %v921 = vadd.f32 %v549, %v920
      %922 = vmatmul.bf16.gmra.mxu0 %v508
      %v923 = vpop.f32.mrf.mxu0
      %v924 = vadd.f32 %v549, %v923
      %v925 = vpop.f32.mrf.mxu0
      %v926 = vadd.f32 %v549, %v925
      %927 = vmatmul.bf16.gmra.mxu0 %v509
      %v928 = vpop.f32.mrf.mxu0
      %v929 = vadd.f32 %v549, %v928
      %v930 = vpop.f32.mrf.mxu0
      %v931 = vadd.f32 %v549, %v930
      %932 = vmatmul.bf16.gmra.mxu0 %v510
      %v933 = vpop.f32.mrf.mxu0
      %v934 = vadd.f32 %v549, %v933
      %v935 = vpop.f32.mrf.mxu0
      %v936 = vadd.f32 %v549, %v935
      %937 = vmatmul.bf16.gmra.mxu0 %v511
      %v938 = vpop.f32.mrf.mxu0
      %v939 = vadd.f32 %v549, %v938
      %v940 = vpop.f32.mrf.mxu0
      %v941 = vadd.f32 %v549, %v940
      %942 = vmatmul.bf16.gmra.mxu0 %v512
      %v943 = vpop.f32.mrf.mxu0
      %v944 = vadd.f32 %v549, %v943
      %v945 = vpop.f32.mrf.mxu0
      %v946 = vadd.f32 %v549, %v945
      %947 = vdwg.mxu0
      %v948 = vpack.c.bf16 %v691, %v691
      %v949 = vpack.c.bf16 %v693, %v693
      %v950 = vpack.c.bf16 %v696, %v696
      %v951 = vpack.c.bf16 %v698, %v698
      %v952 = vpack.c.bf16 %v701, %v701
      %v953 = vpack.c.bf16 %v703, %v703
      %v954 = vpack.c.bf16 %v706, %v706
      %v955 = vpack.c.bf16 %v708, %v708
      %v956 = vpack.c.bf16 %v711, %v711
      %v957 = vpack.c.bf16 %v713, %v713
      %v958 = vpack.c.bf16 %v716, %v716
      %v959 = vpack.c.bf16 %v718, %v718
      %v960 = vpack.c.bf16 %v721, %v721
      %v961 = vpack.c.bf16 %v723, %v723
      %v962 = vpack.c.bf16 %v726, %v726
      %v963 = vpack.c.bf16 %v728, %v728
      %v964 = vpack.c.bf16 %v731, %v731
      %v965 = vpack.c.bf16 %v733, %v733
      %v966 = vpack.c.bf16 %v736, %v736
      %v967 = vpack.c.bf16 %v738, %v738
      %v968 = vpack.c.bf16 %v741, %v741
      %v969 = vpack.c.bf16 %v743, %v743
      %v970 = vpack.c.bf16 %v746, %v746
      %v971 = vpack.c.bf16 %v748, %v748
      %v972 = vpack.c.bf16 %v751, %v751
      %v973 = vpack.c.bf16 %v753, %v753
      %v974 = vpack.c.bf16 %v756, %v756
      %v975 = vpack.c.bf16 %v758, %v758
      %v976 = vpack.c.bf16 %v761, %v761
      %v977 = vpack.c.bf16 %v763, %v763
      %v978 = vpack.c.bf16 %v766, %v766
      %v979 = vpack.c.bf16 %v768, %v768
      %980 = vst [vmem:[%s371] sm:$0xf] %v948
      %981 = vst [vmem:[%s371 + $0x4] sm:$0xf] %v949
      %982 = vst [vmem:[%s371 + $0x8] sm:$0xf] %v950
      %983 = vst [vmem:[%s371 + $0xc] sm:$0xf] %v951
      %984 = vst [vmem:[%s371 + $0x10] sm:$0xf] %v952
      %985 = vst [vmem:[%s371 + $0x14] sm:$0xf] %v953
      %986 = vst [vmem:[%s371 + $0x18] sm:$0xf] %v954
      %987 = vst [vmem:[%s371 + $0x1c] sm:$0xf] %v955
      %988 = vst [vmem:[%s371 + $0x20] sm:$0xf] %v956
      %989 = vst [vmem:[%s371 + $0x24] sm:$0xf] %v957
      %990 = vst [vmem:[%s371 + $0x28] sm:$0xf] %v958
      %991 = vst [vmem:[%s371 + $0x2c] sm:$0xf] %v959
      %992 = vst [vmem:[%s371 + $0x30] sm:$0xf] %v960
      %993 = vst [vmem:[%s371 + $0x34] sm:$0xf] %v961
      %994 = vst [vmem:[%s371 + $0x38] sm:$0xf] %v962
      %995 = vst [vmem:[%s371 + $0x3c] sm:$0xf] %v963
      %996 = vst [vmem:[%s371 + $0x40] sm:$0xf] %v964
      %997 = vst [vmem:[%s371 + $0x44] sm:$0xf] %v965
      %998 = vst [vmem:[%s371 + $0x48] sm:$0xf] %v966
      %999 = vst [vmem:[%s371 + $0x4c] sm:$0xf] %v967
      %1000 = vst [vmem:[%s371 + $0x50] sm:$0xf] %v968
      %1001 = vst [vmem:[%s371 + $0x54] sm:$0xf] %v969
      %1002 = vst [vmem:[%s371 + $0x58] sm:$0xf] %v970
      %1003 = vst [vmem:[%s371 + $0x5c] sm:$0xf] %v971
      %1004 = vst [vmem:[%s371 + $0x60] sm:$0xf] %v972
      %1005 = vst [vmem:[%s371 + $0x64] sm:$0xf] %v973
      %1006 = vst [vmem:[%s371 + $0x68] sm:$0xf] %v974
      %1007 = vst [vmem:[%s371 + $0x6c] sm:$0xf] %v975
      %1008 = vst [vmem:[%s371 + $0x70] sm:$0xf] %v976
      %1009 = vst [vmem:[%s371 + $0x74] sm:$0xf] %v977
      %1010 = vst [vmem:[%s371 + $0x78] sm:$0xf] %v978
      %1011 = vst [vmem:[%s371 + $0x7c] sm:$0xf] %v979
      %v1012 = vpack.c.bf16 %v780, %v780
      %v1013 = vpack.c.bf16 %v782, %v782
      %v1014 = vpack.c.bf16 %v785, %v785
      %v1015 = vpack.c.bf16 %v787, %v787
      %v1016 = vpack.c.bf16 %v790, %v790
      %v1017 = vpack.c.bf16 %v792, %v792
      %v1018 = vpack.c.bf16 %v795, %v795
      %v1019 = vpack.c.bf16 %v797, %v797
      %v1020 = vpack.c.bf16 %v800, %v800
      %v1021 = vpack.c.bf16 %v802, %v802
      %v1022 = vpack.c.bf16 %v805, %v805
      %v1023 = vpack.c.bf16 %v807, %v807
      %v1024 = vpack.c.bf16 %v810, %v810
      %v1025 = vpack.c.bf16 %v812, %v812
      %v1026 = vpack.c.bf16 %v815, %v815
      %v1027 = vpack.c.bf16 %v817, %v817
      %v1028 = vpack.c.bf16 %v820, %v820
      %v1029 = vpack.c.bf16 %v822, %v822
      %v1030 = vpack.c.bf16 %v825, %v825
      %v1031 = vpack.c.bf16 %v827, %v827
      %v1032 = vpack.c.bf16 %v830, %v830
      %v1033 = vpack.c.bf16 %v832, %v832
      %v1034 = vpack.c.bf16 %v835, %v835
      %v1035 = vpack.c.bf16 %v837, %v837
      %v1036 = vpack.c.bf16 %v840, %v840
      %v1037 = vpack.c.bf16 %v842, %v842
      %v1038 = vpack.c.bf16 %v845, %v845
      %v1039 = vpack.c.bf16 %v847, %v847
      %v1040 = vpack.c.bf16 %v850, %v850
      %v1041 = vpack.c.bf16 %v852, %v852
      %v1042 = vpack.c.bf16 %v855, %v855
      %v1043 = vpack.c.bf16 %v857, %v857
      %1044 = vst [vmem:[%s381] sm:$0xf] %v1012
      %1045 = vst [vmem:[%s381 + $0x4] sm:$0xf] %v1013
      %1046 = vst [vmem:[%s381 + $0x8] sm:$0xf] %v1014
      %1047 = vst [vmem:[%s381 + $0xc] sm:$0xf] %v1015
      %1048 = vst [vmem:[%s381 + $0x10] sm:$0xf] %v1016
      %1049 = vst [vmem:[%s381 + $0x14] sm:$0xf] %v1017
      %1050 = vst [vmem:[%s381 + $0x18] sm:$0xf] %v1018
      %1051 = vst [vmem:[%s381 + $0x1c] sm:$0xf] %v1019
      %1052 = vst [vmem:[%s381 + $0x20] sm:$0xf] %v1020
      %1053 = vst [vmem:[%s381 + $0x24] sm:$0xf] %v1021
      %1054 = vst [vmem:[%s381 + $0x28] sm:$0xf] %v1022
      %1055 = vst [vmem:[%s381 + $0x2c] sm:$0xf] %v1023
      %1056 = vst [vmem:[%s381 + $0x30] sm:$0xf] %v1024
      %1057 = vst [vmem:[%s381 + $0x34] sm:$0xf] %v1025
      %1058 = vst [vmem:[%s381 + $0x38] sm:$0xf] %v1026
      %1059 = vst [vmem:[%s381 + $0x3c] sm:$0xf] %v1027
      %1060 = vst [vmem:[%s381 + $0x40] sm:$0xf] %v1028
      %1061 = vst [vmem:[%s381 + $0x44] sm:$0xf] %v1029
      %1062 = vst [vmem:[%s381 + $0x48] sm:$0xf] %v1030
      %1063 = vst [vmem:[%s381 + $0x4c] sm:$0xf] %v1031
      %1064 = vst [vmem:[%s381 + $0x50] sm:$0xf] %v1032
      %1065 = vst [vmem:[%s381 + $0x54] sm:$0xf] %v1033
      %1066 = vst [vmem:[%s381 + $0x58] sm:$0xf] %v1034
      %1067 = vst [vmem:[%s381 + $0x5c] sm:$0xf] %v1035
      %1068 = vst [vmem:[%s381 + $0x60] sm:$0xf] %v1036
      %1069 = vst [vmem:[%s381 + $0x64] sm:$0xf] %v1037
      %1070 = vst [vmem:[%s381 + $0x68] sm:$0xf] %v1038
      %1071 = vst [vmem:[%s381 + $0x6c] sm:$0xf] %v1039
      %1072 = vst [vmem:[%s381 + $0x70] sm:$0xf] %v1040
      %1073 = vst [vmem:[%s381 + $0x74] sm:$0xf] %v1041
      %1074 = vst [vmem:[%s381 + $0x78] sm:$0xf] %v1042
      %1075 = vst [vmem:[%s381 + $0x7c] sm:$0xf] %v1043
      %v1076 = vpack.c.bf16 %v869, %v869
      %v1077 = vpack.c.bf16 %v871, %v871
      %v1078 = vpack.c.bf16 %v874, %v874
      %v1079 = vpack.c.bf16 %v876, %v876
      %v1080 = vpack.c.bf16 %v879, %v879
      %v1081 = vpack.c.bf16 %v881, %v881
      %v1082 = vpack.c.bf16 %v884, %v884
      %v1083 = vpack.c.bf16 %v886, %v886
      %v1084 = vpack.c.bf16 %v889, %v889
      %v1085 = vpack.c.bf16 %v891, %v891
      %v1086 = vpack.c.bf16 %v894, %v894
      %v1087 = vpack.c.bf16 %v896, %v896
      %v1088 = vpack.c.bf16 %v899, %v899
      %v1089 = vpack.c.bf16 %v901, %v901
      %v1090 = vpack.c.bf16 %v904, %v904
      %v1091 = vpack.c.bf16 %v906, %v906
      %v1092 = vpack.c.bf16 %v909, %v909
      %v1093 = vpack.c.bf16 %v911, %v911
      %v1094 = vpack.c.bf16 %v914, %v914
      %v1095 = vpack.c.bf16 %v916, %v916
      %v1096 = vpack.c.bf16 %v919, %v919
      %v1097 = vpack.c.bf16 %v921, %v921
      %v1098 = vpack.c.bf16 %v924, %v924
      %v1099 = vpack.c.bf16 %v926, %v926
      %v1100 = vpack.c.bf16 %v929, %v929
      %v1101 = vpack.c.bf16 %v931, %v931
      %v1102 = vpack.c.bf16 %v934, %v934
      %v1103 = vpack.c.bf16 %v936, %v936
      %v1104 = vpack.c.bf16 %v939, %v939
      %v1105 = vpack.c.bf16 %v941, %v941
      %v1106 = vpack.c.bf16 %v944, %v944
      %v1107 = vpack.c.bf16 %v946, %v946
      %1108 = vst [vmem:[%s391] sm:$0xf] %v1076
      %1109 = vst [vmem:[%s391 + $0x4] sm:$0xf] %v1077
      %1110 = vst [vmem:[%s391 + $0x8] sm:$0xf] %v1078
      %1111 = vst [vmem:[%s391 + $0xc] sm:$0xf] %v1079
      %1112 = vst [vmem:[%s391 + $0x10] sm:$0xf] %v1080
      %1113 = vst [vmem:[%s391 + $0x14] sm:$0xf] %v1081
      %1114 = vst [vmem:[%s391 + $0x18] sm:$0xf] %v1082
      %1115 = vst [vmem:[%s391 + $0x1c] sm:$0xf] %v1083
      %1116 = vst [vmem:[%s391 + $0x20] sm:$0xf] %v1084
      %1117 = vst [vmem:[%s391 + $0x24] sm:$0xf] %v1085
      %1118 = vst [vmem:[%s391 + $0x28] sm:$0xf] %v1086
      %1119 = vst [vmem:[%s391 + $0x2c] sm:$0xf] %v1087
      %1120 = vst [vmem:[%s391 + $0x30] sm:$0xf] %v1088
      %1121 = vst [vmem:[%s391 + $0x34] sm:$0xf] %v1089
      %1122 = vst [vmem:[%s391 + $0x38] sm:$0xf] %v1090
      %1123 = vst [vmem:[%s391 + $0x3c] sm:$0xf] %v1091
      %1124 = vst [vmem:[%s391 + $0x40] sm:$0xf] %v1092
      %1125 = vst [vmem:[%s391 + $0x44] sm:$0xf] %v1093
      %1126 = vst [vmem:[%s391 + $0x48] sm:$0xf] %v1094
      %1127 = vst [vmem:[%s391 + $0x4c] sm:$0xf] %v1095
      %1128 = vst [vmem:[%s391 + $0x50] sm:$0xf] %v1096
      %1129 = vst [vmem:[%s391 + $0x54] sm:$0xf] %v1097
      %1130 = vst [vmem:[%s391 + $0x58] sm:$0xf] %v1098
      %1131 = vst [vmem:[%s391 + $0x5c] sm:$0xf] %v1099
      %1132 = vst [vmem:[%s391 + $0x60] sm:$0xf] %v1100
      %1133 = vst [vmem:[%s391 + $0x64] sm:$0xf] %v1101
      %1134 = vst [vmem:[%s391 + $0x68] sm:$0xf] %v1102
      %1135 = vst [vmem:[%s391 + $0x6c] sm:$0xf] %v1103
      %1136 = vst [vmem:[%s391 + $0x70] sm:$0xf] %v1104
      %1137 = vst [vmem:[%s391 + $0x74] sm:$0xf] %v1105
      %1138 = vst [vmem:[%s391 + $0x78] sm:$0xf] %v1106
      %1139 = vst [vmem:[%s391 + $0x7c] sm:$0xf] %v1107
      %s1140 = smul.u32 32, %s24
      %p1141 = scmp.lt.s32.totalorder %s23, 1
      %s1142 = scalar_select %p1141, %s23, 1
      %p1143 = scmp.lt.s32.totalorder %s1140, 31
      %s1144 = scalar_select %p1143, %s1140, 31
      %s1145 = smul.addr %s1142, 32
      %s1146 = sadd.s32 %s1144, %s1145
      %s1147 = smul.addr %s1146, 4
      %s1148 = scalar_lea.vmem %s5, %s1147
      %s1149 = smul.u32 32, %s24
      %p1150 = scmp.lt.s32.totalorder %s23, 1
      %s1151 = scalar_select %p1150, %s23, 1
      %p1152 = scmp.lt.s32.totalorder %s1149, 31
      %s1153 = scalar_select %p1152, %s1149, 31
      %s1154 = smul.addr %s1151, 32
      %s1155 = sadd.s32 %s1153, %s1154
      %s1156 = smul.addr %s1155, 4
      %s1157 = scalar_lea.vmem %s6, %s1156
      %s1158 = smul.u32 32, %s24
      %p1159 = scmp.lt.s32.totalorder %s23, 1
      %s1160 = scalar_select %p1159, %s23, 1
      %p1161 = scmp.lt.s32.totalorder %s1158, 31
      %s1162 = scalar_select %p1161, %s1158, 31
      %s1163 = smul.addr %s1160, 32
      %s1164 = sadd.s32 %s1162, %s1163
      %s1165 = smul.addr %s1164, 4
      %s1166 = scalar_lea.vmem %s7, %s1165
      // Predicated region
      $region41: #{attn_block_forward.2} parent=39 // pred_check
        %p1167 = pneg %p173
      $region42: #{attn_block_forward.2} parent=39 // pred_check_branch
        %1169 = sbr.rel (%p1167) target = $region44
      $region43: #{attn_block_forward.2} parent=39 // pred_region
        %s1170 = smul.u32 32, %s24
      $region44: #{attn_block_forward.2} parent=39 // pred_fallthru
        _
      // Predicated region
      $region45: #{attn_block_forward.2} parent=39 // pred_check
        %p1171 = pneg %p201
      $region46: #{attn_block_forward.2} parent=39 // pred_check_branch
        %1173 = sbr.rel (%p1171) target = $region48
      $region47: #{attn_block_forward.2} parent=39 // pred_region
        %s1174 = smul.u32 32, %s24
      $region48: #{attn_block_forward.2} parent=39 // pred_fallthru
        _
      // Predicated region
      $region49: #{attn_block_forward.2} parent=39 // pred_check
        %p1175 = pneg %p229
      $region50: #{attn_block_forward.2} parent=39 // pred_check_branch
        %1177 = sbr.rel (%p1175) target = $region52
      $region51: #{attn_block_forward.2} parent=39 // pred_region
        %s1178 = smul.u32 32, %s24
      $region52: #{attn_block_forward.2} parent=39 // pred_fallthru
        _
    $region40: #{attn_block_forward.2} parent=5 // pred_fallthru
      _
    %p1179 = scmp.le.s32.totalorder 2, %s14
    // Predicated region
    $region53: #{attn_block_forward.2} parent=5 // pred_check
      %p1180 = pneg %p1179
    $region54: #{attn_block_forward.2} parent=5 // pred_check_branch
      %1182 = sbr.rel (%p1180) target = $region56
    $region55: #{attn_block_forward.2} parent=5 // pred_region
      %s1183 = ssub.s32 %s14, 2
      // Predicated region
      $region57: #{attn_block_forward.2} parent=55 // pred_check
        %p1184 = pneg %p179
      $region58: #{attn_block_forward.2} parent=55 // pred_check_branch
        %1186 = sbr.rel (%p1184) target = $region60
      $region59: #{attn_block_forward.2} parent=55 // pred_region
        %s1187 = smul.u32 32, %s26
        %p1188 = scmp.lt.s32.totalorder %s25, 1
        %s1189 = scalar_select %p1188, %s25, 1
        %p1190 = scmp.lt.s32.totalorder %s1187, 31
        %s1191 = scalar_select %p1190, %s1187, 31
        %s1192 = smul.addr %s1189, 32
        %s1193 = sadd.s32 %s1191, %s1192
        %s1194 = smul.addr %s1193, 4
        %s1195 = scalar_lea.vmem %s5, %s1194
      $region60: #{attn_block_forward.2} parent=55 // pred_fallthru
        _
      // Predicated region
      $region61: #{attn_block_forward.2} parent=55 // pred_check
        %p1196 = pneg %p207
      $region62: #{attn_block_forward.2} parent=55 // pred_check_branch
        %1198 = sbr.rel (%p1196) target = $region64
      $region63: #{attn_block_forward.2} parent=55 // pred_region
        %s1199 = smul.u32 32, %s26
        %p1200 = scmp.lt.s32.totalorder %s25, 1
        %s1201 = scalar_select %p1200, %s25, 1
        %p1202 = scmp.lt.s32.totalorder %s1199, 31
        %s1203 = scalar_select %p1202, %s1199, 31
        %s1204 = smul.addr %s1201, 32
        %s1205 = sadd.s32 %s1203, %s1204
        %s1206 = smul.addr %s1205, 4
        %s1207 = scalar_lea.vmem %s6, %s1206
      $region64: #{attn_block_forward.2} parent=55 // pred_fallthru
        _
      // Predicated region
      $region65: #{attn_block_forward.2} parent=55 // pred_check
        %p1208 = pneg %p235
      $region66: #{attn_block_forward.2} parent=55 // pred_check_branch
        %1210 = sbr.rel (%p1208) target = $region68
      $region67: #{attn_block_forward.2} parent=55 // pred_region
        %s1211 = smul.u32 32, %s26
        %p1212 = scmp.lt.s32.totalorder %s25, 1
        %s1213 = scalar_select %p1212, %s25, 1
        %p1214 = scmp.lt.s32.totalorder %s1211, 31
        %s1215 = scalar_select %p1214, %s1211, 31
        %s1216 = smul.addr %s1213, 32
        %s1217 = sadd.s32 %s1215, %s1216
        %s1218 = smul.addr %s1217, 4
        %s1219 = scalar_lea.vmem %s7, %s1218
      $region68: #{attn_block_forward.2} parent=55 // pred_fallthru
        _
    $region56: #{attn_block_forward.2} parent=5 // pred_fallthru
      _
  $region6: #{attn_block_forward.2} parent=0 // loop_footer
    %s18 = sadd.s32 1, %s14
  $region7: #{attn_block_forward.2} parent=0 // loop_footer_branch
    %13 = sbr.rel target = $region3
  $region8: #{attn_block_forward.2} parent=0 // loop_exit
    _

// kernel: attn_block_forward.3
$region0: #{attn_block_forward.3}
  #allocation0 [shape = 'u32[]', space=smem, size = 0x4, offset = 0x4, fixed_abs, tag = 'smem constant byte address 0x4 - core index']
  #allocation1 [shape = 'u32[72,128]{1,0:T(1,128)}', space=vmem, size = 0x9000, scoped, tag = 'internal scratch']
  #allocation2 [shape = 'f32[256,1]{1,0:T(8,128)}', space=vmem, size = 0x20000, scoped, tag = 'scratch operand']
  #allocation3 [shape = 'f32[256,1]{1,0:T(8,128)}', space=vmem, size = 0x20000, scoped, tag = 'scratch operand']
  #allocation4 [shape = 'f32[256,128]{1,0:T(8,128)}', space=vmem, size = 0x20000, scoped, tag = 'scratch operand']
  %s0 = inlined_call_operand.vmem [shape: bf16[2,256,128], index: 0, kind: input, shape index: {}]
  %s1 = inlined_call_operand.vmem [shape: bf16[2,256,128], index: 1, kind: input, shape index: {}]
  %s2 = inlined_call_operand.vmem [shape: bf16[2,256,128], index: 2, kind: input, shape index: {}]
  %s3 = inlined_call_operand.vmem [shape: f32[2,256,128], index: 3, kind: input, shape index: {}]
  %s4 = inlined_call_operand.vmem [shape: bf16[128,128], index: 4, kind: input, shape index: {}]
  %s5 = inlined_call_operand.vmem [shape: f32[1,128], index: 5, kind: input, shape index: {}]
  %s6 = inlined_call_operand.hbm [shape: f32[2,256,128], index: 6, kind: output, shape index: {}]
  %s7 = sld [smem:[#allocation0]]
  $region65: #{attn_block_forward.3} parent=0
    _
  %s9 = ssub.s32 1, %s7
  %s10 = scalar_select 0, %s9, %s7
  $region1: #{attn_block_forward.3} parent=0
    #allocation5 [shape = 'u8[262144]{0}', space=vmem, size = 0x40000, scoped, tag = 'output window, operand 0']
    #allocation6 [shape = 's32[2]{0}', space=sflag, size = 0x8, scoped, tag = 'scoped memory for attn_block_forward.3']
    %11 = vsyncpa [#allocation6], 0
    %s12 = scalar_lea.sflag [#allocation6], 1
    %13 = vsyncpa %s12, 0
    loop: start=0, step=1, limit=4
    $region2: #{attn_block_forward.3} parent=1 // loop_pre_header
      _
    $region3: #{attn_block_forward.3} parent=1 // loop_header
      %s15 = sphi 0, %s19
      %p16 = scmp.ge.s32.totalorder %s15, 4
      %s22 = sphi 0, %s41
      %s23 = sphi 0, %s37
      %s24 = sphi 0, %s33
      %s25 = sphi 0, %s22
      %s26 = sphi 0, %s23
      %s27 = sphi 0, %s24
      %s28 = sphi 0, %s25
      %s29 = sphi 0, %s26
      %s30 = sphi 0, %s27
      %s46 = sphi 0, %s48
      %s49 = sphi 0, %s46
      %s50 = sphi 0, %s49
      %s66 = sphi 0, %s50
      %s74 = sphi 0, %s76
      %s77 = sphi 0, %s74
      %s78 = sphi 0, %s77
      %s94 = sphi 0, %s78
      %s102 = sphi 0, %s104
      %s105 = sphi 0, %s102
      %s106 = sphi 0, %s105
      %s122 = sphi 0, %s106
      %s130 = sphi 0, %s132
      %s133 = sphi 0, %s130
      %s134 = sphi 0, %s133
      %s150 = sphi 0, %s134
      %s154 = sphi 0, %s154
      %s156 = sphi 0, %s154
      %s157 = sphi 0, %s156
      %s171 = sphi 0, %s157
      %s175 = sphi 0, %s175
      %s177 = sphi 0, %s175
      %s178 = sphi 0, %s177
      %s192 = sphi 0, %s178
      %s200 = sphi 0, %s202
      %s203 = sphi 0, %s200
      %s204 = sphi 0, %s203
      %s220 = sphi 0, %s204
    $region4: #{attn_block_forward.3} parent=1 // loop_header_branch
      %18 = sbr.rel (%p16) target = $region8
    $region5: #{attn_block_forward.3} parent=1 // loop_body
      %s20 = ssub.s32 %s15, 1
      %s21 = ssub.s32 %s15, 2
      %s31 = sadd.s32 1, %s24
      %p32 = scmp.ge.s32.totalorder %s31, 1
      %s33 = scalar_select %p32, 0, %s31
      %s34 = sadd.s32 1, %s23
      %s35 = scalar_select %p32, %s34, %s23
      %p36 = scmp.ge.s32.totalorder %s35, 1
      %s37 = scalar_select %p36, 0, %s35
      %s38 = sadd.s32 1, %s22
      %s39 = scalar_select %p36, %s38, %s22
      %p40 = scmp.ge.s32.totalorder %s39, 2
      %s41 = scalar_select %p40, 0, %s39
      %s42 = ssub.s32 %s22, %s41
      %s43 = ssub.s32 %s23, %s37
      %s44 = sor.u32 %s42, %s43
      %p45 = scmp.eq.s32.totalorder %s44, 0
      %s47 = sadd.s32 %s46, 1
      %s48 = scalar_select %p45, %s46, %s47
      %p51 = pneg %p45
      %p52 = scmp.eq.s32.totalorder %s15, 1
      %p53 = por %p51, %p52
      %p54 = scmp.ne.s32.totalorder %s46, %s49
      %p55 = scmp.eq.s32.totalorder %s15, 0
      %p56 = por %p54, %p55
      %p57 = scmp.ne.s32.totalorder %s46, %s49
      %p58 = scmp.eq.s32.totalorder %s20, 1
      %p59 = por %p57, %p58
      %p60 = scmp.ne.s32.totalorder %s49, %s50
      %p61 = scmp.eq.s32.totalorder %s20, 0
      %p62 = por %p60, %p61
      %p63 = scmp.ne.s32.totalorder %s49, %s50
      %p64 = scmp.eq.s32.totalorder %s21, 1
      %p65 = por %p63, %p64
      %p67 = scmp.ne.s32.totalorder %s50, %s66
      %p68 = scmp.eq.s32.totalorder %s21, 0
      %p69 = por %p67, %p68
      %s70 = ssub.s32 %s22, %s41
      %s71 = ssub.s32 %s24, %s33
      %s72 = sor.u32 %s70, %s71
      %p73 = scmp.eq.s32.totalorder %s72, 0
      %s75 = sadd.s32 %s74, 1
      %s76 = scalar_select %p73, %s74, %s75
      %p79 = pneg %p73
      %p80 = scmp.eq.s32.totalorder %s15, 1
      %p81 = por %p79, %p80
      %p82 = scmp.ne.s32.totalorder %s74, %s77
      %p83 = scmp.eq.s32.totalorder %s15, 0
      %p84 = por %p82, %p83
      %p85 = scmp.ne.s32.totalorder %s74, %s77
      %p86 = scmp.eq.s32.totalorder %s20, 1
      %p87 = por %p85, %p86
      %p88 = scmp.ne.s32.totalorder %s77, %s78
      %p89 = scmp.eq.s32.totalorder %s20, 0
      %p90 = por %p88, %p89
      %p91 = scmp.ne.s32.totalorder %s77, %s78
      %p92 = scmp.eq.s32.totalorder %s21, 1
      %p93 = por %p91, %p92
      %p95 = scmp.ne.s32.totalorder %s78, %s94
      %p96 = scmp.eq.s32.totalorder %s21, 0
      %p97 = por %p95, %p96
      %s98 = ssub.s32 %s22, %s41
      %s99 = ssub.s32 %s24, %s33
      %s100 = sor.u32 %s98, %s99
      %p101 = scmp.eq.s32.totalorder %s100, 0
      %s103 = sadd.s32 %s102, 1
      %s104 = scalar_select %p101, %s102, %s103
      %p107 = pneg %p101
      %p108 = scmp.eq.s32.totalorder %s15, 1
      %p109 = por %p107, %p108
      %p110 = scmp.ne.s32.totalorder %s102, %s105
      %p111 = scmp.eq.s32.totalorder %s15, 0
      %p112 = por %p110, %p111
      %p113 = scmp.ne.s32.totalorder %s102, %s105
      %p114 = scmp.eq.s32.totalorder %s20, 1
      %p115 = por %p113, %p114
      %p116 = scmp.ne.s32.totalorder %s105, %s106
      %p117 = scmp.eq.s32.totalorder %s20, 0
      %p118 = por %p116, %p117
      %p119 = scmp.ne.s32.totalorder %s105, %s106
      %p120 = scmp.eq.s32.totalorder %s21, 1
      %p121 = por %p119, %p120
      %p123 = scmp.ne.s32.totalorder %s106, %s122
      %p124 = scmp.eq.s32.totalorder %s21, 0
      %p125 = por %p123, %p124
      %s126 = ssub.s32 %s22, %s41
      %s127 = ssub.s32 %s23, %s37
      %s128 = sor.u32 %s126, %s127
      %p129 = scmp.eq.s32.totalorder %s128, 0
      %s131 = sadd.s32 %s130, 1
      %s132 = scalar_select %p129, %s130, %s131
      %p135 = pneg %p129
      %p136 = scmp.eq.s32.totalorder %s15, 1
      %p137 = por %p135, %p136
      %p138 = scmp.ne.s32.totalorder %s130, %s133
      %p139 = scmp.eq.s32.totalorder %s15, 0
      %p140 = por %p138, %p139
      %p141 = scmp.ne.s32.totalorder %s130, %s133
      %p142 = scmp.eq.s32.totalorder %s20, 1
      %p143 = por %p141, %p142
      %p144 = scmp.ne.s32.totalorder %s133, %s134
      %p145 = scmp.eq.s32.totalorder %s20, 0
      %p146 = por %p144, %p145
      %p147 = scmp.ne.s32.totalorder %s133, %s134
      %p148 = scmp.eq.s32.totalorder %s21, 1
      %p149 = por %p147, %p148
      %p151 = scmp.ne.s32.totalorder %s134, %s150
      %p152 = scmp.eq.s32.totalorder %s21, 0
      %p153 = por %p151, %p152
      %s155 = sadd.s32 %s154, 1
      %p158 = scmp.eq.s32.totalorder %s15, 1
      %p159 = scmp.ne.s32.totalorder %s154, %s156
      %p160 = scmp.eq.s32.totalorder %s15, 0
      %p161 = por %p159, %p160
      %p162 = scmp.ne.s32.totalorder %s154, %s156
      %p163 = scmp.eq.s32.totalorder %s20, 1
      %p164 = por %p162, %p163
      %p165 = scmp.ne.s32.totalorder %s156, %s157
      %p166 = scmp.eq.s32.totalorder %s20, 0
      %p167 = por %p165, %p166
      %p168 = scmp.ne.s32.totalorder %s156, %s157
      %p169 = scmp.eq.s32.totalorder %s21, 1
      %p170 = por %p168, %p169
      %p172 = scmp.ne.s32.totalorder %s157, %s171
      %p173 = scmp.eq.s32.totalorder %s21, 0
      %p174 = por %p172, %p173
      %s176 = sadd.s32 %s175, 1
      %p179 = scmp.eq.s32.totalorder %s15, 1
      %p180 = scmp.ne.s32.totalorder %s175, %s177
      %p181 = scmp.eq.s32.totalorder %s15, 0
      %p182 = por %p180, %p181
      %p183 = scmp.ne.s32.totalorder %s175, %s177
      %p184 = scmp.eq.s32.totalorder %s20, 1
      %p185 = por %p183, %p184
      %p186 = scmp.ne.s32.totalorder %s177, %s178
      %p187 = scmp.eq.s32.totalorder %s20, 0
      %p188 = por %p186, %p187
      %p189 = scmp.ne.s32.totalorder %s177, %s178
      %p190 = scmp.eq.s32.totalorder %s21, 1
      %p191 = por %p189, %p190
      %p193 = scmp.ne.s32.totalorder %s178, %s192
      %p194 = scmp.eq.s32.totalorder %s21, 0
      %p195 = por %p193, %p194
      %s196 = ssub.s32 %s22, %s41
      %s197 = ssub.s32 %s23, %s37
      %s198 = sor.u32 %s196, %s197
      %p199 = scmp.eq.s32.totalorder %s198, 0
      %s201 = sadd.s32 %s200, 1
      %s202 = scalar_select %p199, %s200, %s201
      %p205 = pneg %p199
      %p206 = scmp.eq.s32.totalorder %s15, 1
      %p207 = por %p205, %p206
      %p208 = scmp.ne.s32.totalorder %s200, %s203
      %p209 = scmp.eq.s32.totalorder %s15, 0
      %p210 = por %p208, %p209
      %p211 = scmp.ne.s32.totalorder %s200, %s203
      %p212 = scmp.eq.s32.totalorder %s20, 1
      %p213 = por %p211, %p212
      %p214 = scmp.ne.s32.totalorder %s203, %s204
      %p215 = scmp.eq.s32.totalorder %s20, 0
      %p216 = por %p214, %p215
      %p217 = scmp.ne.s32.totalorder %s203, %s204
      %p218 = scmp.eq.s32.totalorder %s21, 1
      %p219 = por %p217, %p218
      %p221 = scmp.ne.s32.totalorder %s204, %s220
      %p222 = scmp.eq.s32.totalorder %s21, 0
      %p223 = por %p221, %p222
      %p224 = scmp.le.s32.totalorder 1, %s15
      %p225 = scmp.lt.s32.totalorder %s15, 3
      %p226 = pnand %p224, %p225
      %p227 = pneg %p226
      // Predicated region
      $region9: #{attn_block_forward.3} parent=5 // pred_check
        _
      $region10: #{attn_block_forward.3} parent=5 // pred_check_branch
        %229 = sbr.rel (%p226) target = $region12
      $region11: #{attn_block_forward.3} parent=5 // pred_region
        %s230 = ssub.s32 %s15, 1
        // Predicated region
        $region13: #{attn_block_forward.3} parent=11 // pred_check
          %p231 = pneg %p167
        $region14: #{attn_block_forward.3} parent=11 // pred_check_branch
          %233 = sbr.rel (%p231) target = $region16
        $region15: #{attn_block_forward.3} parent=11 // pred_region
          _
        $region16: #{attn_block_forward.3} parent=11 // pred_fallthru
          _
        // Predicated region
        $region17: #{attn_block_forward.3} parent=11 // pred_check
          %p234 = pneg %p188
        $region18: #{attn_block_forward.3} parent=11 // pred_check_branch
          %236 = sbr.rel (%p234) target = $region20
        $region19: #{attn_block_forward.3} parent=11 // pred_region
          _
        $region20: #{attn_block_forward.3} parent=11 // pred_fallthru
          _
      $region12: #{attn_block_forward.3} parent=5 // pred_fallthru
        _
      %p237 = scmp.lt.s32.totalorder %s15, 2
      // Predicated region
      $region21: #{attn_block_forward.3} parent=5 // pred_check
        %p238 = pneg %p237
      $region22: #{attn_block_forward.3} parent=5 // pred_check_branch
        %240 = sbr.rel (%p238) target = $region24
      $region23: #{attn_block_forward.3} parent=5 // pred_region
        // Predicated region
        $region25: #{attn_block_forward.3} parent=23 // pred_check
          %p241 = pneg %p56
        $region26: #{attn_block_forward.3} parent=23 // pred_check_branch
          %243 = sbr.rel (%p241) target = $region28
        $region27: #{attn_block_forward.3} parent=23 // pred_region
          %s244 = smul.u32 32, %s23
          %p245 = scmp.lt.s32.totalorder %s22, 1
          %s246 = scalar_select %p245, %s22, 1
          %p247 = scmp.lt.s32.totalorder %s244, 31
          %s248 = scalar_select %p247, %s244, 31
          %s249 = smul.addr %s246, 32
          %s250 = sadd.s32 %s248, %s249
          %s251 = smul.addr %s250, 4
          %s252 = scalar_lea.vmem %s0, %s251
          %s253 = smul.u32 32, %s23
        $region28: #{attn_block_forward.3} parent=23 // pred_fallthru
          _
        // Predicated region
        $region29: #{attn_block_forward.3} parent=23 // pred_check
          %p254 = pneg %p84
        $region30: #{attn_block_forward.3} parent=23 // pred_check_branch
          %256 = sbr.rel (%p254) target = $region32
        $region31: #{attn_block_forward.3} parent=23 // pred_region
          %s257 = smul.u32 32, %s24
          %p258 = scmp.lt.s32.totalorder %s22, 1
          %s259 = scalar_select %p258, %s22, 1
          %p260 = scmp.lt.s32.totalorder %s257, 31
          %s261 = scalar_select %p260, %s257, 31
          %s262 = smul.addr %s259, 32
          %s263 = sadd.s32 %s261, %s262
          %s264 = smul.addr %s263, 4
          %s265 = scalar_lea.vmem %s1, %s264
          %s266 = smul.u32 32, %s24
        $region32: #{attn_block_forward.3} parent=23 // pred_fallthru
          _
        // Predicated region
        $region33: #{attn_block_forward.3} parent=23 // pred_check
          %p267 = pneg %p112
        $region34: #{attn_block_forward.3} parent=23 // pred_check_branch
          %269 = sbr.rel (%p267) target = $region36
        $region35: #{attn_block_forward.3} parent=23 // pred_region
          %s270 = smul.u32 32, %s24
          %p271 = scmp.lt.s32.totalorder %s22, 1
          %s272 = scalar_select %p271, %s22, 1
          %p273 = scmp.lt.s32.totalorder %s270, 31
          %s274 = scalar_select %p273, %s270, 31
          %s275 = smul.addr %s272, 32
          %s276 = sadd.s32 %s274, %s275
          %s277 = smul.addr %s276, 4
          %s278 = scalar_lea.vmem %s2, %s277
          %s279 = smul.u32 32, %s24
        $region36: #{attn_block_forward.3} parent=23 // pred_fallthru
          _
        // Predicated region
        $region37: #{attn_block_forward.3} parent=23 // pred_check
          %p280 = pneg %p140
        $region38: #{attn_block_forward.3} parent=23 // pred_check_branch
          %282 = sbr.rel (%p280) target = $region40
        $region39: #{attn_block_forward.3} parent=23 // pred_region
          %s283 = smul.u32 32, %s23
          %p284 = scmp.lt.s32.totalorder %s22, 1
          %s285 = scalar_select %p284, %s22, 1
          %p286 = scmp.lt.s32.totalorder %s283, 31
          %s287 = scalar_select %p286, %s283, 31
          %s288 = smul.addr %s285, 32
          %s289 = sadd.s32 %s287, %s288
          %s290 = smul.addr %s289, 8
          %s291 = scalar_lea.vmem %s3, %s290
          %s292 = smul.u32 32, %s23
        $region40: #{attn_block_forward.3} parent=23 // pred_fallthru
          _
      $region24: #{attn_block_forward.3} parent=5 // pred_fallthru
        _
      %p293 = scmp.le.s32.totalorder 1, %s15
      %p294 = scmp.lt.s32.totalorder %s15, 3
      %p295 = pnand %p293, %p294
      %p296 = pneg %p295
      // Predicated region
      $region41: #{attn_block_forward.3} parent=5 // pred_check
        _
      $region42: #{attn_block_forward.3} parent=5 // pred_check_branch
        %298 = sbr.rel (%p295) target = $region44
      $region43: #{attn_block_forward.3} parent=5 // pred_region
        %s299 = ssub.s32 %s15, 1
        %s300 = smul.u32 32, %s26
        %p301 = scmp.lt.s32.totalorder %s25, 1
        %s302 = scalar_select %p301, %s25, 1
        %p303 = scmp.lt.s32.totalorder %s300, 31
        %s304 = scalar_select %p303, %s300, 31
        %s305 = smul.addr %s302, 32
        %s306 = sadd.s32 %s304, %s305
        %s307 = smul.addr %s306, 4
        %s308 = scalar_lea.vmem %s0, %s307
        %p309 = pneg %p62
        %p310 = pneg %p59
        %s311 = smul.u32 32, %s27
        %p312 = scmp.lt.s32.totalorder %s25, 1
        %s313 = scalar_select %p312, %s25, 1
        %p314 = scmp.lt.s32.totalorder %s311, 31
        %s315 = scalar_select %p314, %s311, 31
        %s316 = smul.addr %s313, 32
        %s317 = sadd.s32 %s315, %s316
        %s318 = smul.addr %s317, 4
        %s319 = scalar_lea.vmem %s1, %s318
        %p320 = pneg %p90
        %p321 = pneg %p87
        %s322 = smul.u32 32, %s27
        %p323 = scmp.lt.s32.totalorder %s25, 1
        %s324 = scalar_select %p323, %s25, 1
        %p325 = scmp.lt.s32.totalorder %s322, 31
        %s326 = scalar_select %p325, %s322, 31
        %s327 = smul.addr %s324, 32
        %s328 = sadd.s32 %s326, %s327
        %s329 = smul.addr %s328, 4
        %s330 = scalar_lea.vmem %s2, %s329
        %p331 = pneg %p118
        %p332 = pneg %p115
        %s333 = smul.u32 32, %s26
        %p334 = scmp.lt.s32.totalorder %s25, 1
        %s335 = scalar_select %p334, %s25, 1
        %p336 = scmp.lt.s32.totalorder %s333, 31
        %s337 = scalar_select %p336, %s333, 31
        %s338 = smul.addr %s335, 32
        %s339 = sadd.s32 %s337, %s338
        %s340 = smul.addr %s339, 8
        %s341 = scalar_lea.vmem %s3, %s340
        %p342 = pneg %p146
        %p343 = pneg %p143
        %p344 = pneg %p167
        %p345 = pneg %p164
        %p346 = pneg %p188
        %p347 = pneg %p185
        %p348 = pneg %p216
        %p349 = pneg %p213
        %s350 = sand.u32 %s203, 1
        %s351 = scalar_lea.sflag [#allocation6], %s350
        %s352 = sand.u32 %s203, 1
        %s353 = smul.addr %s352, 256
        %s354 = scalar_lea.vmem [#allocation5], %s353
        %s355 = smul.u32 32, %s26
        %p356 = scmp.lt.s32.totalorder %s25, 1
        %s357 = scalar_select %p356, %s25, 1
        %p358 = scmp.lt.s32.totalorder %s355, 31
        %s359 = scalar_select %p358, %s355, 31
        %s360 = smul.addr %s357, 32
        %s361 = sadd.s32 %s359, %s360
        %s362 = smul.addr %s361, 4
        %s363 = scalar_lea.vmem %s0, %s362
        %s364 = smul.u32 32, %s26
        %s365 = smul.u32 32, %s27
        %p366 = scmp.lt.s32.totalorder %s25, 1
        %s367 = scalar_select %p366, %s25, 1
        %p368 = scmp.lt.s32.totalorder %s365, 31
        %s369 = scalar_select %p368, %s365, 31
        %s370 = smul.addr %s367, 32
        %s371 = sadd.s32 %s369, %s370
        %s372 = smul.addr %s371, 4
        %s373 = scalar_lea.vmem %s1, %s372
        %s374 = smul.u32 32, %s27
        %s375 = smul.u32 32, %s27
        %p376 = scmp.lt.s32.totalorder %s25, 1
        %s377 = scalar_select %p376, %s25, 1
        %p378 = scmp.lt.s32.totalorder %s375, 31
        %s379 = scalar_select %p378, %s375, 31
        %s380 = smul.addr %s377, 32
        %s381 = sadd.s32 %s379, %s380
        %s382 = smul.addr %s381, 4
        %s383 = scalar_lea.vmem %s2, %s382
        %s384 = smul.u32 32, %s27
        %s385 = smul.u32 32, %s26
        %p386 = scmp.lt.s32.totalorder %s25, 1
        %s387 = scalar_select %p386, %s25, 1
        %p388 = scmp.lt.s32.totalorder %s385, 31
        %s389 = scalar_select %p388, %s385, 31
        %s390 = smul.addr %s387, 32
        %s391 = sadd.s32 %s389, %s390
        %s392 = smul.addr %s391, 8
        %s393 = scalar_lea.vmem %s3, %s392
        %s394 = smul.u32 32, %s26
        %s395 = smul.u32 32, %s26
        %p396 = scmp.eq.s32.totalorder %s27, 0
        // Predicated region
        $region45: #{attn_block_forward.3} parent=43 // pred_check
          %p397 = pneg %p396
        $region46: #{attn_block_forward.3} parent=43 // pred_check_branch
          %399 = sbr.rel (%p397) target = $region48
        $region47: #{attn_block_forward.3} parent=43 // pred_region
          %vm400 = vcmask 7168
          %401 = vst.msk [vmem:[#allocation2] sm:$0xff] %vm400, -inf
          %402 = vst.msk [vmem:[#allocation2 + $0x8] sm:$0xff] %vm400, -inf
          %403 = vst.msk [vmem:[#allocation2 + $0x10] sm:$0xff] %vm400, -inf
          %404 = vst.msk [vmem:[#allocation2 + $0x18] sm:$0xff] %vm400, -inf
          %405 = vst.msk [vmem:[#allocation2 + $0x20] sm:$0xff] %vm400, -inf
          %406 = vst.msk [vmem:[#allocation2 + $0x28] sm:$0xff] %vm400, -inf
          %407 = vst.msk [vmem:[#allocation2 + $0x30] sm:$0xff] %vm400, -inf
          %408 = vst.msk [vmem:[#allocation2 + $0x38] sm:$0xff] %vm400, -inf
          %409 = vst.msk [vmem:[#allocation2 + $0x40] sm:$0xff] %vm400, -inf
          %410 = vst.msk [vmem:[#allocation2 + $0x48] sm:$0xff] %vm400, -inf
          %411 = vst.msk [vmem:[#allocation2 + $0x50] sm:$0xff] %vm400, -inf
          %412 = vst.msk [vmem:[#allocation2 + $0x58] sm:$0xff] %vm400, -inf
          %413 = vst.msk [vmem:[#allocation2 + $0x60] sm:$0xff] %vm400, -inf
          %414 = vst.msk [vmem:[#allocation2 + $0x68] sm:$0xff] %vm400, -inf
          %415 = vst.msk [vmem:[#allocation2 + $0x70] sm:$0xff] %vm400, -inf
          %416 = vst.msk [vmem:[#allocation2 + $0x78] sm:$0xff] %vm400, -inf
          %417 = vst.msk [vmem:[#allocation2 + $0x80] sm:$0xff] %vm400, -inf
          %418 = vst.msk [vmem:[#allocation2 + $0x88] sm:$0xff] %vm400, -inf
          %419 = vst.msk [vmem:[#allocation2 + $0x90] sm:$0xff] %vm400, -inf
          %420 = vst.msk [vmem:[#allocation2 + $0x98] sm:$0xff] %vm400, -inf
          %421 = vst.msk [vmem:[#allocation2 + $0xa0] sm:$0xff] %vm400, -inf
          %422 = vst.msk [vmem:[#allocation2 + $0xa8] sm:$0xff] %vm400, -inf
          %423 = vst.msk [vmem:[#allocation2 + $0xb0] sm:$0xff] %vm400, -inf
          %424 = vst.msk [vmem:[#allocation2 + $0xb8] sm:$0xff] %vm400, -inf
          %425 = vst.msk [vmem:[#allocation2 + $0xc0] sm:$0xff] %vm400, -inf
          %426 = vst.msk [vmem:[#allocation2 + $0xc8] sm:$0xff] %vm400, -inf
          %427 = vst.msk [vmem:[#allocation2 + $0xd0] sm:$0xff] %vm400, -inf
          %428 = vst.msk [vmem:[#allocation2 + $0xd8] sm:$0xff] %vm400, -inf
          %429 = vst.msk [vmem:[#allocation2 + $0xe0] sm:$0xff] %vm400, -inf
          %430 = vst.msk [vmem:[#allocation2 + $0xe8] sm:$0xff] %vm400, -inf
          %431 = vst.msk [vmem:[#allocation2 + $0xf0] sm:$0xff] %vm400, -inf
          %432 = vst.msk [vmem:[#allocation2 + $0xf8] sm:$0xff] %vm400, -inf
          %433 = vst.msk [vmem:[#allocation3] sm:$0xff] %vm400, 0.0
          %434 = vst.msk [vmem:[#allocation3 + $0x8] sm:$0xff] %vm400, 0.0
          %435 = vst.msk [vmem:[#allocation3 + $0x10] sm:$0xff] %vm400, 0.0
          %436 = vst.msk [vmem:[#allocation3 + $0x18] sm:$0xff] %vm400, 0.0
          %437 = vst.msk [vmem:[#allocation3 + $0x20] sm:$0xff] %vm400, 0.0
          %438 = vst.msk [vmem:[#allocation3 + $0x28] sm:$0xff] %vm400, 0.0
          %439 = vst.msk [vmem:[#allocation3 + $0x30] sm:$0xff] %vm400, 0.0
          %440 = vst.msk [vmem:[#allocation3 + $0x38] sm:$0xff] %vm400, 0.0
          %441 = vst.msk [vmem:[#allocation3 + $0x40] sm:$0xff] %vm400, 0.0
          %442 = vst.msk [vmem:[#allocation3 + $0x48] sm:$0xff] %vm400, 0.0
          %443 = vst.msk [vmem:[#allocation3 + $0x50] sm:$0xff] %vm400, 0.0
          %444 = vst.msk [vmem:[#allocation3 + $0x58] sm:$0xff] %vm400, 0.0
          %445 = vst.msk [vmem:[#allocation3 + $0x60] sm:$0xff] %vm400, 0.0
          %446 = vst.msk [vmem:[#allocation3 + $0x68] sm:$0xff] %vm400, 0.0
          %447 = vst.msk [vmem:[#allocation3 + $0x70] sm:$0xff] %vm400, 0.0
          %448 = vst.msk [vmem:[#allocation3 + $0x78] sm:$0xff] %vm400, 0.0
          %449 = vst.msk [vmem:[#allocation3 + $0x80] sm:$0xff] %vm400, 0.0
          %450 = vst.msk [vmem:[#allocation3 + $0x88] sm:$0xff] %vm400, 0.0
          %451 = vst.msk [vmem:[#allocation3 + $0x90] sm:$0xff] %vm400, 0.0
          %452 = vst.msk [vmem:[#allocation3 + $0x98] sm:$0xff] %vm400, 0.0
          %453 = vst.msk [vmem:[#allocation3 + $0xa0] sm:$0xff] %vm400, 0.0
          %454 = vst.msk [vmem:[#allocation3 + $0xa8] sm:$0xff] %vm400, 0.0
          %455 = vst.msk [vmem:[#allocation3 + $0xb0] sm:$0xff] %vm400, 0.0
          %456 = vst.msk [vmem:[#allocation3 + $0xb8] sm:$0xff] %vm400, 0.0
          %457 = vst.msk [vmem:[#allocation3 + $0xc0] sm:$0xff] %vm400, 0.0
          %458 = vst.msk [vmem:[#allocation3 + $0xc8] sm:$0xff] %vm400, 0.0
          %459 = vst.msk [vmem:[#allocation3 + $0xd0] sm:$0xff] %vm400, 0.0
          %460 = vst.msk [vmem:[#allocation3 + $0xd8] sm:$0xff] %vm400, 0.0
          %461 = vst.msk [vmem:[#allocation3 + $0xe0] sm:$0xff] %vm400, 0.0
          %462 = vst.msk [vmem:[#allocation3 + $0xe8] sm:$0xff] %vm400, 0.0
          %463 = vst.msk [vmem:[#allocation3 + $0xf0] sm:$0xff] %vm400, 0.0
          %464 = vst.msk [vmem:[#allocation3 + $0xf8] sm:$0xff] %vm400, 0.0
          %465 = vst [vmem:[#allocation4] sm:$0xff] 0.0
          %466 = vst [vmem:[#allocation4 + $0x8] sm:$0xff] 0.0
          %467 = vst [vmem:[#allocation4 + $0x10] sm:$0xff] 0.0
          %468 = vst [vmem:[#allocation4 + $0x18] sm:$0xff] 0.0
          %469 = vst [vmem:[#allocation4 + $0x20] sm:$0xff] 0.0
          %470 = vst [vmem:[#allocation4 + $0x28] sm:$0xff] 0.0
          %471 = vst [vmem:[#allocation4 + $0x30] sm:$0xff] 0.0
          %472 = vst [vmem:[#allocation4 + $0x38] sm:$0xff] 0.0
          %473 = vst [vmem:[#allocation4 + $0x40] sm:$0xff] 0.0
          %474 = vst [vmem:[#allocation4 + $0x48] sm:$0xff] 0.0
          %475 = vst [vmem:[#allocation4 + $0x50] sm:$0xff] 0.0
          %476 = vst [vmem:[#allocation4 + $0x58] sm:$0xff] 0.0
          %477 = vst [vmem:[#allocation4 + $0x60] sm:$0xff] 0.0
          %478 = vst [vmem:[#allocation4 + $0x68] sm:$0xff] 0.0
          %479 = vst [vmem:[#allocation4 + $0x70] sm:$0xff] 0.0
          %480 = vst [vmem:[#allocation4 + $0x78] sm:$0xff] 0.0
          %481 = vst [vmem:[#allocation4 + $0x80] sm:$0xff] 0.0
          %482 = vst [vmem:[#allocation4 + $0x88] sm:$0xff] 0.0
          %483 = vst [vmem:[#allocation4 + $0x90] sm:$0xff] 0.0
          %484 = vst [vmem:[#allocation4 + $0x98] sm:$0xff] 0.0
          %485 = vst [vmem:[#allocation4 + $0xa0] sm:$0xff] 0.0
          %486 = vst [vmem:[#allocation4 + $0xa8] sm:$0xff] 0.0
          %487 = vst [vmem:[#allocation4 + $0xb0] sm:$0xff] 0.0
          %488 = vst [vmem:[#allocation4 + $0xb8] sm:$0xff] 0.0
          %489 = vst [vmem:[#allocation4 + $0xc0] sm:$0xff] 0.0
          %490 = vst [vmem:[#allocation4 + $0xc8] sm:$0xff] 0.0
          %491 = vst [vmem:[#allocation4 + $0xd0] sm:$0xff] 0.0
          %492 = vst [vmem:[#allocation4 + $0xd8] sm:$0xff] 0.0
          %493 = vst [vmem:[#allocation4 + $0xe0] sm:$0xff] 0.0
          %494 = vst [vmem:[#allocation4 + $0xe8] sm:$0xff] 0.0
          %495 = vst [vmem:[#allocation4 + $0xf0] sm:$0xff] 0.0
          %496 = vst [vmem:[#allocation4 + $0xf8] sm:$0xff] 0.0
        $region48: #{attn_block_forward.3} parent=43 // pred_fallthru
          _
        %v497 = vld [vmem:[%s363] sm:$0xf]
        %v498 = vld [vmem:[%s363 + $0x4] sm:$0xf]
        %v499 = vld [vmem:[%s363 + $0x8] sm:$0xf]
        %v500 = vld [vmem:[%s363 + $0xc] sm:$0xf]
        %v501 = vld [vmem:[%s363 + $0x10] sm:$0xf]
        %v502 = vld [vmem:[%s363 + $0x14] sm:$0xf]
        %v503 = vld [vmem:[%s363 + $0x18] sm:$0xf]
        %v504 = vld [vmem:[%s363 + $0x1c] sm:$0xf]
        %v505 = vld [vmem:[%s363 + $0x20] sm:$0xf]
        %v506 = vld [vmem:[%s363 + $0x24] sm:$0xf]
        %v507 = vld [vmem:[%s363 + $0x28] sm:$0xf]
        %v508 = vld [vmem:[%s363 + $0x2c] sm:$0xf]
        %v509 = vld [vmem:[%s363 + $0x30] sm:$0xf]
        %v510 = vld [vmem:[%s363 + $0x34] sm:$0xf]
        %v511 = vld [vmem:[%s363 + $0x38] sm:$0xf]
        %v512 = vld [vmem:[%s363 + $0x3c] sm:$0xf]
        %v513 = vld [vmem:[%s363 + $0x40] sm:$0xf]
        %v514 = vld [vmem:[%s363 + $0x44] sm:$0xf]
        %v515 = vld [vmem:[%s363 + $0x48] sm:$0xf]
        %v516 = vld [vmem:[%s363 + $0x4c] sm:$0xf]
        %v517 = vld [vmem:[%s363 + $0x50] sm:$0xf]
        %v518 = vld [vmem:[%s363 + $0x54] sm:$0xf]
        %v519 = vld [vmem:[%s363 + $0x58] sm:$0xf]
        %v520 = vld [vmem:[%s363 + $0x5c] sm:$0xf]
        %v521 = vld [vmem:[%s363 + $0x60] sm:$0xf]
        %v522 = vld [vmem:[%s363 + $0x64] sm:$0xf]
        %v523 = vld [vmem:[%s363 + $0x68] sm:$0xf]
        %v524 = vld [vmem:[%s363 + $0x6c] sm:$0xf]
        %v525 = vld [vmem:[%s363 + $0x70] sm:$0xf]
        %v526 = vld [vmem:[%s363 + $0x74] sm:$0xf]
        %v527 = vld [vmem:[%s363 + $0x78] sm:$0xf]
        %v528 = vld [vmem:[%s363 + $0x7c] sm:$0xf]
        %v529 = vld [vmem:[%s373] sm:$0xf]
        %v530 = vld [vmem:[%s373 + $0x4] sm:$0xf]
        %v531 = vld [vmem:[%s373 + $0x8] sm:$0xf]
        %v532 = vld [vmem:[%s373 + $0xc] sm:$0xf]
        %v533 = vld [vmem:[%s373 + $0x10] sm:$0xf]
        %v534 = vld [vmem:[%s373 + $0x14] sm:$0xf]
        %v535 = vld [vmem:[%s373 + $0x18] sm:$0xf]
        %v536 = vld [vmem:[%s373 + $0x1c] sm:$0xf]
        %v537 = vld [vmem:[%s373 + $0x20] sm:$0xf]
        %v538 = vld [vmem:[%s373 + $0x24] sm:$0xf]
        %v539 = vld [vmem:[%s373 + $0x28] sm:$0xf]
        %v540 = vld [vmem:[%s373 + $0x2c] sm:$0xf]
        %v541 = vld [vmem:[%s373 + $0x30] sm:$0xf]
        %v542 = vld [vmem:[%s373 + $0x34] sm:$0xf]
        %v543 = vld [vmem:[%s373 + $0x38] sm:$0xf]
        %v544 = vld [vmem:[%s373 + $0x3c] sm:$0xf]
        %v545 = vld [vmem:[%s373 + $0x40] sm:$0xf]
        %v546 = vld [vmem:[%s373 + $0x44] sm:$0xf]
        %v547 = vld [vmem:[%s373 + $0x48] sm:$0xf]
        %v548 = vld [vmem:[%s373 + $0x4c] sm:$0xf]
        %v549 = vld [vmem:[%s373 + $0x50] sm:$0xf]
        %v550 = vld [vmem:[%s373 + $0x54] sm:$0xf]
        %v551 = vld [vmem:[%s373 + $0x58] sm:$0xf]
        %v552 = vld [vmem:[%s373 + $0x5c] sm:$0xf]
        %v553 = vld [vmem:[%s373 + $0x60] sm:$0xf]
        %v554 = vld [vmem:[%s373 + $0x64] sm:$0xf]
        %v555 = vld [vmem:[%s373 + $0x68] sm:$0xf]
        %v556 = vld [vmem:[%s373 + $0x6c] sm:$0xf]
        %v557 = vld [vmem:[%s373 + $0x70] sm:$0xf]
        %v558 = vld [vmem:[%s373 + $0x74] sm:$0xf]
        %v559 = vld [vmem:[%s373 + $0x78] sm:$0xf]
        %v560 = vld [vmem:[%s373 + $0x7c] sm:$0xf]
        %v561 = vld [vmem:[%s383] sm:$0xf]
        %v562 = vld [vmem:[%s383 + $0x4] sm:$0xf]
        %v563 = vld [vmem:[%s383 + $0x8] sm:$0xf]
        %v564 = vld [vmem:[%s383 + $0xc] sm:$0xf]
        %v565 = vld [vmem:[%s383 + $0x10] sm:$0xf]
        %v566 = vld [vmem:[%s383 + $0x14] sm:$0xf]
        %v567 = vld [vmem:[%s383 + $0x18] sm:$0xf]
        %v568 = vld [vmem:[%s383 + $0x1c] sm:$0xf]
        %v569 = vld [vmem:[%s383 + $0x20] sm:$0xf]
        %v570 = vld [vmem:[%s383 + $0x24] sm:$0xf]
        %v571 = vld [vmem:[%s383 + $0x28] sm:$0xf]
        %v572 = vld [vmem:[%s383 + $0x2c] sm:$0xf]
        %v573 = vld [vmem:[%s383 + $0x30] sm:$0xf]
        %v574 = vld [vmem:[%s383 + $0x34] sm:$0xf]
        %v575 = vld [vmem:[%s383 + $0x38] sm:$0xf]
        %v576 = vld [vmem:[%s383 + $0x3c] sm:$0xf]
        %v577 = vld [vmem:[%s383 + $0x40] sm:$0xf]
        %v578 = vld [vmem:[%s383 + $0x44] sm:$0xf]
        %v579 = vld [vmem:[%s383 + $0x48] sm:$0xf]
        %v580 = vld [vmem:[%s383 + $0x4c] sm:$0xf]
        %v581 = vld [vmem:[%s383 + $0x50] sm:$0xf]
        %v582 = vld [vmem:[%s383 + $0x54] sm:$0xf]
        %v583 = vld [vmem:[%s383 + $0x58] sm:$0xf]
        %v584 = vld [vmem:[%s383 + $0x5c] sm:$0xf]
        %v585 = vld [vmem:[%s383 + $0x60] sm:$0xf]
        %v586 = vld [vmem:[%s383 + $0x64] sm:$0xf]
        %v587 = vld [vmem:[%s383 + $0x68] sm:$0xf]
        %v588 = vld [vmem:[%s383 + $0x6c] sm:$0xf]
        %v589 = vld [vmem:[%s383 + $0x70] sm:$0xf]
        %v590 = vld [vmem:[%s383 + $0x74] sm:$0xf]
        %v591 = vld [vmem:[%s383 + $0x78] sm:$0xf]
        %v592 = vld [vmem:[%s383 + $0x7c] sm:$0xf]
        %v625 = vunpack.c.l.b16 %v497
        %v626 = vunpack.c.l.b16 %v498
        %v627 = vunpack.c.l.b16 %v499
        %v628 = vunpack.c.l.b16 %v500
        %v629 = vunpack.c.l.b16 %v501
        %v630 = vunpack.c.l.b16 %v502
        %v631 = vunpack.c.l.b16 %v503
        %v632 = vunpack.c.l.b16 %v504
        %v633 = vunpack.c.l.b16 %v505
        %v634 = vunpack.c.l.b16 %v506
        %v635 = vunpack.c.l.b16 %v507
        %v636 = vunpack.c.l.b16 %v508
        %v637 = vunpack.c.l.b16 %v509
        %v638 = vunpack.c.l.b16 %v510
        %v639 = vunpack.c.l.b16 %v511
        %v640 = vunpack.c.l.b16 %v512
        %v641 = vunpack.c.l.b16 %v513
        %v642 = vunpack.c.l.b16 %v514
        %v643 = vunpack.c.l.b16 %v515
        %v644 = vunpack.c.l.b16 %v516
        %v645 = vunpack.c.l.b16 %v517
        %v646 = vunpack.c.l.b16 %v518
        %v647 = vunpack.c.l.b16 %v519
        %v648 = vunpack.c.l.b16 %v520
        %v649 = vunpack.c.l.b16 %v521
        %v650 = vunpack.c.l.b16 %v522
        %v651 = vunpack.c.l.b16 %v523
        %v652 = vunpack.c.l.b16 %v524
        %v653 = vunpack.c.l.b16 %v525
        %v654 = vunpack.c.l.b16 %v526
        %v655 = vunpack.c.l.b16 %v527
        %v656 = vunpack.c.l.b16 %v528
        %v657 = vpack.c.b16 %v626, %v625
        %v658 = vpack.c.b16 %v628, %v627
        %v659 = vpack.c.b16 %v630, %v629
        %v660 = vpack.c.b16 %v632, %v631
        %v661 = vpack.c.b16 %v634, %v633
        %v662 = vpack.c.b16 %v636, %v635
        %v663 = vpack.c.b16 %v638, %v637
        %v664 = vpack.c.b16 %v640, %v639
        %v665 = vpack.c.b16 %v642, %v641
        %v666 = vpack.c.b16 %v644, %v643
        %v667 = vpack.c.b16 %v646, %v645
        %v668 = vpack.c.b16 %v648, %v647
        %v669 = vpack.c.b16 %v650, %v649
        %v670 = vpack.c.b16 %v652, %v651
        %v671 = vpack.c.b16 %v654, %v653
        %v672 = vpack.c.b16 %v656, %v655
        %v721 = vunpack.c.l.b16 %v529
        %v722 = vunpack.c.l.b16 %v530
        %v723 = vunpack.c.l.b16 %v531
        %v724 = vunpack.c.l.b16 %v532
        %v725 = vunpack.c.l.b16 %v533
        %v726 = vunpack.c.l.b16 %v534
        %v727 = vunpack.c.l.b16 %v535
        %v728 = vunpack.c.l.b16 %v536
        %v729 = vunpack.c.l.b16 %v537
        %v730 = vunpack.c.l.b16 %v538
        %v731 = vunpack.c.l.b16 %v539
        %v732 = vunpack.c.l.b16 %v540
        %v733 = vunpack.c.l.b16 %v541
        %v734 = vunpack.c.l.b16 %v542
        %v735 = vunpack.c.l.b16 %v543
        %v736 = vunpack.c.l.b16 %v544
        %v737 = vunpack.c.l.b16 %v545
        %v738 = vunpack.c.l.b16 %v546
        %v739 = vunpack.c.l.b16 %v547
        %v740 = vunpack.c.l.b16 %v548
        %v741 = vunpack.c.l.b16 %v549
        %v742 = vunpack.c.l.b16 %v550
        %v743 = vunpack.c.l.b16 %v551
        %v744 = vunpack.c.l.b16 %v552
        %v745 = vunpack.c.l.b16 %v553
        %v746 = vunpack.c.l.b16 %v554
        %v747 = vunpack.c.l.b16 %v555
        %v748 = vunpack.c.l.b16 %v556
        %v749 = vunpack.c.l.b16 %v557
        %v750 = vunpack.c.l.b16 %v558
        %v751 = vunpack.c.l.b16 %v559
        %v752 = vunpack.c.l.b16 %v560
        %v753 = vpack.c.b16 %v722, %v721
        %v754 = vpack.c.b16 %v724, %v723
        %v755 = vpack.c.b16 %v726, %v725
        %v756 = vpack.c.b16 %v728, %v727
        %v757 = vpack.c.b16 %v730, %v729
        %v758 = vpack.c.b16 %v732, %v731
        %v759 = vpack.c.b16 %v734, %v733
        %v760 = vpack.c.b16 %v736, %v735
        %v761 = vpack.c.b16 %v738, %v737
        %v762 = vpack.c.b16 %v740, %v739
        %v763 = vpack.c.b16 %v742, %v741
        %v764 = vpack.c.b16 %v744, %v743
        %v765 = vpack.c.b16 %v746, %v745
        %v766 = vpack.c.b16 %v748, %v747
        %v767 = vpack.c.b16 %v750, %v749
        %v768 = vpack.c.b16 %v752, %v751
        %785 = vmatpush.bf16.xpose.msra.mxu0 %v760
        %786 = vmatpush.bf16.xpose.msra.mxu0 %v759
        %787 = vmatpush.bf16.xpose.msra.mxu0 %v758
        %788 = vmatpush.bf16.xpose.msra.mxu0 %v757
        %789 = vmatpush.bf16.xpose.msra.mxu0 %v756
        %790 = vmatpush.bf16.xpose.msra.mxu0 %v755
        %791 = vmatpush.bf16.xpose.msra.mxu0 %v754
        %792 = vmatpush.bf16.xpose.msra.mxu0 %v753
        %793 = vmatmul.bf16.gmra.mxu0 %v657
        %v794 = vpop.f32.mrf.mxu0
        %v795 = vadd.f32 0.0, %v794
        %v796 = vpop.f32.mrf.mxu0
        %v797 = vadd.f32 0.0, %v796
        %798 = vmatmul.bf16.gmra.mxu0 %v658
        %v799 = vpop.f32.mrf.mxu0
        %v800 = vadd.f32 0.0, %v799
        %v801 = vpop.f32.mrf.mxu0
        %v802 = vadd.f32 0.0, %v801
        %803 = vmatmul.bf16.gmra.mxu0 %v659
        %v804 = vpop.f32.mrf.mxu0
        %v805 = vadd.f32 0.0, %v804
        %v806 = vpop.f32.mrf.mxu0
        %v807 = vadd.f32 0.0, %v806
        %808 = vmatmul.bf16.gmra.mxu0 %v660
        %v809 = vpop.f32.mrf.mxu0
        %v810 = vadd.f32 0.0, %v809
        %v811 = vpop.f32.mrf.mxu0
        %v812 = vadd.f32 0.0, %v811
        %813 = vmatmul.bf16.gmra.mxu0 %v661
        %v814 = vpop.f32.mrf.mxu0
        %v815 = vadd.f32 0.0, %v814
        %v816 = vpop.f32.mrf.mxu0
        %v817 = vadd.f32 0.0, %v816
        %818 = vmatmul.bf16.gmra.mxu0 %v662
        %v819 = vpop.f32.mrf.mxu0
        %v820 = vadd.f32 0.0, %v819
        %v821 = vpop.f32.mrf.mxu0
        %v822 = vadd.f32 0.0, %v821
        %823 = vmatmul.bf16.gmra.mxu0 %v663
        %v824 = vpop.f32.mrf.mxu0
        %v825 = vadd.f32 0.0, %v824
        %v826 = vpop.f32.mrf.mxu0
        %v827 = vadd.f32 0.0, %v826
        %828 = vmatmul.bf16.gmra.mxu0 %v664
        %v829 = vpop.f32.mrf.mxu0
        %v830 = vadd.f32 0.0, %v829
        %v831 = vpop.f32.mrf.mxu0
        %v832 = vadd.f32 0.0, %v831
        %833 = vmatmul.bf16.gmra.mxu0 %v665
        %v834 = vpop.f32.mrf.mxu0
        %v835 = vadd.f32 0.0, %v834
        %v836 = vpop.f32.mrf.mxu0
        %v837 = vadd.f32 0.0, %v836
        %838 = vmatmul.bf16.gmra.mxu0 %v666
        %v839 = vpop.f32.mrf.mxu0
        %v840 = vadd.f32 0.0, %v839
        %v841 = vpop.f32.mrf.mxu0
        %v842 = vadd.f32 0.0, %v841
        %843 = vmatmul.bf16.gmra.mxu0 %v667
        %v844 = vpop.f32.mrf.mxu0
        %v845 = vadd.f32 0.0, %v844
        %v846 = vpop.f32.mrf.mxu0
        %v847 = vadd.f32 0.0, %v846
        %848 = vmatmul.bf16.gmra.mxu0 %v668
        %v849 = vpop.f32.mrf.mxu0
        %v850 = vadd.f32 0.0, %v849
        %v851 = vpop.f32.mrf.mxu0
        %v852 = vadd.f32 0.0, %v851
        %853 = vmatmul.bf16.gmra.mxu0 %v669
        %v854 = vpop.f32.mrf.mxu0
        %v855 = vadd.f32 0.0, %v854
        %v856 = vpop.f32.mrf.mxu0
        %v857 = vadd.f32 0.0, %v856
        %858 = vmatmul.bf16.gmra.mxu0 %v670
        %v859 = vpop.f32.mrf.mxu0
        %v860 = vadd.f32 0.0, %v859
        %v861 = vpop.f32.mrf.mxu0
        %v862 = vadd.f32 0.0, %v861
        %863 = vmatmul.bf16.gmra.mxu0 %v671
        %v864 = vpop.f32.mrf.mxu0
        %v865 = vadd.f32 0.0, %v864
        %v866 = vpop.f32.mrf.mxu0
        %v867 = vadd.f32 0.0, %v866
        %868 = vmatmul.bf16.gmra.mxu0 %v672
        %v869 = vpop.f32.mrf.mxu0
        %v870 = vadd.f32 0.0, %v869
        %v871 = vpop.f32.mrf.mxu0
        %v872 = vadd.f32 0.0, %v871
        %873 = vdwg.mxu0
        %874 = vmatpush.bf16.xpose.msra.mxu0 %v768
        %875 = vmatpush.bf16.xpose.msra.mxu0 %v767
        %876 = vmatpush.bf16.xpose.msra.mxu0 %v766
        %877 = vmatpush.bf16.xpose.msra.mxu0 %v765
        %878 = vmatpush.bf16.xpose.msra.mxu0 %v764
        %879 = vmatpush.bf16.xpose.msra.mxu0 %v763
        %880 = vmatpush.bf16.xpose.msra.mxu0 %v762
        %881 = vmatpush.bf16.xpose.msra.mxu0 %v761
        %882 = vmatmul.bf16.gmra.mxu0 %v657
        %v883 = vpop.f32.mrf.mxu0
        %v884 = vadd.f32 0.0, %v883
        %v885 = vpop.f32.mrf.mxu0
        %v886 = vadd.f32 0.0, %v885
        %887 = vmatmul.bf16.gmra.mxu0 %v658
        %v888 = vpop.f32.mrf.mxu0
        %v889 = vadd.f32 0.0, %v888
        %v890 = vpop.f32.mrf.mxu0
        %v891 = vadd.f32 0.0, %v890
        %892 = vmatmul.bf16.gmra.mxu0 %v659
        %v893 = vpop.f32.mrf.mxu0
        %v894 = vadd.f32 0.0, %v893
        %v895 = vpop.f32.mrf.mxu0
        %v896 = vadd.f32 0.0, %v895
        %897 = vmatmul.bf16.gmra.mxu0 %v660
        %v898 = vpop.f32.mrf.mxu0
        %v899 = vadd.f32 0.0, %v898
        %v900 = vpop.f32.mrf.mxu0
        %v901 = vadd.f32 0.0, %v900
        %902 = vmatmul.bf16.gmra.mxu0 %v661
        %v903 = vpop.f32.mrf.mxu0
        %v904 = vadd.f32 0.0, %v903
        %v905 = vpop.f32.mrf.mxu0
        %v906 = vadd.f32 0.0, %v905
        %907 = vmatmul.bf16.gmra.mxu0 %v662
        %v908 = vpop.f32.mrf.mxu0
        %v909 = vadd.f32 0.0, %v908
        %v910 = vpop.f32.mrf.mxu0
        %v911 = vadd.f32 0.0, %v910
        %912 = vmatmul.bf16.gmra.mxu0 %v663
        %v913 = vpop.f32.mrf.mxu0
        %v914 = vadd.f32 0.0, %v913
        %v915 = vpop.f32.mrf.mxu0
        %v916 = vadd.f32 0.0, %v915
        %917 = vmatmul.bf16.gmra.mxu0 %v664
        %v918 = vpop.f32.mrf.mxu0
        %v919 = vadd.f32 0.0, %v918
        %v920 = vpop.f32.mrf.mxu0
        %v921 = vadd.f32 0.0, %v920
        %922 = vmatmul.bf16.gmra.mxu0 %v665
        %v923 = vpop.f32.mrf.mxu0
        %v924 = vadd.f32 0.0, %v923
        %v925 = vpop.f32.mrf.mxu0
        %v926 = vadd.f32 0.0, %v925
        %927 = vmatmul.bf16.gmra.mxu0 %v666
        %v928 = vpop.f32.mrf.mxu0
        %v929 = vadd.f32 0.0, %v928
        %v930 = vpop.f32.mrf.mxu0
        %v931 = vadd.f32 0.0, %v930
        %932 = vmatmul.bf16.gmra.mxu0 %v667
        %v933 = vpop.f32.mrf.mxu0
        %v934 = vadd.f32 0.0, %v933
        %v935 = vpop.f32.mrf.mxu0
        %v936 = vadd.f32 0.0, %v935
        %937 = vmatmul.bf16.gmra.mxu0 %v668
        %v938 = vpop.f32.mrf.mxu0
        %v939 = vadd.f32 0.0, %v938
        %v940 = vpop.f32.mrf.mxu0
        %v941 = vadd.f32 0.0, %v940
        %942 = vmatmul.bf16.gmra.mxu0 %v669
        %v943 = vpop.f32.mrf.mxu0
        %v944 = vadd.f32 0.0, %v943
        %v945 = vpop.f32.mrf.mxu0
        %v946 = vadd.f32 0.0, %v945
        %947 = vmatmul.bf16.gmra.mxu0 %v670
        %v948 = vpop.f32.mrf.mxu0
        %v949 = vadd.f32 0.0, %v948
        %v950 = vpop.f32.mrf.mxu0
        %v951 = vadd.f32 0.0, %v950
        %952 = vmatmul.bf16.gmra.mxu0 %v671
        %v953 = vpop.f32.mrf.mxu0
        %v954 = vadd.f32 0.0, %v953
        %v955 = vpop.f32.mrf.mxu0
        %v956 = vadd.f32 0.0, %v955
        %957 = vmatmul.bf16.gmra.mxu0 %v672
        %v958 = vpop.f32.mrf.mxu0
        %v959 = vadd.f32 0.0, %v958
        %v960 = vpop.f32.mrf.mxu0
        %v961 = vadd.f32 0.0, %v960
        %962 = vdwg.mxu0
        %v963 = vmul.f32 %v795, 0.125
        %v964 = vmul.f32 %v884, 0.125
        %v965 = vmul.f32 %v797, 0.125
        %v966 = vmul.f32 %v886, 0.125
        %v967 = vmul.f32 %v800, 0.125
        %v968 = vmul.f32 %v889, 0.125
        %v969 = vmul.f32 %v802, 0.125
        %v970 = vmul.f32 %v891, 0.125
        %v971 = vmul.f32 %v805, 0.125
        %v972 = vmul.f32 %v894, 0.125
        %v973 = vmul.f32 %v807, 0.125
        %v974 = vmul.f32 %v896, 0.125
        %v975 = vmul.f32 %v810, 0.125
        %v976 = vmul.f32 %v899, 0.125
        %v977 = vmul.f32 %v812, 0.125
        %v978 = vmul.f32 %v901, 0.125
        %v979 = vmul.f32 %v815, 0.125
        %v980 = vmul.f32 %v904, 0.125
        %v981 = vmul.f32 %v817, 0.125
        %v982 = vmul.f32 %v906, 0.125
        %v983 = vmul.f32 %v820, 0.125
        %v984 = vmul.f32 %v909, 0.125
        %v985 = vmul.f32 %v822, 0.125
        %v986 = vmul.f32 %v911, 0.125
        %v987 = vmul.f32 %v825, 0.125
        %v988 = vmul.f32 %v914, 0.125
        %v989 = vmul.f32 %v827, 0.125
        %v990 = vmul.f32 %v916, 0.125
        %v991 = vmul.f32 %v830, 0.125
        %v992 = vmul.f32 %v919, 0.125
        %v993 = vmul.f32 %v832, 0.125
        %v994 = vmul.f32 %v921, 0.125
        %v995 = vmul.f32 %v835, 0.125
        %v996 = vmul.f32 %v924, 0.125
        %v997 = vmul.f32 %v837, 0.125
        %v998 = vmul.f32 %v926, 0.125
        %v999 = vmul.f32 %v840, 0.125
        %v1000 = vmul.f32 %v929, 0.125
        %v1001 = vmul.f32 %v842, 0.125
        %v1002 = vmul.f32 %v931, 0.125
        %v1003 = vmul.f32 %v845, 0.125
        %v1004 = vmul.f32 %v934, 0.125
        %v1005 = vmul.f32 %v847, 0.125
        %v1006 = vmul.f32 %v936, 0.125
        %v1007 = vmul.f32 %v850, 0.125
        %v1008 = vmul.f32 %v939, 0.125
        %v1009 = vmul.f32 %v852, 0.125
        %v1010 = vmul.f32 %v941, 0.125
        %v1011 = vmul.f32 %v855, 0.125
        %v1012 = vmul.f32 %v944, 0.125
        %v1013 = vmul.f32 %v857, 0.125
        %v1014 = vmul.f32 %v946, 0.125
        %v1015 = vmul.f32 %v860, 0.125
        %v1016 = vmul.f32 %v949, 0.125
        %v1017 = vmul.f32 %v862, 0.125
        %v1018 = vmul.f32 %v951, 0.125
        %v1019 = vmul.f32 %v865, 0.125
        %v1020 = vmul.f32 %v954, 0.125
        %v1021 = vmul.f32 %v867, 0.125
        %v1022 = vmul.f32 %v956, 0.125
        %v1023 = vmul.f32 %v870, 0.125
        %v1024 = vmul.f32 %v959, 0.125
        %v1025 = vmul.f32 %v872, 0.125
        %v1026 = vmul.f32 %v961, 0.125
        %v1027 = vld [vmem:[#allocation2] sm:$0xff]
        %v1028 = vld [vmem:[#allocation2 + $0x8] sm:$0xff]
        %v1029 = vld [vmem:[#allocation2 + $0x10] sm:$0xff]
        %v1030 = vld [vmem:[#allocation2 + $0x18] sm:$0xff]
        %v1031 = vld [vmem:[#allocation2 + $0x20] sm:$0xff]
        %v1032 = vld [vmem:[#allocation2 + $0x28] sm:$0xff]
        %v1033 = vld [vmem:[#allocation2 + $0x30] sm:$0xff]
        %v1034 = vld [vmem:[#allocation2 + $0x38] sm:$0xff]
        %v1035 = vld [vmem:[#allocation2 + $0x40] sm:$0xff]
        %v1036 = vld [vmem:[#allocation2 + $0x48] sm:$0xff]
        %v1037 = vld [vmem:[#allocation2 + $0x50] sm:$0xff]
        %v1038 = vld [vmem:[#allocation2 + $0x58] sm:$0xff]
        %v1039 = vld [vmem:[#allocation2 + $0x60] sm:$0xff]
        %v1040 = vld [vmem:[#allocation2 + $0x68] sm:$0xff]
        %v1041 = vld [vmem:[#allocation2 + $0x70] sm:$0xff]
        %v1042 = vld [vmem:[#allocation2 + $0x78] sm:$0xff]
        %v1043 = vld [vmem:[#allocation2 + $0x80] sm:$0xff]
        %v1044 = vld [vmem:[#allocation2 + $0x88] sm:$0xff]
        %v1045 = vld [vmem:[#allocation2 + $0x90] sm:$0xff]
        %v1046 = vld [vmem:[#allocation2 + $0x98] sm:$0xff]
        %v1047 = vld [vmem:[#allocation2 + $0xa0] sm:$0xff]
        %v1048 = vld [vmem:[#allocation2 + $0xa8] sm:$0xff]
        %v1049 = vld [vmem:[#allocation2 + $0xb0] sm:$0xff]
        %v1050 = vld [vmem:[#allocation2 + $0xb8] sm:$0xff]
        %v1051 = vld [vmem:[#allocation2 + $0xc0] sm:$0xff]
        %v1052 = vld [vmem:[#allocation2 + $0xc8] sm:$0xff]
        %v1053 = vld [vmem:[#allocation2 + $0xd0] sm:$0xff]
        %v1054 = vld [vmem:[#allocation2 + $0xd8] sm:$0xff]
        %v1055 = vld [vmem:[#allocation2 + $0xe0] sm:$0xff]
        %v1056 = vld [vmem:[#allocation2 + $0xe8] sm:$0xff]
        %v1057 = vld [vmem:[#allocation2 + $0xf0] sm:$0xff]
        %v1058 = vld [vmem:[#allocation2 + $0xf8] sm:$0xff]
        %v1059 = vmax.f32 %v963, %v964
        %1060 = vmax.xlane.f32.xlu0 %v1059
        %v1061 = vpop.xlane.xlu0 %1060
        %v1062 = vmax.f32 %v965, %v966
        %1063 = vmax.xlane.f32.xlu0 %v1062
        %v1064 = vpop.xlane.xlu0 %1063
        %v1065 = vmax.f32 %v967, %v968
        %1066 = vmax.xlane.f32.xlu0 %v1065
        %v1067 = vpop.xlane.xlu0 %1066
        %v1068 = vmax.f32 %v969, %v970
        %1069 = vmax.xlane.f32.xlu0 %v1068
        %v1070 = vpop.xlane.xlu0 %1069
        %v1071 = vmax.f32 %v971, %v972
        %1072 = vmax.xlane.f32.xlu0 %v1071
        %v1073 = vpop.xlane.xlu0 %1072
        %v1074 = vmax.f32 %v973, %v974
        %1075 = vmax.xlane.f32.xlu0 %v1074
        %v1076 = vpop.xlane.xlu0 %1075
        %v1077 = vmax.f32 %v975, %v976
        %1078 = vmax.xlane.f32.xlu0 %v1077
        %v1079 = vpop.xlane.xlu0 %1078
        %v1080 = vmax.f32 %v977, %v978
        %1081 = vmax.xlane.f32.xlu0 %v1080
        %v1082 = vpop.xlane.xlu0 %1081
        %v1083 = vmax.f32 %v979, %v980
        %1084 = vmax.xlane.f32.xlu0 %v1083
        %v1085 = vpop.xlane.xlu0 %1084
        %v1086 = vmax.f32 %v981, %v982
        %1087 = vmax.xlane.f32.xlu0 %v1086
        %v1088 = vpop.xlane.xlu0 %1087
        %v1089 = vmax.f32 %v983, %v984
        %1090 = vmax.xlane.f32.xlu0 %v1089
        %v1091 = vpop.xlane.xlu0 %1090
        %v1092 = vmax.f32 %v985, %v986
        %1093 = vmax.xlane.f32.xlu0 %v1092
        %v1094 = vpop.xlane.xlu0 %1093
        %v1095 = vmax.f32 %v987, %v988
        %1096 = vmax.xlane.f32.xlu0 %v1095
        %v1097 = vpop.xlane.xlu0 %1096
        %v1098 = vmax.f32 %v989, %v990
        %1099 = vmax.xlane.f32.xlu0 %v1098
        %v1100 = vpop.xlane.xlu0 %1099
        %v1101 = vmax.f32 %v991, %v992
        %1102 = vmax.xlane.f32.xlu0 %v1101
        %v1103 = vpop.xlane.xlu0 %1102
        %v1104 = vmax.f32 %v993, %v994
        %1105 = vmax.xlane.f32.xlu0 %v1104
        %v1106 = vpop.xlane.xlu0 %1105
        %v1107 = vmax.f32 %v995, %v996
        %1108 = vmax.xlane.f32.xlu0 %v1107
        %v1109 = vpop.xlane.xlu0 %1108
        %v1110 = vmax.f32 %v997, %v998
        %1111 = vmax.xlane.f32.xlu0 %v1110
        %v1112 = vpop.xlane.xlu0 %1111
        %v1113 = vmax.f32 %v999, %v1000
        %1114 = vmax.xlane.f32.xlu0 %v1113
        %v1115 = vpop.xlane.xlu0 %1114
        %v1116 = vmax.f32 %v1001, %v1002
        %1117 = vmax.xlane.f32.xlu0 %v1116
        %v1118 = vpop.xlane.xlu0 %1117
        %v1119 = vmax.f32 %v1003, %v1004
        %1120 = vmax.xlane.f32.xlu0 %v1119
        %v1121 = vpop.xlane.xlu0 %1120
        %v1122 = vmax.f32 %v1005, %v1006
        %1123 = vmax.xlane.f32.xlu0 %v1122
        %v1124 = vpop.xlane.xlu0 %1123
        %v1125 = vmax.f32 %v1007, %v1008
        %1126 = vmax.xlane.f32.xlu0 %v1125
        %v1127 = vpop.xlane.xlu0 %1126
        %v1128 = vmax.f32 %v1009, %v1010
        %1129 = vmax.xlane.f32.xlu0 %v1128
        %v1130 = vpop.xlane.xlu0 %1129
        %v1131 = vmax.f32 %v1011, %v1012
        %1132 = vmax.xlane.f32.xlu0 %v1131
        %v1133 = vpop.xlane.xlu0 %1132
        %v1134 = vmax.f32 %v1013, %v1014
        %1135 = vmax.xlane.f32.xlu0 %v1134
        %v1136 = vpop.xlane.xlu0 %1135
        %v1137 = vmax.f32 %v1015, %v1016
        %1138 = vmax.xlane.f32.xlu0 %v1137
        %v1139 = vpop.xlane.xlu0 %1138
        %v1140 = vmax.f32 %v1017, %v1018
        %1141 = vmax.xlane.f32.xlu0 %v1140
        %v1142 = vpop.xlane.xlu0 %1141
        %v1143 = vmax.f32 %v1019, %v1020
        %1144 = vmax.xlane.f32.xlu0 %v1143
        %v1145 = vpop.xlane.xlu0 %1144
        %v1146 = vmax.f32 %v1021, %v1022
        %1147 = vmax.xlane.f32.xlu0 %v1146
        %v1148 = vpop.xlane.xlu0 %1147
        %v1149 = vmax.f32 %v1023, %v1024
        %1150 = vmax.xlane.f32.xlu0 %v1149
        %v1151 = vpop.xlane.xlu0 %1150
        %v1152 = vmax.f32 %v1025, %v1026
        %1153 = vmax.xlane.f32.xlu0 %v1152
        %v1154 = vpop.xlane.xlu0 %1153
        %v1155 = vmax.f32 %v1027, %v1061
        %v1156 = vmax.f32 %v1028, %v1064
        %v1157 = vmax.f32 %v1029, %v1067
        %v1158 = vmax.f32 %v1030, %v1070
        %v1159 = vmax.f32 %v1031, %v1073
        %v1160 = vmax.f32 %v1032, %v1076
        %v1161 = vmax.f32 %v1033, %v1079
        %v1162 = vmax.f32 %v1034, %v1082
        %v1163 = vmax.f32 %v1035, %v1085
        %v1164 = vmax.f32 %v1036, %v1088
        %v1165 = vmax.f32 %v1037, %v1091
        %v1166 = vmax.f32 %v1038, %v1094
        %v1167 = vmax.f32 %v1039, %v1097
        %v1168 = vmax.f32 %v1040, %v1100
        %v1169 = vmax.f32 %v1041, %v1103
        %v1170 = vmax.f32 %v1042, %v1106
        %v1171 = vmax.f32 %v1043, %v1109
        %v1172 = vmax.f32 %v1044, %v1112
        %v1173 = vmax.f32 %v1045, %v1115
        %v1174 = vmax.f32 %v1046, %v1118
        %v1175 = vmax.f32 %v1047, %v1121
        %v1176 = vmax.f32 %v1048, %v1124
        %v1177 = vmax.f32 %v1049, %v1127
        %v1178 = vmax.f32 %v1050, %v1130
        %v1179 = vmax.f32 %v1051, %v1133
        %v1180 = vmax.f32 %v1052, %v1136
        %v1181 = vmax.f32 %v1053, %v1139
        %v1182 = vmax.f32 %v1054, %v1142
        %v1183 = vmax.f32 %v1055, %v1145
        %v1184 = vmax.f32 %v1056, %v1148
        %v1185 = vmax.f32 %v1057, %v1151
        %v1186 = vmax.f32 %v1058, %v1154
        %v1187 = vsub.f32 %v1027, %v1155
        %v1188 = vsub.f32 %v1028, %v1156
        %v1189 = vsub.f32 %v1029, %v1157
        %v1190 = vsub.f32 %v1030, %v1158
        %v1191 = vsub.f32 %v1031, %v1159
        %v1192 = vsub.f32 %v1032, %v1160
        %v1193 = vsub.f32 %v1033, %v1161
        %v1194 = vsub.f32 %v1034, %v1162
        %v1195 = vsub.f32 %v1035, %v1163
        %v1196 = vsub.f32 %v1036, %v1164
        %v1197 = vsub.f32 %v1037, %v1165
        %v1198 = vsub.f32 %v1038, %v1166
        %v1199 = vsub.f32 %v1039, %v1167
        %v1200 = vsub.f32 %v1040, %v1168
        %v1201 = vsub.f32 %v1041, %v1169
        %v1202 = vsub.f32 %v1042, %v1170
        %v1203 = vsub.f32 %v1043, %v1171
        %v1204 = vsub.f32 %v1044, %v1172
        %v1205 = vsub.f32 %v1045, %v1173
        %v1206 = vsub.f32 %v1046, %v1174
        %v1207 = vsub.f32 %v1047, %v1175
        %v1208 = vsub.f32 %v1048, %v1176
        %v1209 = vsub.f32 %v1049, %v1177
        %v1210 = vsub.f32 %v1050, %v1178
        %v1211 = vsub.f32 %v1051, %v1179
        %v1212 = vsub.f32 %v1052, %v1180
        %v1213 = vsub.f32 %v1053, %v1181
        %v1214 = vsub.f32 %v1054, %v1182
        %v1215 = vsub.f32 %v1055, %v1183
        %v1216 = vsub.f32 %v1056, %v1184
        %v1217 = vsub.f32 %v1057, %v1185
        %v1218 = vsub.f32 %v1058, %v1186
        %v1219 = vmul.f32 %v1187, 1.442695
        %v1220 = vpow.pop %v1219
        %v1221 = vmul.f32 %v1188, 1.442695
        %v1222 = vpow.pop %v1221
        %v1223 = vmul.f32 %v1189, 1.442695
        %v1224 = vpow.pop %v1223
        %v1225 = vmul.f32 %v1190, 1.442695
        %v1226 = vpow.pop %v1225
        %v1227 = vmul.f32 %v1191, 1.442695
        %v1228 = vpow.pop %v1227
        %v1229 = vmul.f32 %v1192, 1.442695
        %v1230 = vpow.pop %v1229
        %v1231 = vmul.f32 %v1193, 1.442695
        %v1232 = vpow.pop %v1231
        %v1233 = vmul.f32 %v1194, 1.442695
        %v1234 = vpow.pop %v1233
        %v1235 = vmul.f32 %v1195, 1.442695
        %v1236 = vpow.pop %v1235
        %v1237 = vmul.f32 %v1196, 1.442695
        %v1238 = vpow.pop %v1237
        %v1239 = vmul.f32 %v1197, 1.442695
        %v1240 = vpow.pop %v1239
        %v1241 = vmul.f32 %v1198, 1.442695
        %v1242 = vpow.pop %v1241
        %v1243 = vmul.f32 %v1199, 1.442695
        %v1244 = vpow.pop %v1243
        %v1245 = vmul.f32 %v1200, 1.442695
        %v1246 = vpow.pop %v1245
        %v1247 = vmul.f32 %v1201, 1.442695
        %v1248 = vpow.pop %v1247
        %v1249 = vmul.f32 %v1202, 1.442695
        %v1250 = vpow.pop %v1249
        %v1251 = vmul.f32 %v1203, 1.442695
        %v1252 = vpow.pop %v1251
        %v1253 = vmul.f32 %v1204, 1.442695
        %v1254 = vpow.pop %v1253
        %v1255 = vmul.f32 %v1205, 1.442695
        %v1256 = vpow.pop %v1255
        %v1257 = vmul.f32 %v1206, 1.442695
        %v1258 = vpow.pop %v1257
        %v1259 = vmul.f32 %v1207, 1.442695
        %v1260 = vpow.pop %v1259
        %v1261 = vmul.f32 %v1208, 1.442695
        %v1262 = vpow.pop %v1261
        %v1263 = vmul.f32 %v1209, 1.442695
        %v1264 = vpow.pop %v1263
        %v1265 = vmul.f32 %v1210, 1.442695
        %v1266 = vpow.pop %v1265
        %v1267 = vmul.f32 %v1211, 1.442695
        %v1268 = vpow.pop %v1267
        %v1269 = vmul.f32 %v1212, 1.442695
        %v1270 = vpow.pop %v1269
        %v1271 = vmul.f32 %v1213, 1.442695
        %v1272 = vpow.pop %v1271
        %v1273 = vmul.f32 %v1214, 1.442695
        %v1274 = vpow.pop %v1273
        %v1275 = vmul.f32 %v1215, 1.442695
        %v1276 = vpow.pop %v1275
        %v1277 = vmul.f32 %v1216, 1.442695
        %v1278 = vpow.pop %v1277
        %v1279 = vmul.f32 %v1217, 1.442695
        %v1280 = vpow.pop %v1279
        %v1281 = vmul.f32 %v1218, 1.442695
        %v1282 = vpow.pop %v1281
        %1284 = vset.pattern.permute.xlu0 0
        %1285 = vperm.xlu0 %1284, %v1155
        %v1286 = vpop.permute.xlu0 %1285
        %1289 = vset.pattern.permute.xlu0 0
        %1290 = vperm.xlu0 %1289, %v1156
        %v1291 = vpop.permute.xlu0 %1290
        %1294 = vset.pattern.permute.xlu0 0
        %1295 = vperm.xlu0 %1294, %v1157
        %v1296 = vpop.permute.xlu0 %1295
        %1299 = vset.pattern.permute.xlu0 0
        %1300 = vperm.xlu0 %1299, %v1158
        %v1301 = vpop.permute.xlu0 %1300
        %1304 = vset.pattern.permute.xlu0 0
        %1305 = vperm.xlu0 %1304, %v1159
        %v1306 = vpop.permute.xlu0 %1305
        %1309 = vset.pattern.permute.xlu0 0
        %1310 = vperm.xlu0 %1309, %v1160
        %v1311 = vpop.permute.xlu0 %1310
        %1314 = vset.pattern.permute.xlu0 0
        %1315 = vperm.xlu0 %1314, %v1161
        %v1316 = vpop.permute.xlu0 %1315
        %1319 = vset.pattern.permute.xlu0 0
        %1320 = vperm.xlu0 %1319, %v1162
        %v1321 = vpop.permute.xlu0 %1320
        %1324 = vset.pattern.permute.xlu0 0
        %1325 = vperm.xlu0 %1324, %v1163
        %v1326 = vpop.permute.xlu0 %1325
        %1329 = vset.pattern.permute.xlu0 0
        %1330 = vperm.xlu0 %1329, %v1164
        %v1331 = vpop.permute.xlu0 %1330
        %1334 = vset.pattern.permute.xlu0 0
        %1335 = vperm.xlu0 %1334, %v1165
        %v1336 = vpop.permute.xlu0 %1335
        %1339 = vset.pattern.permute.xlu0 0
        %1340 = vperm.xlu0 %1339, %v1166
        %v1341 = vpop.permute.xlu0 %1340
        %1344 = vset.pattern.permute.xlu0 0
        %1345 = vperm.xlu0 %1344, %v1167
        %v1346 = vpop.permute.xlu0 %1345
        %1349 = vset.pattern.permute.xlu0 0
        %1350 = vperm.xlu0 %1349, %v1168
        %v1351 = vpop.permute.xlu0 %1350
        %1354 = vset.pattern.permute.xlu0 0
        %1355 = vperm.xlu0 %1354, %v1169
        %v1356 = vpop.permute.xlu0 %1355
        %1359 = vset.pattern.permute.xlu0 0
        %1360 = vperm.xlu0 %1359, %v1170
        %v1361 = vpop.permute.xlu0 %1360
        %1364 = vset.pattern.permute.xlu0 0
        %1365 = vperm.xlu0 %1364, %v1171
        %v1366 = vpop.permute.xlu0 %1365
        %1369 = vset.pattern.permute.xlu0 0
        %1370 = vperm.xlu0 %1369, %v1172
        %v1371 = vpop.permute.xlu0 %1370
        %1374 = vset.pattern.permute.xlu0 0
        %1375 = vperm.xlu0 %1374, %v1173
        %v1376 = vpop.permute.xlu0 %1375
        %1379 = vset.pattern.permute.xlu0 0
        %1380 = vperm.xlu0 %1379, %v1174
        %v1381 = vpop.permute.xlu0 %1380
        %1384 = vset.pattern.permute.xlu0 0
        %1385 = vperm.xlu0 %1384, %v1175
        %v1386 = vpop.permute.xlu0 %1385
        %1389 = vset.pattern.permute.xlu0 0
        %1390 = vperm.xlu0 %1389, %v1176
        %v1391 = vpop.permute.xlu0 %1390
        %1394 = vset.pattern.permute.xlu0 0
        %1395 = vperm.xlu0 %1394, %v1177
        %v1396 = vpop.permute.xlu0 %1395
        %1399 = vset.pattern.permute.xlu0 0
        %1400 = vperm.xlu0 %1399, %v1178
        %v1401 = vpop.permute.xlu0 %1400
        %1404 = vset.pattern.permute.xlu0 0
        %1405 = vperm.xlu0 %1404, %v1179
        %v1406 = vpop.permute.xlu0 %1405
        %1409 = vset.pattern.permute.xlu0 0
        %1410 = vperm.xlu0 %1409, %v1180
        %v1411 = vpop.permute.xlu0 %1410
        %1414 = vset.pattern.permute.xlu0 0
        %1415 = vperm.xlu0 %1414, %v1181
        %v1416 = vpop.permute.xlu0 %1415
        %1419 = vset.pattern.permute.xlu0 0
        %1420 = vperm.xlu0 %1419, %v1182
        %v1421 = vpop.permute.xlu0 %1420
        %1424 = vset.pattern.permute.xlu0 0
        %1425 = vperm.xlu0 %1424, %v1183
        %v1426 = vpop.permute.xlu0 %1425
        %1429 = vset.pattern.permute.xlu0 0
        %1430 = vperm.xlu0 %1429, %v1184
        %v1431 = vpop.permute.xlu0 %1430
        %1434 = vset.pattern.permute.xlu0 0
        %1435 = vperm.xlu0 %1434, %v1185
        %v1436 = vpop.permute.xlu0 %1435
        %1439 = vset.pattern.permute.xlu0 0
        %1440 = vperm.xlu0 %1439, %v1186
        %v1441 = vpop.permute.xlu0 %1440
        %v1443 = vsub.f32 %v963, %v1286
        %v1444 = vsub.f32 %v964, %v1286
        %v1445 = vsub.f32 %v965, %v1291
        %v1446 = vsub.f32 %v966, %v1291
        %v1447 = vsub.f32 %v967, %v1296
        %v1448 = vsub.f32 %v968, %v1296
        %v1449 = vsub.f32 %v969, %v1301
        %v1450 = vsub.f32 %v970, %v1301
        %v1451 = vsub.f32 %v971, %v1306
        %v1452 = vsub.f32 %v972, %v1306
        %v1453 = vsub.f32 %v973, %v1311
        %v1454 = vsub.f32 %v974, %v1311
        %v1455 = vsub.f32 %v975, %v1316
        %v1456 = vsub.f32 %v976, %v1316
        %v1457 = vsub.f32 %v977, %v1321
        %v1458 = vsub.f32 %v978, %v1321
        %v1459 = vsub.f32 %v979, %v1326
        %v1460 = vsub.f32 %v980, %v1326
        %v1461 = vsub.f32 %v981, %v1331
        %v1462 = vsub.f32 %v982, %v1331
        %v1463 = vsub.f32 %v983, %v1336
        %v1464 = vsub.f32 %v984, %v1336
        %v1465 = vsub.f32 %v985, %v1341
        %v1466 = vsub.f32 %v986, %v1341
        %v1467 = vsub.f32 %v987, %v1346
        %v1468 = vsub.f32 %v988, %v1346
        %v1469 = vsub.f32 %v989, %v1351
        %v1470 = vsub.f32 %v990, %v1351
        %v1471 = vsub.f32 %v991, %v1356
        %v1472 = vsub.f32 %v992, %v1356
        %v1473 = vsub.f32 %v993, %v1361
        %v1474 = vsub.f32 %v994, %v1361
        %v1475 = vsub.f32 %v995, %v1366
        %v1476 = vsub.f32 %v996, %v1366
        %v1477 = vsub.f32 %v997, %v1371
        %v1478 = vsub.f32 %v998, %v1371
        %v1479 = vsub.f32 %v999, %v1376
        %v1480 = vsub.f32 %v1000, %v1376
        %v1481 = vsub.f32 %v1001, %v1381
        %v1482 = vsub.f32 %v1002, %v1381
        %v1483 = vsub.f32 %v1003, %v1386
        %v1484 = vsub.f32 %v1004, %v1386
        %v1485 = vsub.f32 %v1005, %v1391
        %v1486 = vsub.f32 %v1006, %v1391
        %v1487 = vsub.f32 %v1007, %v1396
        %v1488 = vsub.f32 %v1008, %v1396
        %v1489 = vsub.f32 %v1009, %v1401
        %v1490 = vsub.f32 %v1010, %v1401
        %v1491 = vsub.f32 %v1011, %v1406
        %v1492 = vsub.f32 %v1012, %v1406
        %v1493 = vsub.f32 %v1013, %v1411
        %v1494 = vsub.f32 %v1014, %v1411
        %v1495 = vsub.f32 %v1015, %v1416
        %v1496 = vsub.f32 %v1016, %v1416
        %v1497 = vsub.f32 %v1017, %v1421
        %v1498 = vsub.f32 %v1018, %v1421
        %v1499 = vsub.f32 %v1019, %v1426
        %v1500 = vsub.f32 %v1020, %v1426
        %v1501 = vsub.f32 %v1021, %v1431
        %v1502 = vsub.f32 %v1022, %v1431
        %v1503 = vsub.f32 %v1023, %v1436
        %v1504 = vsub.f32 %v1024, %v1436
        %v1505 = vsub.f32 %v1025, %v1441
        %v1506 = vsub.f32 %v1026, %v1441
        %v1507 = vmul.f32 %v1443, 1.442695
        %v1508 = vpow.pop %v1507
        %v1509 = vmul.f32 %v1444, 1.442695
        %v1510 = vpow.pop %v1509
        %v1511 = vmul.f32 %v1445, 1.442695
        %v1512 = vpow.pop %v1511
        %v1513 = vmul.f32 %v1446, 1.442695
        %v1514 = vpow.pop %v1513
        %v1515 = vmul.f32 %v1447, 1.442695
        %v1516 = vpow.pop %v1515
        %v1517 = vmul.f32 %v1448, 1.442695
        %v1518 = vpow.pop %v1517
        %v1519 = vmul.f32 %v1449, 1.442695
        %v1520 = vpow.pop %v1519
        %v1521 = vmul.f32 %v1450, 1.442695
        %v1522 = vpow.pop %v1521
        %v1523 = vmul.f32 %v1451, 1.442695
        %v1524 = vpow.pop %v1523
        %v1525 = vmul.f32 %v1452, 1.442695
        %v1526 = vpow.pop %v1525
        %v1527 = vmul.f32 %v1453, 1.442695
        %v1528 = vpow.pop %v1527
        %v1529 = vmul.f32 %v1454, 1.442695
        %v1530 = vpow.pop %v1529
        %v1531 = vmul.f32 %v1455, 1.442695
        %v1532 = vpow.pop %v1531
        %v1533 = vmul.f32 %v1456, 1.442695
        %v1534 = vpow.pop %v1533
        %v1535 = vmul.f32 %v1457, 1.442695
        %v1536 = vpow.pop %v1535
        %v1537 = vmul.f32 %v1458, 1.442695
        %v1538 = vpow.pop %v1537
        %v1539 = vmul.f32 %v1459, 1.442695
        %v1540 = vpow.pop %v1539
        %v1541 = vmul.f32 %v1460, 1.442695
        %v1542 = vpow.pop %v1541
        %v1543 = vmul.f32 %v1461, 1.442695
        %v1544 = vpow.pop %v1543
        %v1545 = vmul.f32 %v1462, 1.442695
        %v1546 = vpow.pop %v1545
        %v1547 = vmul.f32 %v1463, 1.442695
        %v1548 = vpow.pop %v1547
        %v1549 = vmul.f32 %v1464, 1.442695
        %v1550 = vpow.pop %v1549
        %v1551 = vmul.f32 %v1465, 1.442695
        %v1552 = vpow.pop %v1551
        %v1553 = vmul.f32 %v1466, 1.442695
        %v1554 = vpow.pop %v1553
        %v1555 = vmul.f32 %v1467, 1.442695
        %v1556 = vpow.pop %v1555
        %v1557 = vmul.f32 %v1468, 1.442695
        %v1558 = vpow.pop %v1557
        %v1559 = vmul.f32 %v1469, 1.442695
        %v1560 = vpow.pop %v1559
        %v1561 = vmul.f32 %v1470, 1.442695
        %v1562 = vpow.pop %v1561
        %v1563 = vmul.f32 %v1471, 1.442695
        %v1564 = vpow.pop %v1563
        %v1565 = vmul.f32 %v1472, 1.442695
        %v1566 = vpow.pop %v1565
        %v1567 = vmul.f32 %v1473, 1.442695
        %v1568 = vpow.pop %v1567
        %v1569 = vmul.f32 %v1474, 1.442695
        %v1570 = vpow.pop %v1569
        %v1571 = vmul.f32 %v1475, 1.442695
        %v1572 = vpow.pop %v1571
        %v1573 = vmul.f32 %v1476, 1.442695
        %v1574 = vpow.pop %v1573
        %v1575 = vmul.f32 %v1477, 1.442695
        %v1576 = vpow.pop %v1575
        %v1577 = vmul.f32 %v1478, 1.442695
        %v1578 = vpow.pop %v1577
        %v1579 = vmul.f32 %v1479, 1.442695
        %v1580 = vpow.pop %v1579
        %v1581 = vmul.f32 %v1480, 1.442695
        %v1582 = vpow.pop %v1581
        %v1583 = vmul.f32 %v1481, 1.442695
        %v1584 = vpow.pop %v1583
        %v1585 = vmul.f32 %v1482, 1.442695
        %v1586 = vpow.pop %v1585
        %v1587 = vmul.f32 %v1483, 1.442695
        %v1588 = vpow.pop %v1587
        %v1589 = vmul.f32 %v1484, 1.442695
        %v1590 = vpow.pop %v1589
        %v1591 = vmul.f32 %v1485, 1.442695
        %v1592 = vpow.pop %v1591
        %v1593 = vmul.f32 %v1486, 1.442695
        %v1594 = vpow.pop %v1593
        %v1595 = vmul.f32 %v1487, 1.442695
        %v1596 = vpow.pop %v1595
        %v1597 = vmul.f32 %v1488, 1.442695
        %v1598 = vpow.pop %v1597
        %v1599 = vmul.f32 %v1489, 1.442695
        %v1600 = vpow.pop %v1599
        %v1601 = vmul.f32 %v1490, 1.442695
        %v1602 = vpow.pop %v1601
        %v1603 = vmul.f32 %v1491, 1.442695
        %v1604 = vpow.pop %v1603
        %v1605 = vmul.f32 %v1492, 1.442695
        %v1606 = vpow.pop %v1605
        %v1607 = vmul.f32 %v1493, 1.442695
        %v1608 = vpow.pop %v1607
        %v1609 = vmul.f32 %v1494, 1.442695
        %v1610 = vpow.pop %v1609
        %v1611 = vmul.f32 %v1495, 1.442695
        %v1612 = vpow.pop %v1611
        %v1613 = vmul.f32 %v1496, 1.442695
        %v1614 = vpow.pop %v1613
        %v1615 = vmul.f32 %v1497, 1.442695
        %v1616 = vpow.pop %v1615
        %v1617 = vmul.f32 %v1498, 1.442695
        %v1618 = vpow.pop %v1617
        %v1619 = vmul.f32 %v1499, 1.442695
        %v1620 = vpow.pop %v1619
        %v1621 = vmul.f32 %v1500, 1.442695
        %v1622 = vpow.pop %v1621
        %v1623 = vmul.f32 %v1501, 1.442695
        %v1624 = vpow.pop %v1623
        %v1625 = vmul.f32 %v1502, 1.442695
        %v1626 = vpow.pop %v1625
        %v1627 = vmul.f32 %v1503, 1.442695
        %v1628 = vpow.pop %v1627
        %v1629 = vmul.f32 %v1504, 1.442695
        %v1630 = vpow.pop %v1629
        %v1631 = vmul.f32 %v1505, 1.442695
        %v1632 = vpow.pop %v1631
        %v1633 = vmul.f32 %v1506, 1.442695
        %v1634 = vpow.pop %v1633
        %v1635 = vld [vmem:[#allocation3] sm:$0xff]
        %v1636 = vld [vmem:[#allocation3 + $0x8] sm:$0xff]
        %v1637 = vld [vmem:[#allocation3 + $0x10] sm:$0xff]
        %v1638 = vld [vmem:[#allocation3 + $0x18] sm:$0xff]
        %v1639 = vld [vmem:[#allocation3 + $0x20] sm:$0xff]
        %v1640 = vld [vmem:[#allocation3 + $0x28] sm:$0xff]
        %v1641 = vld [vmem:[#allocation3 + $0x30] sm:$0xff]
        %v1642 = vld [vmem:[#allocation3 + $0x38] sm:$0xff]
        %v1643 = vld [vmem:[#allocation3 + $0x40] sm:$0xff]
        %v1644 = vld [vmem:[#allocation3 + $0x48] sm:$0xff]
        %v1645 = vld [vmem:[#allocation3 + $0x50] sm:$0xff]
        %v1646 = vld [vmem:[#allocation3 + $0x58] sm:$0xff]
        %v1647 = vld [vmem:[#allocation3 + $0x60] sm:$0xff]
        %v1648 = vld [vmem:[#allocation3 + $0x68] sm:$0xff]
        %v1649 = vld [vmem:[#allocation3 + $0x70] sm:$0xff]
        %v1650 = vld [vmem:[#allocation3 + $0x78] sm:$0xff]
        %v1651 = vld [vmem:[#allocation3 + $0x80] sm:$0xff]
        %v1652 = vld [vmem:[#allocation3 + $0x88] sm:$0xff]
        %v1653 = vld [vmem:[#allocation3 + $0x90] sm:$0xff]
        %v1654 = vld [vmem:[#allocation3 + $0x98] sm:$0xff]
        %v1655 = vld [vmem:[#allocation3 + $0xa0] sm:$0xff]
        %v1656 = vld [vmem:[#allocation3 + $0xa8] sm:$0xff]
        %v1657 = vld [vmem:[#allocation3 + $0xb0] sm:$0xff]
        %v1658 = vld [vmem:[#allocation3 + $0xb8] sm:$0xff]
        %v1659 = vld [vmem:[#allocation3 + $0xc0] sm:$0xff]
        %v1660 = vld [vmem:[#allocation3 + $0xc8] sm:$0xff]
        %v1661 = vld [vmem:[#allocation3 + $0xd0] sm:$0xff]
        %v1662 = vld [vmem:[#allocation3 + $0xd8] sm:$0xff]
        %v1663 = vld [vmem:[#allocation3 + $0xe0] sm:$0xff]
        %v1664 = vld [vmem:[#allocation3 + $0xe8] sm:$0xff]
        %v1665 = vld [vmem:[#allocation3 + $0xf0] sm:$0xff]
        %v1666 = vld [vmem:[#allocation3 + $0xf8] sm:$0xff]
        %v1667 = vmul.f32 %v1220, %v1635
        %v1668 = vmul.f32 %v1222, %v1636
        %v1669 = vmul.f32 %v1224, %v1637
        %v1670 = vmul.f32 %v1226, %v1638
        %v1671 = vmul.f32 %v1228, %v1639
        %v1672 = vmul.f32 %v1230, %v1640
        %v1673 = vmul.f32 %v1232, %v1641
        %v1674 = vmul.f32 %v1234, %v1642
        %v1675 = vmul.f32 %v1236, %v1643
        %v1676 = vmul.f32 %v1238, %v1644
        %v1677 = vmul.f32 %v1240, %v1645
        %v1678 = vmul.f32 %v1242, %v1646
        %v1679 = vmul.f32 %v1244, %v1647
        %v1680 = vmul.f32 %v1246, %v1648
        %v1681 = vmul.f32 %v1248, %v1649
        %v1682 = vmul.f32 %v1250, %v1650
        %v1683 = vmul.f32 %v1252, %v1651
        %v1684 = vmul.f32 %v1254, %v1652
        %v1685 = vmul.f32 %v1256, %v1653
        %v1686 = vmul.f32 %v1258, %v1654
        %v1687 = vmul.f32 %v1260, %v1655
        %v1688 = vmul.f32 %v1262, %v1656
        %v1689 = vmul.f32 %v1264, %v1657
        %v1690 = vmul.f32 %v1266, %v1658
        %v1691 = vmul.f32 %v1268, %v1659
        %v1692 = vmul.f32 %v1270, %v1660
        %v1693 = vmul.f32 %v1272, %v1661
        %v1694 = vmul.f32 %v1274, %v1662
        %v1695 = vmul.f32 %v1276, %v1663
        %v1696 = vmul.f32 %v1278, %v1664
        %v1697 = vmul.f32 %v1280, %v1665
        %v1698 = vmul.f32 %v1282, %v1666
        %v1699 = vadd.f32 %v1508, %v1510
        %1700 = vadd.xlane.f32.xlu0 %v1699
        %v1701 = vpop.xlane.xlu0 %1700
        %v1702 = vadd.f32 %v1512, %v1514
        %1703 = vadd.xlane.f32.xlu0 %v1702
        %v1704 = vpop.xlane.xlu0 %1703
        %v1705 = vadd.f32 %v1516, %v1518
        %1706 = vadd.xlane.f32.xlu0 %v1705
        %v1707 = vpop.xlane.xlu0 %1706
        %v1708 = vadd.f32 %v1520, %v1522
        %1709 = vadd.xlane.f32.xlu0 %v1708
        %v1710 = vpop.xlane.xlu0 %1709
        %v1711 = vadd.f32 %v1524, %v1526
        %1712 = vadd.xlane.f32.xlu0 %v1711
        %v1713 = vpop.xlane.xlu0 %1712
        %v1714 = vadd.f32 %v1528, %v1530
        %1715 = vadd.xlane.f32.xlu0 %v1714
        %v1716 = vpop.xlane.xlu0 %1715
        %v1717 = vadd.f32 %v1532, %v1534
        %1718 = vadd.xlane.f32.xlu0 %v1717
        %v1719 = vpop.xlane.xlu0 %1718
        %v1720 = vadd.f32 %v1536, %v1538
        %1721 = vadd.xlane.f32.xlu0 %v1720
        %v1722 = vpop.xlane.xlu0 %1721
        %v1723 = vadd.f32 %v1540, %v1542
        %1724 = vadd.xlane.f32.xlu0 %v1723
        %v1725 = vpop.xlane.xlu0 %1724
        %v1726 = vadd.f32 %v1544, %v1546
        %1727 = vadd.xlane.f32.xlu0 %v1726
        %v1728 = vpop.xlane.xlu0 %1727
        %v1729 = vadd.f32 %v1548, %v1550
        %1730 = vadd.xlane.f32.xlu0 %v1729
        %v1731 = vpop.xlane.xlu0 %1730
        %v1732 = vadd.f32 %v1552, %v1554
        %1733 = vadd.xlane.f32.xlu0 %v1732
        %v1734 = vpop.xlane.xlu0 %1733
        %v1735 = vadd.f32 %v1556, %v1558
        %1736 = vadd.xlane.f32.xlu0 %v1735
        %v1737 = vpop.xlane.xlu0 %1736
        %v1738 = vadd.f32 %v1560, %v1562
        %1739 = vadd.xlane.f32.xlu0 %v1738
        %v1740 = vpop.xlane.xlu0 %1739
        %v1741 = vadd.f32 %v1564, %v1566
        %1742 = vadd.xlane.f32.xlu0 %v1741
        %v1743 = vpop.xlane.xlu0 %1742
        %v1744 = vadd.f32 %v1568, %v1570
        %1745 = vadd.xlane.f32.xlu0 %v1744
        %v1746 = vpop.xlane.xlu0 %1745
        %v1747 = vadd.f32 %v1572, %v1574
        %1748 = vadd.xlane.f32.xlu0 %v1747
        %v1749 = vpop.xlane.xlu0 %1748
        %v1750 = vadd.f32 %v1576, %v1578
        %1751 = vadd.xlane.f32.xlu0 %v1750
        %v1752 = vpop.xlane.xlu0 %1751
        %v1753 = vadd.f32 %v1580, %v1582
        %1754 = vadd.xlane.f32.xlu0 %v1753
        %v1755 = vpop.xlane.xlu0 %1754
        %v1756 = vadd.f32 %v1584, %v1586
        %1757 = vadd.xlane.f32.xlu0 %v1756
        %v1758 = vpop.xlane.xlu0 %1757
        %v1759 = vadd.f32 %v1588, %v1590
        %1760 = vadd.xlane.f32.xlu0 %v1759
        %v1761 = vpop.xlane.xlu0 %1760
        %v1762 = vadd.f32 %v1592, %v1594
        %1763 = vadd.xlane.f32.xlu0 %v1762
        %v1764 = vpop.xlane.xlu0 %1763
        %v1765 = vadd.f32 %v1596, %v1598
        %1766 = vadd.xlane.f32.xlu0 %v1765
        %v1767 = vpop.xlane.xlu0 %1766
        %v1768 = vadd.f32 %v1600, %v1602
        %1769 = vadd.xlane.f32.xlu0 %v1768
        %v1770 = vpop.xlane.xlu0 %1769
        %v1771 = vadd.f32 %v1604, %v1606
        %1772 = vadd.xlane.f32.xlu0 %v1771
        %v1773 = vpop.xlane.xlu0 %1772
        %v1774 = vadd.f32 %v1608, %v1610
        %1775 = vadd.xlane.f32.xlu0 %v1774
        %v1776 = vpop.xlane.xlu0 %1775
        %v1777 = vadd.f32 %v1612, %v1614
        %1778 = vadd.xlane.f32.xlu0 %v1777
        %v1779 = vpop.xlane.xlu0 %1778
        %v1780 = vadd.f32 %v1616, %v1618
        %1781 = vadd.xlane.f32.xlu0 %v1780
        %v1782 = vpop.xlane.xlu0 %1781
        %v1783 = vadd.f32 %v1620, %v1622
        %1784 = vadd.xlane.f32.xlu0 %v1783
        %v1785 = vpop.xlane.xlu0 %1784
        %v1786 = vadd.f32 %v1624, %v1626
        %1787 = vadd.xlane.f32.xlu0 %v1786
        %v1788 = vpop.xlane.xlu0 %1787
        %v1789 = vadd.f32 %v1628, %v1630
        %1790 = vadd.xlane.f32.xlu0 %v1789
        %v1791 = vpop.xlane.xlu0 %1790
        %v1792 = vadd.f32 %v1632, %v1634
        %1793 = vadd.xlane.f32.xlu0 %v1792
        %v1794 = vpop.xlane.xlu0 %1793
        %v1795 = vadd.f32 %v1667, %v1701
        %v1796 = vadd.f32 %v1668, %v1704
        %v1797 = vadd.f32 %v1669, %v1707
        %v1798 = vadd.f32 %v1670, %v1710
        %v1799 = vadd.f32 %v1671, %v1713
        %v1800 = vadd.f32 %v1672, %v1716
        %v1801 = vadd.f32 %v1673, %v1719
        %v1802 = vadd.f32 %v1674, %v1722
        %v1803 = vadd.f32 %v1675, %v1725
        %v1804 = vadd.f32 %v1676, %v1728
        %v1805 = vadd.f32 %v1677, %v1731
        %v1806 = vadd.f32 %v1678, %v1734
        %v1807 = vadd.f32 %v1679, %v1737
        %v1808 = vadd.f32 %v1680, %v1740
        %v1809 = vadd.f32 %v1681, %v1743
        %v1810 = vadd.f32 %v1682, %v1746
        %v1811 = vadd.f32 %v1683, %v1749
        %v1812 = vadd.f32 %v1684, %v1752
        %v1813 = vadd.f32 %v1685, %v1755
        %v1814 = vadd.f32 %v1686, %v1758
        %v1815 = vadd.f32 %v1687, %v1761
        %v1816 = vadd.f32 %v1688, %v1764
        %v1817 = vadd.f32 %v1689, %v1767
        %v1818 = vadd.f32 %v1690, %v1770
        %v1819 = vadd.f32 %v1691, %v1773
        %v1820 = vadd.f32 %v1692, %v1776
        %v1821 = vadd.f32 %v1693, %v1779
        %v1822 = vadd.f32 %v1694, %v1782
        %v1823 = vadd.f32 %v1695, %v1785
        %v1824 = vadd.f32 %v1696, %v1788
        %v1825 = vadd.f32 %v1697, %v1791
        %v1826 = vadd.f32 %v1698, %v1794
        %vm1827 = vcmask 7168
        %1828 = vst.msk [vmem:[#allocation3] sm:$0xff] %vm1827, %v1795
        %1829 = vst.msk [vmem:[#allocation3 + $0x8] sm:$0xff] %vm1827, %v1796
        %1830 = vst.msk [vmem:[#allocation3 + $0x10] sm:$0xff] %vm1827, %v1797
        %1831 = vst.msk [vmem:[#allocation3 + $0x18] sm:$0xff] %vm1827, %v1798
        %1832 = vst.msk [vmem:[#allocation3 + $0x20] sm:$0xff] %vm1827, %v1799
        %1833 = vst.msk [vmem:[#allocation3 + $0x28] sm:$0xff] %vm1827, %v1800
        %1834 = vst.msk [vmem:[#allocation3 + $0x30] sm:$0xff] %vm1827, %v1801
        %1835 = vst.msk [vmem:[#allocation3 + $0x38] sm:$0xff] %vm1827, %v1802
        %1836 = vst.msk [vmem:[#allocation3 + $0x40] sm:$0xff] %vm1827, %v1803
        %1837 = vst.msk [vmem:[#allocation3 + $0x48] sm:$0xff] %vm1827, %v1804
        %1838 = vst.msk [vmem:[#allocation3 + $0x50] sm:$0xff] %vm1827, %v1805
        %1839 = vst.msk [vmem:[#allocation3 + $0x58] sm:$0xff] %vm1827, %v1806
        %1840 = vst.msk [vmem:[#allocation3 + $0x60] sm:$0xff] %vm1827, %v1807
        %1841 = vst.msk [vmem:[#allocation3 + $0x68] sm:$0xff] %vm1827, %v1808
        %1842 = vst.msk [vmem:[#allocation3 + $0x70] sm:$0xff] %vm1827, %v1809
        %1843 = vst.msk [vmem:[#allocation3 + $0x78] sm:$0xff] %vm1827, %v1810
        %1844 = vst.msk [vmem:[#allocation3 + $0x80] sm:$0xff] %vm1827, %v1811
        %1845 = vst.msk [vmem:[#allocation3 + $0x88] sm:$0xff] %vm1827, %v1812
        %1846 = vst.msk [vmem:[#allocation3 + $0x90] sm:$0xff] %vm1827, %v1813
        %1847 = vst.msk [vmem:[#allocation3 + $0x98] sm:$0xff] %vm1827, %v1814
        %1848 = vst.msk [vmem:[#allocation3 + $0xa0] sm:$0xff] %vm1827, %v1815
        %1849 = vst.msk [vmem:[#allocation3 + $0xa8] sm:$0xff] %vm1827, %v1816
        %1850 = vst.msk [vmem:[#allocation3 + $0xb0] sm:$0xff] %vm1827, %v1817
        %1851 = vst.msk [vmem:[#allocation3 + $0xb8] sm:$0xff] %vm1827, %v1818
        %1852 = vst.msk [vmem:[#allocation3 + $0xc0] sm:$0xff] %vm1827, %v1819
        %1853 = vst.msk [vmem:[#allocation3 + $0xc8] sm:$0xff] %vm1827, %v1820
        %1854 = vst.msk [vmem:[#allocation3 + $0xd0] sm:$0xff] %vm1827, %v1821
        %1855 = vst.msk [vmem:[#allocation3 + $0xd8] sm:$0xff] %vm1827, %v1822
        %1856 = vst.msk [vmem:[#allocation3 + $0xe0] sm:$0xff] %vm1827, %v1823
        %1857 = vst.msk [vmem:[#allocation3 + $0xe8] sm:$0xff] %vm1827, %v1824
        %1858 = vst.msk [vmem:[#allocation3 + $0xf0] sm:$0xff] %vm1827, %v1825
        %1859 = vst.msk [vmem:[#allocation3 + $0xf8] sm:$0xff] %vm1827, %v1826
        %v1860 = vld [vmem:[#allocation4] sm:$0xff]
        %v1861 = vld [vmem:[#allocation4 + $0x8] sm:$0xff]
        %v1862 = vld [vmem:[#allocation4 + $0x10] sm:$0xff]
        %v1863 = vld [vmem:[#allocation4 + $0x18] sm:$0xff]
        %v1864 = vld [vmem:[#allocation4 + $0x20] sm:$0xff]
        %v1865 = vld [vmem:[#allocation4 + $0x28] sm:$0xff]
        %v1866 = vld [vmem:[#allocation4 + $0x30] sm:$0xff]
        %v1867 = vld [vmem:[#allocation4 + $0x38] sm:$0xff]
        %v1868 = vld [vmem:[#allocation4 + $0x40] sm:$0xff]
        %v1869 = vld [vmem:[#allocation4 + $0x48] sm:$0xff]
        %v1870 = vld [vmem:[#allocation4 + $0x50] sm:$0xff]
        %v1871 = vld [vmem:[#allocation4 + $0x58] sm:$0xff]
        %v1872 = vld [vmem:[#allocation4 + $0x60] sm:$0xff]
        %v1873 = vld [vmem:[#allocation4 + $0x68] sm:$0xff]
        %v1874 = vld [vmem:[#allocation4 + $0x70] sm:$0xff]
        %v1875 = vld [vmem:[#allocation4 + $0x78] sm:$0xff]
        %v1876 = vld [vmem:[#allocation4 + $0x80] sm:$0xff]
        %v1877 = vld [vmem:[#allocation4 + $0x88] sm:$0xff]
        %v1878 = vld [vmem:[#allocation4 + $0x90] sm:$0xff]
        %v1879 = vld [vmem:[#allocation4 + $0x98] sm:$0xff]
        %v1880 = vld [vmem:[#allocation4 + $0xa0] sm:$0xff]
        %v1881 = vld [vmem:[#allocation4 + $0xa8] sm:$0xff]
        %v1882 = vld [vmem:[#allocation4 + $0xb0] sm:$0xff]
        %v1883 = vld [vmem:[#allocation4 + $0xb8] sm:$0xff]
        %v1884 = vld [vmem:[#allocation4 + $0xc0] sm:$0xff]
        %v1885 = vld [vmem:[#allocation4 + $0xc8] sm:$0xff]
        %v1886 = vld [vmem:[#allocation4 + $0xd0] sm:$0xff]
        %v1887 = vld [vmem:[#allocation4 + $0xd8] sm:$0xff]
        %v1888 = vld [vmem:[#allocation4 + $0xe0] sm:$0xff]
        %v1889 = vld [vmem:[#allocation4 + $0xe8] sm:$0xff]
        %v1890 = vld [vmem:[#allocation4 + $0xf0] sm:$0xff]
        %v1891 = vld [vmem:[#allocation4 + $0xf8] sm:$0xff]
        %1893 = vset.pattern.permute.xlu0 0
        %1894 = vperm.xlu0 %1893, %v1220
        %v1895 = vpop.permute.xlu0 %1894
        %1898 = vset.pattern.permute.xlu0 0
        %1899 = vperm.xlu0 %1898, %v1222
        %v1900 = vpop.permute.xlu0 %1899
        %1903 = vset.pattern.permute.xlu0 0
        %1904 = vperm.xlu0 %1903, %v1224
        %v1905 = vpop.permute.xlu0 %1904
        %1908 = vset.pattern.permute.xlu0 0
        %1909 = vperm.xlu0 %1908, %v1226
        %v1910 = vpop.permute.xlu0 %1909
        %1913 = vset.pattern.permute.xlu0 0
        %1914 = vperm.xlu0 %1913, %v1228
        %v1915 = vpop.permute.xlu0 %1914
        %1918 = vset.pattern.permute.xlu0 0
        %1919 = vperm.xlu0 %1918, %v1230
        %v1920 = vpop.permute.xlu0 %1919
        %1923 = vset.pattern.permute.xlu0 0
        %1924 = vperm.xlu0 %1923, %v1232
        %v1925 = vpop.permute.xlu0 %1924
        %1928 = vset.pattern.permute.xlu0 0
        %1929 = vperm.xlu0 %1928, %v1234
        %v1930 = vpop.permute.xlu0 %1929
        %1933 = vset.pattern.permute.xlu0 0
        %1934 = vperm.xlu0 %1933, %v1236
        %v1935 = vpop.permute.xlu0 %1934
        %1938 = vset.pattern.permute.xlu0 0
        %1939 = vperm.xlu0 %1938, %v1238
        %v1940 = vpop.permute.xlu0 %1939
        %1943 = vset.pattern.permute.xlu0 0
        %1944 = vperm.xlu0 %1943, %v1240
        %v1945 = vpop.permute.xlu0 %1944
        %1948 = vset.pattern.permute.xlu0 0
        %1949 = vperm.xlu0 %1948, %v1242
        %v1950 = vpop.permute.xlu0 %1949
        %1953 = vset.pattern.permute.xlu0 0
        %1954 = vperm.xlu0 %1953, %v1244
        %v1955 = vpop.permute.xlu0 %1954
        %1958 = vset.pattern.permute.xlu0 0
        %1959 = vperm.xlu0 %1958, %v1246
        %v1960 = vpop.permute.xlu0 %1959
        %1963 = vset.pattern.permute.xlu0 0
        %1964 = vperm.xlu0 %1963, %v1248
        %v1965 = vpop.permute.xlu0 %1964
        %1968 = vset.pattern.permute.xlu0 0
        %1969 = vperm.xlu0 %1968, %v1250
        %v1970 = vpop.permute.xlu0 %1969
        %1973 = vset.pattern.permute.xlu0 0
        %1974 = vperm.xlu0 %1973, %v1252
        %v1975 = vpop.permute.xlu0 %1974
        %1978 = vset.pattern.permute.xlu0 0
        %1979 = vperm.xlu0 %1978, %v1254
        %v1980 = vpop.permute.xlu0 %1979
        %1983 = vset.pattern.permute.xlu0 0
        %1984 = vperm.xlu0 %1983, %v1256
        %v1985 = vpop.permute.xlu0 %1984
        %1988 = vset.pattern.permute.xlu0 0
        %1989 = vperm.xlu0 %1988, %v1258
        %v1990 = vpop.permute.xlu0 %1989
        %1993 = vset.pattern.permute.xlu0 0
        %1994 = vperm.xlu0 %1993, %v1260
        %v1995 = vpop.permute.xlu0 %1994
        %1998 = vset.pattern.permute.xlu0 0
        %1999 = vperm.xlu0 %1998, %v1262
        %v2000 = vpop.permute.xlu0 %1999
        %2003 = vset.pattern.permute.xlu0 0
        %2004 = vperm.xlu0 %2003, %v1264
        %v2005 = vpop.permute.xlu0 %2004
        %2008 = vset.pattern.permute.xlu0 0
        %2009 = vperm.xlu0 %2008, %v1266
        %v2010 = vpop.permute.xlu0 %2009
        %2013 = vset.pattern.permute.xlu0 0
        %2014 = vperm.xlu0 %2013, %v1268
        %v2015 = vpop.permute.xlu0 %2014
        %2018 = vset.pattern.permute.xlu0 0
        %2019 = vperm.xlu0 %2018, %v1270
        %v2020 = vpop.permute.xlu0 %2019
        %2023 = vset.pattern.permute.xlu0 0
        %2024 = vperm.xlu0 %2023, %v1272
        %v2025 = vpop.permute.xlu0 %2024
        %2028 = vset.pattern.permute.xlu0 0
        %2029 = vperm.xlu0 %2028, %v1274
        %v2030 = vpop.permute.xlu0 %2029
        %2033 = vset.pattern.permute.xlu0 0
        %2034 = vperm.xlu0 %2033, %v1276
        %v2035 = vpop.permute.xlu0 %2034
        %2038 = vset.pattern.permute.xlu0 0
        %2039 = vperm.xlu0 %2038, %v1278
        %v2040 = vpop.permute.xlu0 %2039
        %2043 = vset.pattern.permute.xlu0 0
        %2044 = vperm.xlu0 %2043, %v1280
        %v2045 = vpop.permute.xlu0 %2044
        %2048 = vset.pattern.permute.xlu0 0
        %2049 = vperm.xlu0 %2048, %v1282
        %v2050 = vpop.permute.xlu0 %2049
        %v2052 = vmul.f32 %v1895, %v1860
        %v2053 = vmul.f32 %v1900, %v1861
        %v2054 = vmul.f32 %v1905, %v1862
        %v2055 = vmul.f32 %v1910, %v1863
        %v2056 = vmul.f32 %v1915, %v1864
        %v2057 = vmul.f32 %v1920, %v1865
        %v2058 = vmul.f32 %v1925, %v1866
        %v2059 = vmul.f32 %v1930, %v1867
        %v2060 = vmul.f32 %v1935, %v1868
        %v2061 = vmul.f32 %v1940, %v1869
        %v2062 = vmul.f32 %v1945, %v1870
        %v2063 = vmul.f32 %v1950, %v1871
        %v2064 = vmul.f32 %v1955, %v1872
        %v2065 = vmul.f32 %v1960, %v1873
        %v2066 = vmul.f32 %v1965, %v1874
        %v2067 = vmul.f32 %v1970, %v1875
        %v2068 = vmul.f32 %v1975, %v1876
        %v2069 = vmul.f32 %v1980, %v1877
        %v2070 = vmul.f32 %v1985, %v1878
        %v2071 = vmul.f32 %v1990, %v1879
        %v2072 = vmul.f32 %v1995, %v1880
        %v2073 = vmul.f32 %v2000, %v1881
        %v2074 = vmul.f32 %v2005, %v1882
        %v2075 = vmul.f32 %v2010, %v1883
        %v2076 = vmul.f32 %v2015, %v1884
        %v2077 = vmul.f32 %v2020, %v1885
        %v2078 = vmul.f32 %v2025, %v1886
        %v2079 = vmul.f32 %v2030, %v1887
        %v2080 = vmul.f32 %v2035, %v1888
        %v2081 = vmul.f32 %v2040, %v1889
        %v2082 = vmul.f32 %v2045, %v1890
        %v2083 = vmul.f32 %v2050, %v1891
        %v2084 = vpack.c.bf16 %v1512, %v1508
        %v2085 = vpack.c.bf16 %v1514, %v1510
        %v2086 = vpack.c.bf16 %v1520, %v1516
        %v2087 = vpack.c.bf16 %v1522, %v1518
        %v2088 = vpack.c.bf16 %v1528, %v1524
        %v2089 = vpack.c.bf16 %v1530, %v1526
        %v2090 = vpack.c.bf16 %v1536, %v1532
        %v2091 = vpack.c.bf16 %v1538, %v1534
        %v2092 = vpack.c.bf16 %v1544, %v1540
        %v2093 = vpack.c.bf16 %v1546, %v1542
        %v2094 = vpack.c.bf16 %v1552, %v1548
        %v2095 = vpack.c.bf16 %v1554, %v1550
        %v2096 = vpack.c.bf16 %v1560, %v1556
        %v2097 = vpack.c.bf16 %v1562, %v1558
        %v2098 = vpack.c.bf16 %v1568, %v1564
        %v2099 = vpack.c.bf16 %v1570, %v1566
        %v2100 = vpack.c.bf16 %v1576, %v1572
        %v2101 = vpack.c.bf16 %v1578, %v1574
        %v2102 = vpack.c.bf16 %v1584, %v1580
        %v2103 = vpack.c.bf16 %v1586, %v1582
        %v2104 = vpack.c.bf16 %v1592, %v1588
        %v2105 = vpack.c.bf16 %v1594, %v1590
        %v2106 = vpack.c.bf16 %v1600, %v1596
        %v2107 = vpack.c.bf16 %v1602, %v1598
        %v2108 = vpack.c.bf16 %v1608, %v1604
        %v2109 = vpack.c.bf16 %v1610, %v1606
        %v2110 = vpack.c.bf16 %v1616, %v1612
        %v2111 = vpack.c.bf16 %v1618, %v1614
        %v2112 = vpack.c.bf16 %v1624, %v1620
        %v2113 = vpack.c.bf16 %v1626, %v1622
        %v2114 = vpack.c.bf16 %v1632, %v1628
        %v2115 = vpack.c.bf16 %v1634, %v1630
        %v2148 = vunpack.c.l.b16 %v561
        %v2149 = vunpack.c.l.b16 %v562
        %v2150 = vunpack.c.l.b16 %v563
        %v2151 = vunpack.c.l.b16 %v564
        %v2152 = vunpack.c.l.b16 %v565
        %v2153 = vunpack.c.l.b16 %v566
        %v2154 = vunpack.c.l.b16 %v567
        %v2155 = vunpack.c.l.b16 %v568
        %v2156 = vunpack.c.l.b16 %v569
        %v2157 = vunpack.c.l.b16 %v570
        %v2158 = vunpack.c.l.b16 %v571
        %v2159 = vunpack.c.l.b16 %v572
        %v2160 = vunpack.c.l.b16 %v573
        %v2161 = vunpack.c.l.b16 %v574
        %v2162 = vunpack.c.l.b16 %v575
        %v2163 = vunpack.c.l.b16 %v576
        %v2164 = vunpack.c.l.b16 %v577
        %v2165 = vunpack.c.l.b16 %v578
        %v2166 = vunpack.c.l.b16 %v579
        %v2167 = vunpack.c.l.b16 %v580
        %v2168 = vunpack.c.l.b16 %v581
        %v2169 = vunpack.c.l.b16 %v582
        %v2170 = vunpack.c.l.b16 %v583
        %v2171 = vunpack.c.l.b16 %v584
        %v2172 = vunpack.c.l.b16 %v585
        %v2173 = vunpack.c.l.b16 %v586
        %v2174 = vunpack.c.l.b16 %v587
        %v2175 = vunpack.c.l.b16 %v588
        %v2176 = vunpack.c.l.b16 %v589
        %v2177 = vunpack.c.l.b16 %v590
        %v2178 = vunpack.c.l.b16 %v591
        %v2179 = vunpack.c.l.b16 %v592
        %v2180 = vpack.c.b16 %v2149, %v2148
        %v2181 = vpack.c.b16 %v2151, %v2150
        %v2182 = vpack.c.b16 %v2153, %v2152
        %v2183 = vpack.c.b16 %v2155, %v2154
        %v2184 = vpack.c.b16 %v2157, %v2156
        %v2185 = vpack.c.b16 %v2159, %v2158
        %v2186 = vpack.c.b16 %v2161, %v2160
        %v2187 = vpack.c.b16 %v2163, %v2162
        %v2188 = vpack.c.b16 %v2165, %v2164
        %v2189 = vpack.c.b16 %v2167, %v2166
        %v2190 = vpack.c.b16 %v2169, %v2168
        %v2191 = vpack.c.b16 %v2171, %v2170
        %v2192 = vpack.c.b16 %v2173, %v2172
        %v2193 = vpack.c.b16 %v2175, %v2174
        %v2194 = vpack.c.b16 %v2177, %v2176
        %v2195 = vpack.c.b16 %v2179, %v2178
        %2212 = vmatpush.bf16.msra.mxu0 %v2187
        %2213 = vmatpush.bf16.msra.mxu0 %v2186
        %2214 = vmatpush.bf16.msra.mxu0 %v2185
        %2215 = vmatpush.bf16.msra.mxu0 %v2184
        %2216 = vmatpush.bf16.msra.mxu0 %v2183
        %2217 = vmatpush.bf16.msra.mxu0 %v2182
        %2218 = vmatpush.bf16.msra.mxu0 %v2181
        %2219 = vmatpush.bf16.msra.mxu0 %v2180
        %2220 = vmatmul.bf16.gmra.mxu0 %v2084
        %v2221 = vpop.f32.mrf.mxu0
        %v2222 = vadd.f32 0.0, %v2221
        %v2223 = vpop.f32.mrf.mxu0
        %v2224 = vadd.f32 0.0, %v2223
        %2225 = vmatmul.bf16.gmra.mxu0 %v2086
        %v2226 = vpop.f32.mrf.mxu0
        %v2227 = vadd.f32 0.0, %v2226
        %v2228 = vpop.f32.mrf.mxu0
        %v2229 = vadd.f32 0.0, %v2228
        %2230 = vmatmul.bf16.gmra.mxu0 %v2088
        %v2231 = vpop.f32.mrf.mxu0
        %v2232 = vadd.f32 0.0, %v2231
        %v2233 = vpop.f32.mrf.mxu0
        %v2234 = vadd.f32 0.0, %v2233
        %2235 = vmatmul.bf16.gmra.mxu0 %v2090
        %v2236 = vpop.f32.mrf.mxu0
        %v2237 = vadd.f32 0.0, %v2236
        %v2238 = vpop.f32.mrf.mxu0
        %v2239 = vadd.f32 0.0, %v2238
        %2240 = vmatmul.bf16.gmra.mxu0 %v2092
        %v2241 = vpop.f32.mrf.mxu0
        %v2242 = vadd.f32 0.0, %v2241
        %v2243 = vpop.f32.mrf.mxu0
        %v2244 = vadd.f32 0.0, %v2243
        %2245 = vmatmul.bf16.gmra.mxu0 %v2094
        %v2246 = vpop.f32.mrf.mxu0
        %v2247 = vadd.f32 0.0, %v2246
        %v2248 = vpop.f32.mrf.mxu0
        %v2249 = vadd.f32 0.0, %v2248
        %2250 = vmatmul.bf16.gmra.mxu0 %v2096
        %v2251 = vpop.f32.mrf.mxu0
        %v2252 = vadd.f32 0.0, %v2251
        %v2253 = vpop.f32.mrf.mxu0
        %v2254 = vadd.f32 0.0, %v2253
        %2255 = vmatmul.bf16.gmra.mxu0 %v2098
        %v2256 = vpop.f32.mrf.mxu0
        %v2257 = vadd.f32 0.0, %v2256
        %v2258 = vpop.f32.mrf.mxu0
        %v2259 = vadd.f32 0.0, %v2258
        %2260 = vmatmul.bf16.gmra.mxu0 %v2100
        %v2261 = vpop.f32.mrf.mxu0
        %v2262 = vadd.f32 0.0, %v2261
        %v2263 = vpop.f32.mrf.mxu0
        %v2264 = vadd.f32 0.0, %v2263
        %2265 = vmatmul.bf16.gmra.mxu0 %v2102
        %v2266 = vpop.f32.mrf.mxu0
        %v2267 = vadd.f32 0.0, %v2266
        %v2268 = vpop.f32.mrf.mxu0
        %v2269 = vadd.f32 0.0, %v2268
        %2270 = vmatmul.bf16.gmra.mxu0 %v2104
        %v2271 = vpop.f32.mrf.mxu0
        %v2272 = vadd.f32 0.0, %v2271
        %v2273 = vpop.f32.mrf.mxu0
        %v2274 = vadd.f32 0.0, %v2273
        %2275 = vmatmul.bf16.gmra.mxu0 %v2106
        %v2276 = vpop.f32.mrf.mxu0
        %v2277 = vadd.f32 0.0, %v2276
        %v2278 = vpop.f32.mrf.mxu0
        %v2279 = vadd.f32 0.0, %v2278
        %2280 = vmatmul.bf16.gmra.mxu0 %v2108
        %v2281 = vpop.f32.mrf.mxu0
        %v2282 = vadd.f32 0.0, %v2281
        %v2283 = vpop.f32.mrf.mxu0
        %v2284 = vadd.f32 0.0, %v2283
        %2285 = vmatmul.bf16.gmra.mxu0 %v2110
        %v2286 = vpop.f32.mrf.mxu0
        %v2287 = vadd.f32 0.0, %v2286
        %v2288 = vpop.f32.mrf.mxu0
        %v2289 = vadd.f32 0.0, %v2288
        %2290 = vmatmul.bf16.gmra.mxu0 %v2112
        %v2291 = vpop.f32.mrf.mxu0
        %v2292 = vadd.f32 0.0, %v2291
        %v2293 = vpop.f32.mrf.mxu0
        %v2294 = vadd.f32 0.0, %v2293
        %2295 = vmatmul.bf16.gmra.mxu0 %v2114
        %v2296 = vpop.f32.mrf.mxu0
        %v2297 = vadd.f32 0.0, %v2296
        %v2298 = vpop.f32.mrf.mxu0
        %v2299 = vadd.f32 0.0, %v2298
        %2300 = vdwg.mxu0
        %2301 = vmatpush.bf16.msra.mxu0 %v2195
        %2302 = vmatpush.bf16.msra.mxu0 %v2194
        %2303 = vmatpush.bf16.msra.mxu0 %v2193
        %2304 = vmatpush.bf16.msra.mxu0 %v2192
        %2305 = vmatpush.bf16.msra.mxu0 %v2191
        %2306 = vmatpush.bf16.msra.mxu0 %v2190
        %2307 = vmatpush.bf16.msra.mxu0 %v2189
        %2308 = vmatpush.bf16.msra.mxu0 %v2188
        %2309 = vmatmul.bf16.gmra.mxu0 %v2085
        %v2310 = vpop.f32.mrf.mxu0
        %v2311 = vadd.f32 %v2222, %v2310
        %v2312 = vpop.f32.mrf.mxu0
        %v2313 = vadd.f32 %v2224, %v2312
        %2314 = vmatmul.bf16.gmra.mxu0 %v2087
        %v2315 = vpop.f32.mrf.mxu0
        %v2316 = vadd.f32 %v2227, %v2315
        %v2317 = vpop.f32.mrf.mxu0
        %v2318 = vadd.f32 %v2229, %v2317
        %2319 = vmatmul.bf16.gmra.mxu0 %v2089
        %v2320 = vpop.f32.mrf.mxu0
        %v2321 = vadd.f32 %v2232, %v2320
        %v2322 = vpop.f32.mrf.mxu0
        %v2323 = vadd.f32 %v2234, %v2322
        %2324 = vmatmul.bf16.gmra.mxu0 %v2091
        %v2325 = vpop.f32.mrf.mxu0
        %v2326 = vadd.f32 %v2237, %v2325
        %v2327 = vpop.f32.mrf.mxu0
        %v2328 = vadd.f32 %v2239, %v2327
        %2329 = vmatmul.bf16.gmra.mxu0 %v2093
        %v2330 = vpop.f32.mrf.mxu0
        %v2331 = vadd.f32 %v2242, %v2330
        %v2332 = vpop.f32.mrf.mxu0
        %v2333 = vadd.f32 %v2244, %v2332
        %2334 = vmatmul.bf16.gmra.mxu0 %v2095
        %v2335 = vpop.f32.mrf.mxu0
        %v2336 = vadd.f32 %v2247, %v2335
        %v2337 = vpop.f32.mrf.mxu0
        %v2338 = vadd.f32 %v2249, %v2337
        %2339 = vmatmul.bf16.gmra.mxu0 %v2097
        %v2340 = vpop.f32.mrf.mxu0
        %v2341 = vadd.f32 %v2252, %v2340
        %v2342 = vpop.f32.mrf.mxu0
        %v2343 = vadd.f32 %v2254, %v2342
        %2344 = vmatmul.bf16.gmra.mxu0 %v2099
        %v2345 = vpop.f32.mrf.mxu0
        %v2346 = vadd.f32 %v2257, %v2345
        %v2347 = vpop.f32.mrf.mxu0
        %v2348 = vadd.f32 %v2259, %v2347
        %2349 = vmatmul.bf16.gmra.mxu0 %v2101
        %v2350 = vpop.f32.mrf.mxu0
        %v2351 = vadd.f32 %v2262, %v2350
        %v2352 = vpop.f32.mrf.mxu0
        %v2353 = vadd.f32 %v2264, %v2352
        %2354 = vmatmul.bf16.gmra.mxu0 %v2103
        %v2355 = vpop.f32.mrf.mxu0
        %v2356 = vadd.f32 %v2267, %v2355
        %v2357 = vpop.f32.mrf.mxu0
        %v2358 = vadd.f32 %v2269, %v2357
        %2359 = vmatmul.bf16.gmra.mxu0 %v2105
        %v2360 = vpop.f32.mrf.mxu0
        %v2361 = vadd.f32 %v2272, %v2360
        %v2362 = vpop.f32.mrf.mxu0
        %v2363 = vadd.f32 %v2274, %v2362
        %2364 = vmatmul.bf16.gmra.mxu0 %v2107
        %v2365 = vpop.f32.mrf.mxu0
        %v2366 = vadd.f32 %v2277, %v2365
        %v2367 = vpop.f32.mrf.mxu0
        %v2368 = vadd.f32 %v2279, %v2367
        %2369 = vmatmul.bf16.gmra.mxu0 %v2109
        %v2370 = vpop.f32.mrf.mxu0
        %v2371 = vadd.f32 %v2282, %v2370
        %v2372 = vpop.f32.mrf.mxu0
        %v2373 = vadd.f32 %v2284, %v2372
        %2374 = vmatmul.bf16.gmra.mxu0 %v2111
        %v2375 = vpop.f32.mrf.mxu0
        %v2376 = vadd.f32 %v2287, %v2375
        %v2377 = vpop.f32.mrf.mxu0
        %v2378 = vadd.f32 %v2289, %v2377
        %2379 = vmatmul.bf16.gmra.mxu0 %v2113
        %v2380 = vpop.f32.mrf.mxu0
        %v2381 = vadd.f32 %v2292, %v2380
        %v2382 = vpop.f32.mrf.mxu0
        %v2383 = vadd.f32 %v2294, %v2382
        %2384 = vmatmul.bf16.gmra.mxu0 %v2115
        %v2385 = vpop.f32.mrf.mxu0
        %v2386 = vadd.f32 %v2297, %v2385
        %v2387 = vpop.f32.mrf.mxu0
        %v2388 = vadd.f32 %v2299, %v2387
        %2389 = vdwg.mxu0
        %v2390 = vadd.f32 %v2052, %v2311
        %v2391 = vadd.f32 %v2053, %v2313
        %v2392 = vadd.f32 %v2054, %v2316
        %v2393 = vadd.f32 %v2055, %v2318
        %v2394 = vadd.f32 %v2056, %v2321
        %v2395 = vadd.f32 %v2057, %v2323
        %v2396 = vadd.f32 %v2058, %v2326
        %v2397 = vadd.f32 %v2059, %v2328
        %v2398 = vadd.f32 %v2060, %v2331
        %v2399 = vadd.f32 %v2061, %v2333
        %v2400 = vadd.f32 %v2062, %v2336
        %v2401 = vadd.f32 %v2063, %v2338
        %v2402 = vadd.f32 %v2064, %v2341
        %v2403 = vadd.f32 %v2065, %v2343
        %v2404 = vadd.f32 %v2066, %v2346
        %v2405 = vadd.f32 %v2067, %v2348
        %v2406 = vadd.f32 %v2068, %v2351
        %v2407 = vadd.f32 %v2069, %v2353
        %v2408 = vadd.f32 %v2070, %v2356
        %v2409 = vadd.f32 %v2071, %v2358
        %v2410 = vadd.f32 %v2072, %v2361
        %v2411 = vadd.f32 %v2073, %v2363
        %v2412 = vadd.f32 %v2074, %v2366
        %v2413 = vadd.f32 %v2075, %v2368
        %v2414 = vadd.f32 %v2076, %v2371
        %v2415 = vadd.f32 %v2077, %v2373
        %v2416 = vadd.f32 %v2078, %v2376
        %v2417 = vadd.f32 %v2079, %v2378
        %v2418 = vadd.f32 %v2080, %v2381
        %v2419 = vadd.f32 %v2081, %v2383
        %v2420 = vadd.f32 %v2082, %v2386
        %v2421 = vadd.f32 %v2083, %v2388
        %2422 = vst [vmem:[#allocation4] sm:$0xff] %v2390
        %2423 = vst [vmem:[#allocation4 + $0x8] sm:$0xff] %v2391
        %2424 = vst [vmem:[#allocation4 + $0x10] sm:$0xff] %v2392
        %2425 = vst [vmem:[#allocation4 + $0x18] sm:$0xff] %v2393
        %2426 = vst [vmem:[#allocation4 + $0x20] sm:$0xff] %v2394
        %2427 = vst [vmem:[#allocation4 + $0x28] sm:$0xff] %v2395
        %2428 = vst [vmem:[#allocation4 + $0x30] sm:$0xff] %v2396
        %2429 = vst [vmem:[#allocation4 + $0x38] sm:$0xff] %v2397
        %2430 = vst [vmem:[#allocation4 + $0x40] sm:$0xff] %v2398
        %2431 = vst [vmem:[#allocation4 + $0x48] sm:$0xff] %v2399
        %2432 = vst [vmem:[#allocation4 + $0x50] sm:$0xff] %v2400
        %2433 = vst [vmem:[#allocation4 + $0x58] sm:$0xff] %v2401
        %2434 = vst [vmem:[#allocation4 + $0x60] sm:$0xff] %v2402
        %2435 = vst [vmem:[#allocation4 + $0x68] sm:$0xff] %v2403
        %2436 = vst [vmem:[#allocation4 + $0x70] sm:$0xff] %v2404
        %2437 = vst [vmem:[#allocation4 + $0x78] sm:$0xff] %v2405
        %2438 = vst [vmem:[#allocation4 + $0x80] sm:$0xff] %v2406
        %2439 = vst [vmem:[#allocation4 + $0x88] sm:$0xff] %v2407
        %2440 = vst [vmem:[#allocation4 + $0x90] sm:$0xff] %v2408
        %2441 = vst [vmem:[#allocation4 + $0x98] sm:$0xff] %v2409
        %2442 = vst [vmem:[#allocation4 + $0xa0] sm:$0xff] %v2410
        %2443 = vst [vmem:[#allocation4 + $0xa8] sm:$0xff] %v2411
        %2444 = vst [vmem:[#allocation4 + $0xb0] sm:$0xff] %v2412
        %2445 = vst [vmem:[#allocation4 + $0xb8] sm:$0xff] %v2413
        %2446 = vst [vmem:[#allocation4 + $0xc0] sm:$0xff] %v2414
        %2447 = vst [vmem:[#allocation4 + $0xc8] sm:$0xff] %v2415
        %2448 = vst [vmem:[#allocation4 + $0xd0] sm:$0xff] %v2416
        %2449 = vst [vmem:[#allocation4 + $0xd8] sm:$0xff] %v2417
        %2450 = vst [vmem:[#allocation4 + $0xe0] sm:$0xff] %v2418
        %2451 = vst [vmem:[#allocation4 + $0xe8] sm:$0xff] %v2419
        %2452 = vst [vmem:[#allocation4 + $0xf0] sm:$0xff] %v2420
        %2453 = vst [vmem:[#allocation4 + $0xf8] sm:$0xff] %v2421
        %2454 = vst.msk [vmem:[#allocation2] sm:$0xff] %vm1827, %v1155
        %2455 = vst.msk [vmem:[#allocation2 + $0x8] sm:$0xff] %vm1827, %v1156
        %2456 = vst.msk [vmem:[#allocation2 + $0x10] sm:$0xff] %vm1827, %v1157
        %2457 = vst.msk [vmem:[#allocation2 + $0x18] sm:$0xff] %vm1827, %v1158
        %2458 = vst.msk [vmem:[#allocation2 + $0x20] sm:$0xff] %vm1827, %v1159
        %2459 = vst.msk [vmem:[#allocation2 + $0x28] sm:$0xff] %vm1827, %v1160
        %2460 = vst.msk [vmem:[#allocation2 + $0x30] sm:$0xff] %vm1827, %v1161
        %2461 = vst.msk [vmem:[#allocation2 + $0x38] sm:$0xff] %vm1827, %v1162
        %2462 = vst.msk [vmem:[#allocation2 + $0x40] sm:$0xff] %vm1827, %v1163
        %2463 = vst.msk [vmem:[#allocation2 + $0x48] sm:$0xff] %vm1827, %v1164
        %2464 = vst.msk [vmem:[#allocation2 + $0x50] sm:$0xff] %vm1827, %v1165
        %2465 = vst.msk [vmem:[#allocation2 + $0x58] sm:$0xff] %vm1827, %v1166
        %2466 = vst.msk [vmem:[#allocation2 + $0x60] sm:$0xff] %vm1827, %v1167
        %2467 = vst.msk [vmem:[#allocation2 + $0x68] sm:$0xff] %vm1827, %v1168
        %2468 = vst.msk [vmem:[#allocation2 + $0x70] sm:$0xff] %vm1827, %v1169
        %2469 = vst.msk [vmem:[#allocation2 + $0x78] sm:$0xff] %vm1827, %v1170
        %2470 = vst.msk [vmem:[#allocation2 + $0x80] sm:$0xff] %vm1827, %v1171
        %2471 = vst.msk [vmem:[#allocation2 + $0x88] sm:$0xff] %vm1827, %v1172
        %2472 = vst.msk [vmem:[#allocation2 + $0x90] sm:$0xff] %vm1827, %v1173
        %2473 = vst.msk [vmem:[#allocation2 + $0x98] sm:$0xff] %vm1827, %v1174
        %2474 = vst.msk [vmem:[#allocation2 + $0xa0] sm:$0xff] %vm1827, %v1175
        %2475 = vst.msk [vmem:[#allocation2 + $0xa8] sm:$0xff] %vm1827, %v1176
        %2476 = vst.msk [vmem:[#allocation2 + $0xb0] sm:$0xff] %vm1827, %v1177
        %2477 = vst.msk [vmem:[#allocation2 + $0xb8] sm:$0xff] %vm1827, %v1178
        %2478 = vst.msk [vmem:[#allocation2 + $0xc0] sm:$0xff] %vm1827, %v1179
        %2479 = vst.msk [vmem:[#allocation2 + $0xc8] sm:$0xff] %vm1827, %v1180
        %2480 = vst.msk [vmem:[#allocation2 + $0xd0] sm:$0xff] %vm1827, %v1181
        %2481 = vst.msk [vmem:[#allocation2 + $0xd8] sm:$0xff] %vm1827, %v1182
        %2482 = vst.msk [vmem:[#allocation2 + $0xe0] sm:$0xff] %vm1827, %v1183
        %2483 = vst.msk [vmem:[#allocation2 + $0xe8] sm:$0xff] %vm1827, %v1184
        %2484 = vst.msk [vmem:[#allocation2 + $0xf0] sm:$0xff] %vm1827, %v1185
        %2485 = vst.msk [vmem:[#allocation2 + $0xf8] sm:$0xff] %vm1827, %v1186
        // Predicated region
        $region49: #{attn_block_forward.3} parent=43 // pred_check
          %p2486 = pneg %p396
        $region50: #{attn_block_forward.3} parent=43 // pred_check_branch
          %2488 = sbr.rel (%p2486) target = $region52
        $region51: #{attn_block_forward.3} parent=43 // pred_region
          %v2489 = vld [vmem:[#allocation4] sm:$0xff]
          %v2490 = vld [vmem:[#allocation4 + $0x8] sm:$0xff]
          %v2491 = vld [vmem:[#allocation4 + $0x10] sm:$0xff]
          %v2492 = vld [vmem:[#allocation4 + $0x18] sm:$0xff]
          %v2493 = vld [vmem:[#allocation4 + $0x20] sm:$0xff]
          %v2494 = vld [vmem:[#allocation4 + $0x28] sm:$0xff]
          %v2495 = vld [vmem:[#allocation4 + $0x30] sm:$0xff]
          %v2496 = vld [vmem:[#allocation4 + $0x38] sm:$0xff]
          %v2497 = vld [vmem:[#allocation4 + $0x40] sm:$0xff]
          %v2498 = vld [vmem:[#allocation4 + $0x48] sm:$0xff]
          %v2499 = vld [vmem:[#allocation4 + $0x50] sm:$0xff]
          %v2500 = vld [vmem:[#allocation4 + $0x58] sm:$0xff]
          %v2501 = vld [vmem:[#allocation4 + $0x60] sm:$0xff]
          %v2502 = vld [vmem:[#allocation4 + $0x68] sm:$0xff]
          %v2503 = vld [vmem:[#allocation4 + $0x70] sm:$0xff]
          %v2504 = vld [vmem:[#allocation4 + $0x78] sm:$0xff]
          %v2505 = vld [vmem:[#allocation4 + $0x80] sm:$0xff]
          %v2506 = vld [vmem:[#allocation4 + $0x88] sm:$0xff]
          %v2507 = vld [vmem:[#allocation4 + $0x90] sm:$0xff]
          %v2508 = vld [vmem:[#allocation4 + $0x98] sm:$0xff]
          %v2509 = vld [vmem:[#allocation4 + $0xa0] sm:$0xff]
          %v2510 = vld [vmem:[#allocation4 + $0xa8] sm:$0xff]
          %v2511 = vld [vmem:[#allocation4 + $0xb0] sm:$0xff]
          %v2512 = vld [vmem:[#allocation4 + $0xb8] sm:$0xff]
          %v2513 = vld [vmem:[#allocation4 + $0xc0] sm:$0xff]
          %v2514 = vld [vmem:[#allocation4 + $0xc8] sm:$0xff]
          %v2515 = vld [vmem:[#allocation4 + $0xd0] sm:$0xff]
          %v2516 = vld [vmem:[#allocation4 + $0xd8] sm:$0xff]
          %v2517 = vld [vmem:[#allocation4 + $0xe0] sm:$0xff]
          %v2518 = vld [vmem:[#allocation4 + $0xe8] sm:$0xff]
          %v2519 = vld [vmem:[#allocation4 + $0xf0] sm:$0xff]
          %v2520 = vld [vmem:[#allocation4 + $0xf8] sm:$0xff]
          %v2521 = vld [vmem:[#allocation3] sm:$0xff]
          %v2522 = vld [vmem:[#allocation3 + $0x8] sm:$0xff]
          %v2523 = vld [vmem:[#allocation3 + $0x10] sm:$0xff]
          %v2524 = vld [vmem:[#allocation3 + $0x18] sm:$0xff]
          %v2525 = vld [vmem:[#allocation3 + $0x20] sm:$0xff]
          %v2526 = vld [vmem:[#allocation3 + $0x28] sm:$0xff]
          %v2527 = vld [vmem:[#allocation3 + $0x30] sm:$0xff]
          %v2528 = vld [vmem:[#allocation3 + $0x38] sm:$0xff]
          %v2529 = vld [vmem:[#allocation3 + $0x40] sm:$0xff]
          %v2530 = vld [vmem:[#allocation3 + $0x48] sm:$0xff]
          %v2531 = vld [vmem:[#allocation3 + $0x50] sm:$0xff]
          %v2532 = vld [vmem:[#allocation3 + $0x58] sm:$0xff]
          %v2533 = vld [vmem:[#allocation3 + $0x60] sm:$0xff]
          %v2534 = vld [vmem:[#allocation3 + $0x68] sm:$0xff]
          %v2535 = vld [vmem:[#allocation3 + $0x70] sm:$0xff]
          %v2536 = vld [vmem:[#allocation3 + $0x78] sm:$0xff]
          %v2537 = vld [vmem:[#allocation3 + $0x80] sm:$0xff]
          %v2538 = vld [vmem:[#allocation3 + $0x88] sm:$0xff]
          %v2539 = vld [vmem:[#allocation3 + $0x90] sm:$0xff]
          %v2540 = vld [vmem:[#allocation3 + $0x98] sm:$0xff]
          %v2541 = vld [vmem:[#allocation3 + $0xa0] sm:$0xff]
          %v2542 = vld [vmem:[#allocation3 + $0xa8] sm:$0xff]
          %v2543 = vld [vmem:[#allocation3 + $0xb0] sm:$0xff]
          %v2544 = vld [vmem:[#allocation3 + $0xb8] sm:$0xff]
          %v2545 = vld [vmem:[#allocation3 + $0xc0] sm:$0xff]
          %v2546 = vld [vmem:[#allocation3 + $0xc8] sm:$0xff]
          %v2547 = vld [vmem:[#allocation3 + $0xd0] sm:$0xff]
          %v2548 = vld [vmem:[#allocation3 + $0xd8] sm:$0xff]
          %v2549 = vld [vmem:[#allocation3 + $0xe0] sm:$0xff]
          %v2550 = vld [vmem:[#allocation3 + $0xe8] sm:$0xff]
          %v2551 = vld [vmem:[#allocation3 + $0xf0] sm:$0xff]
          %v2552 = vld [vmem:[#allocation3 + $0xf8] sm:$0xff]
          %v2553 = vrcp.pop %v2521
          %v2554 = vrcp.pop %v2522
          %v2555 = vrcp.pop %v2523
          %v2556 = vrcp.pop %v2524
          %v2557 = vrcp.pop %v2525
          %v2558 = vrcp.pop %v2526
          %v2559 = vrcp.pop %v2527
          %v2560 = vrcp.pop %v2528
          %v2561 = vrcp.pop %v2529
          %v2562 = vrcp.pop %v2530
          %v2563 = vrcp.pop %v2531
          %v2564 = vrcp.pop %v2532
          %v2565 = vrcp.pop %v2533
          %v2566 = vrcp.pop %v2534
          %v2567 = vrcp.pop %v2535
          %v2568 = vrcp.pop %v2536
          %v2569 = vrcp.pop %v2537
          %v2570 = vrcp.pop %v2538
          %v2571 = vrcp.pop %v2539
          %v2572 = vrcp.pop %v2540
          %v2573 = vrcp.pop %v2541
          %v2574 = vrcp.pop %v2542
          %v2575 = vrcp.pop %v2543
          %v2576 = vrcp.pop %v2544
          %v2577 = vrcp.pop %v2545
          %v2578 = vrcp.pop %v2546
          %v2579 = vrcp.pop %v2547
          %v2580 = vrcp.pop %v2548
          %v2581 = vrcp.pop %v2549
          %v2582 = vrcp.pop %v2550
          %v2583 = vrcp.pop %v2551
          %v2584 = vrcp.pop %v2552
          %2586 = vset.pattern.permute.xlu0 0
          %2587 = vperm.xlu0 %2586, %v2553
          %v2588 = vpop.permute.xlu0 %2587
          %2591 = vset.pattern.permute.xlu0 0
          %2592 = vperm.xlu0 %2591, %v2554
          %v2593 = vpop.permute.xlu0 %2592
          %2596 = vset.pattern.permute.xlu0 0
          %2597 = vperm.xlu0 %2596, %v2555
          %v2598 = vpop.permute.xlu0 %2597
          %2601 = vset.pattern.permute.xlu0 0
          %2602 = vperm.xlu0 %2601, %v2556
          %v2603 = vpop.permute.xlu0 %2602
          %2606 = vset.pattern.permute.xlu0 0
          %2607 = vperm.xlu0 %2606, %v2557
          %v2608 = vpop.permute.xlu0 %2607
          %2611 = vset.pattern.permute.xlu0 0
          %2612 = vperm.xlu0 %2611, %v2558
          %v2613 = vpop.permute.xlu0 %2612
          %2616 = vset.pattern.permute.xlu0 0
          %2617 = vperm.xlu0 %2616, %v2559
          %v2618 = vpop.permute.xlu0 %2617
          %2621 = vset.pattern.permute.xlu0 0
          %2622 = vperm.xlu0 %2621, %v2560
          %v2623 = vpop.permute.xlu0 %2622
          %2626 = vset.pattern.permute.xlu0 0
          %2627 = vperm.xlu0 %2626, %v2561
          %v2628 = vpop.permute.xlu0 %2627
          %2631 = vset.pattern.permute.xlu0 0
          %2632 = vperm.xlu0 %2631, %v2562
          %v2633 = vpop.permute.xlu0 %2632
          %2636 = vset.pattern.permute.xlu0 0
          %2637 = vperm.xlu0 %2636, %v2563
          %v2638 = vpop.permute.xlu0 %2637
          %2641 = vset.pattern.permute.xlu0 0
          %2642 = vperm.xlu0 %2641, %v2564
          %v2643 = vpop.permute.xlu0 %2642
          %2646 = vset.pattern.permute.xlu0 0
          %2647 = vperm.xlu0 %2646, %v2565
          %v2648 = vpop.permute.xlu0 %2647
          %2651 = vset.pattern.permute.xlu0 0
          %2652 = vperm.xlu0 %2651, %v2566
          %v2653 = vpop.permute.xlu0 %2652
          %2656 = vset.pattern.permute.xlu0 0
          %2657 = vperm.xlu0 %2656, %v2567
          %v2658 = vpop.permute.xlu0 %2657
          %2661 = vset.pattern.permute.xlu0 0
          %2662 = vperm.xlu0 %2661, %v2568
          %v2663 = vpop.permute.xlu0 %2662
          %2666 = vset.pattern.permute.xlu0 0
          %2667 = vperm.xlu0 %2666, %v2569
          %v2668 = vpop.permute.xlu0 %2667
          %2671 = vset.pattern.permute.xlu0 0
          %2672 = vperm.xlu0 %2671, %v2570
          %v2673 = vpop.permute.xlu0 %2672
          %2676 = vset.pattern.permute.xlu0 0
          %2677 = vperm.xlu0 %2676, %v2571
          %v2678 = vpop.permute.xlu0 %2677
          %2681 = vset.pattern.permute.xlu0 0
          %2682 = vperm.xlu0 %2681, %v2572
          %v2683 = vpop.permute.xlu0 %2682
          %2686 = vset.pattern.permute.xlu0 0
          %2687 = vperm.xlu0 %2686, %v2573
          %v2688 = vpop.permute.xlu0 %2687
          %2691 = vset.pattern.permute.xlu0 0
          %2692 = vperm.xlu0 %2691, %v2574
          %v2693 = vpop.permute.xlu0 %2692
          %2696 = vset.pattern.permute.xlu0 0
          %2697 = vperm.xlu0 %2696, %v2575
          %v2698 = vpop.permute.xlu0 %2697
          %2701 = vset.pattern.permute.xlu0 0
          %2702 = vperm.xlu0 %2701, %v2576
          %v2703 = vpop.permute.xlu0 %2702
          %2706 = vset.pattern.permute.xlu0 0
          %2707 = vperm.xlu0 %2706, %v2577
          %v2708 = vpop.permute.xlu0 %2707
          %2711 = vset.pattern.permute.xlu0 0
          %2712 = vperm.xlu0 %2711, %v2578
          %v2713 = vpop.permute.xlu0 %2712
          %2716 = vset.pattern.permute.xlu0 0
          %2717 = vperm.xlu0 %2716, %v2579
          %v2718 = vpop.permute.xlu0 %2717
          %2721 = vset.pattern.permute.xlu0 0
          %2722 = vperm.xlu0 %2721, %v2580
          %v2723 = vpop.permute.xlu0 %2722
          %2726 = vset.pattern.permute.xlu0 0
          %2727 = vperm.xlu0 %2726, %v2581
          %v2728 = vpop.permute.xlu0 %2727
          %2731 = vset.pattern.permute.xlu0 0
          %2732 = vperm.xlu0 %2731, %v2582
          %v2733 = vpop.permute.xlu0 %2732
          %2736 = vset.pattern.permute.xlu0 0
          %2737 = vperm.xlu0 %2736, %v2583
          %v2738 = vpop.permute.xlu0 %2737
          %2741 = vset.pattern.permute.xlu0 0
          %2742 = vperm.xlu0 %2741, %v2584
          %v2743 = vpop.permute.xlu0 %2742
          %v2745 = vmul.f32 %v2489, %v2588
          %v2746 = vmul.f32 %v2490, %v2593
          %v2747 = vmul.f32 %v2491, %v2598
          %v2748 = vmul.f32 %v2492, %v2603
          %v2749 = vmul.f32 %v2493, %v2608
          %v2750 = vmul.f32 %v2494, %v2613
          %v2751 = vmul.f32 %v2495, %v2618
          %v2752 = vmul.f32 %v2496, %v2623
          %v2753 = vmul.f32 %v2497, %v2628
          %v2754 = vmul.f32 %v2498, %v2633
          %v2755 = vmul.f32 %v2499, %v2638
          %v2756 = vmul.f32 %v2500, %v2643
          %v2757 = vmul.f32 %v2501, %v2648
          %v2758 = vmul.f32 %v2502, %v2653
          %v2759 = vmul.f32 %v2503, %v2658
          %v2760 = vmul.f32 %v2504, %v2663
          %v2761 = vmul.f32 %v2505, %v2668
          %v2762 = vmul.f32 %v2506, %v2673
          %v2763 = vmul.f32 %v2507, %v2678
          %v2764 = vmul.f32 %v2508, %v2683
          %v2765 = vmul.f32 %v2509, %v2688
          %v2766 = vmul.f32 %v2510, %v2693
          %v2767 = vmul.f32 %v2511, %v2698
          %v2768 = vmul.f32 %v2512, %v2703
          %v2769 = vmul.f32 %v2513, %v2708
          %v2770 = vmul.f32 %v2514, %v2713
          %v2771 = vmul.f32 %v2515, %v2718
          %v2772 = vmul.f32 %v2516, %v2723
          %v2773 = vmul.f32 %v2517, %v2728
          %v2774 = vmul.f32 %v2518, %v2733
          %v2775 = vmul.f32 %v2519, %v2738
          %v2776 = vmul.f32 %v2520, %v2743
          %v2777 = vpack.c.bf16 %v2746, %v2745
          %v2778 = vpack.c.bf16 %v2748, %v2747
          %v2779 = vpack.c.bf16 %v2750, %v2749
          %v2780 = vpack.c.bf16 %v2752, %v2751
          %v2781 = vpack.c.bf16 %v2754, %v2753
          %v2782 = vpack.c.bf16 %v2756, %v2755
          %v2783 = vpack.c.bf16 %v2758, %v2757
          %v2784 = vpack.c.bf16 %v2760, %v2759
          %v2785 = vpack.c.bf16 %v2762, %v2761
          %v2786 = vpack.c.bf16 %v2764, %v2763
          %v2787 = vpack.c.bf16 %v2766, %v2765
          %v2788 = vpack.c.bf16 %v2768, %v2767
          %v2789 = vpack.c.bf16 %v2770, %v2769
          %v2790 = vpack.c.bf16 %v2772, %v2771
          %v2791 = vpack.c.bf16 %v2774, %v2773
          %v2792 = vpack.c.bf16 %v2776, %v2775
          %v2793 = vld [vmem:[%s4] sm:$0xf]
          %v2794 = vld [vmem:[%s4 + $0x4] sm:$0xf]
          %v2795 = vld [vmem:[%s4 + $0x8] sm:$0xf]
          %v2796 = vld [vmem:[%s4 + $0xc] sm:$0xf]
          %v2797 = vld [vmem:[%s4 + $0x10] sm:$0xf]
          %v2798 = vld [vmem:[%s4 + $0x14] sm:$0xf]
          %v2799 = vld [vmem:[%s4 + $0x18] sm:$0xf]
          %v2800 = vld [vmem:[%s4 + $0x1c] sm:$0xf]
          %v2801 = vld [vmem:[%s4 + $0x20] sm:$0xf]
          %v2802 = vld [vmem:[%s4 + $0x24] sm:$0xf]
          %v2803 = vld [vmem:[%s4 + $0x28] sm:$0xf]
          %v2804 = vld [vmem:[%s4 + $0x2c] sm:$0xf]
          %v2805 = vld [vmem:[%s4 + $0x30] sm:$0xf]
          %v2806 = vld [vmem:[%s4 + $0x34] sm:$0xf]
          %v2807 = vld [vmem:[%s4 + $0x38] sm:$0xf]
          %v2808 = vld [vmem:[%s4 + $0x3c] sm:$0xf]
          %v2809 = vld [vmem:[%s5] sm:$0x1]
          %v2811 = vperm.slane %v2809, 0
          %v2829 = vunpack.c.l.b16 %v2793
          %v2830 = vunpack.c.l.b16 %v2794
          %v2831 = vunpack.c.l.b16 %v2795
          %v2832 = vunpack.c.l.b16 %v2796
          %v2833 = vunpack.c.l.b16 %v2797
          %v2834 = vunpack.c.l.b16 %v2798
          %v2835 = vunpack.c.l.b16 %v2799
          %v2836 = vunpack.c.l.b16 %v2800
          %v2837 = vunpack.c.l.b16 %v2801
          %v2838 = vunpack.c.l.b16 %v2802
          %v2839 = vunpack.c.l.b16 %v2803
          %v2840 = vunpack.c.l.b16 %v2804
          %v2841 = vunpack.c.l.b16 %v2805
          %v2842 = vunpack.c.l.b16 %v2806
          %v2843 = vunpack.c.l.b16 %v2807
          %v2844 = vunpack.c.l.b16 %v2808
          %v2845 = vpack.c.b16 %v2830, %v2829
          %v2846 = vpack.c.b16 %v2832, %v2831
          %v2847 = vpack.c.b16 %v2834, %v2833
          %v2848 = vpack.c.b16 %v2836, %v2835
          %v2849 = vpack.c.b16 %v2838, %v2837
          %v2850 = vpack.c.b16 %v2840, %v2839
          %v2851 = vpack.c.b16 %v2842, %v2841
          %v2852 = vpack.c.b16 %v2844, %v2843
          %2861 = vmatpush.bf16.msra.mxu0 %v2852
          %2862 = vmatpush.bf16.msra.mxu0 %v2851
          %2863 = vmatpush.bf16.msra.mxu0 %v2850
          %2864 = vmatpush.bf16.msra.mxu0 %v2849
          %2865 = vmatpush.bf16.msra.mxu0 %v2848
          %2866 = vmatpush.bf16.msra.mxu0 %v2847
          %2867 = vmatpush.bf16.msra.mxu0 %v2846
          %2868 = vmatpush.bf16.msra.mxu0 %v2845
          %2869 = vmatmul.bf16.gmra.mxu0 %v2777
          %v2870 = vpop.f32.mrf.mxu0
          %v2871 = vadd.f32 %v2811, %v2870
          %v2872 = vpop.f32.mrf.mxu0
          %v2873 = vadd.f32 %v2811, %v2872
          %2874 = vmatmul.bf16.gmra.mxu0 %v2778
          %v2875 = vpop.f32.mrf.mxu0
          %v2876 = vadd.f32 %v2811, %v2875
          %v2877 = vpop.f32.mrf.mxu0
          %v2878 = vadd.f32 %v2811, %v2877
          %2879 = vmatmul.bf16.gmra.mxu0 %v2779
          %v2880 = vpop.f32.mrf.mxu0
          %v2881 = vadd.f32 %v2811, %v2880
          %v2882 = vpop.f32.mrf.mxu0
          %v2883 = vadd.f32 %v2811, %v2882
          %2884 = vmatmul.bf16.gmra.mxu0 %v2780
          %v2885 = vpop.f32.mrf.mxu0
          %v2886 = vadd.f32 %v2811, %v2885
          %v2887 = vpop.f32.mrf.mxu0
          %v2888 = vadd.f32 %v2811, %v2887
          %2889 = vmatmul.bf16.gmra.mxu0 %v2781
          %v2890 = vpop.f32.mrf.mxu0
          %v2891 = vadd.f32 %v2811, %v2890
          %v2892 = vpop.f32.mrf.mxu0
          %v2893 = vadd.f32 %v2811, %v2892
          %2894 = vmatmul.bf16.gmra.mxu0 %v2782
          %v2895 = vpop.f32.mrf.mxu0
          %v2896 = vadd.f32 %v2811, %v2895
          %v2897 = vpop.f32.mrf.mxu0
          %v2898 = vadd.f32 %v2811, %v2897
          %2899 = vmatmul.bf16.gmra.mxu0 %v2783
          %v2900 = vpop.f32.mrf.mxu0
          %v2901 = vadd.f32 %v2811, %v2900
          %v2902 = vpop.f32.mrf.mxu0
          %v2903 = vadd.f32 %v2811, %v2902
          %2904 = vmatmul.bf16.gmra.mxu0 %v2784
          %v2905 = vpop.f32.mrf.mxu0
          %v2906 = vadd.f32 %v2811, %v2905
          %v2907 = vpop.f32.mrf.mxu0
          %v2908 = vadd.f32 %v2811, %v2907
          %2909 = vmatmul.bf16.gmra.mxu0 %v2785
          %v2910 = vpop.f32.mrf.mxu0
          %v2911 = vadd.f32 %v2811, %v2910
          %v2912 = vpop.f32.mrf.mxu0
          %v2913 = vadd.f32 %v2811, %v2912
          %2914 = vmatmul.bf16.gmra.mxu0 %v2786
          %v2915 = vpop.f32.mrf.mxu0
          %v2916 = vadd.f32 %v2811, %v2915
          %v2917 = vpop.f32.mrf.mxu0
          %v2918 = vadd.f32 %v2811, %v2917
          %2919 = vmatmul.bf16.gmra.mxu0 %v2787
          %v2920 = vpop.f32.mrf.mxu0
          %v2921 = vadd.f32 %v2811, %v2920
          %v2922 = vpop.f32.mrf.mxu0
          %v2923 = vadd.f32 %v2811, %v2922
          %2924 = vmatmul.bf16.gmra.mxu0 %v2788
          %v2925 = vpop.f32.mrf.mxu0
          %v2926 = vadd.f32 %v2811, %v2925
          %v2927 = vpop.f32.mrf.mxu0
          %v2928 = vadd.f32 %v2811, %v2927
          %2929 = vmatmul.bf16.gmra.mxu0 %v2789
          %v2930 = vpop.f32.mrf.mxu0
          %v2931 = vadd.f32 %v2811, %v2930
          %v2932 = vpop.f32.mrf.mxu0
          %v2933 = vadd.f32 %v2811, %v2932
          %2934 = vmatmul.bf16.gmra.mxu0 %v2790
          %v2935 = vpop.f32.mrf.mxu0
          %v2936 = vadd.f32 %v2811, %v2935
          %v2937 = vpop.f32.mrf.mxu0
          %v2938 = vadd.f32 %v2811, %v2937
          %2939 = vmatmul.bf16.gmra.mxu0 %v2791
          %v2940 = vpop.f32.mrf.mxu0
          %v2941 = vadd.f32 %v2811, %v2940
          %v2942 = vpop.f32.mrf.mxu0
          %v2943 = vadd.f32 %v2811, %v2942
          %2944 = vmatmul.bf16.gmra.mxu0 %v2792
          %v2945 = vpop.f32.mrf.mxu0
          %v2946 = vadd.f32 %v2811, %v2945
          %v2947 = vpop.f32.mrf.mxu0
          %v2948 = vadd.f32 %v2811, %v2947
          %2949 = vdwg.mxu0
          %v2950 = vld [vmem:[%s393] sm:$0xff]
          %v2951 = vld [vmem:[%s393 + $0x8] sm:$0xff]
          %v2952 = vld [vmem:[%s393 + $0x10] sm:$0xff]
          %v2953 = vld [vmem:[%s393 + $0x18] sm:$0xff]
          %v2954 = vld [vmem:[%s393 + $0x20] sm:$0xff]
          %v2955 = vld [vmem:[%s393 + $0x28] sm:$0xff]
          %v2956 = vld [vmem:[%s393 + $0x30] sm:$0xff]
          %v2957 = vld [vmem:[%s393 + $0x38] sm:$0xff]
          %v2958 = vld [vmem:[%s393 + $0x40] sm:$0xff]
          %v2959 = vld [vmem:[%s393 + $0x48] sm:$0xff]
          %v2960 = vld [vmem:[%s393 + $0x50] sm:$0xff]
          %v2961 = vld [vmem:[%s393 + $0x58] sm:$0xff]
          %v2962 = vld [vmem:[%s393 + $0x60] sm:$0xff]
          %v2963 = vld [vmem:[%s393 + $0x68] sm:$0xff]
          %v2964 = vld [vmem:[%s393 + $0x70] sm:$0xff]
          %v2965 = vld [vmem:[%s393 + $0x78] sm:$0xff]
          %v2966 = vld [vmem:[%s393 + $0x80] sm:$0xff]
          %v2967 = vld [vmem:[%s393 + $0x88] sm:$0xff]
          %v2968 = vld [vmem:[%s393 + $0x90] sm:$0xff]
          %v2969 = vld [vmem:[%s393 + $0x98] sm:$0xff]
          %v2970 = vld [vmem:[%s393 + $0xa0] sm:$0xff]
          %v2971 = vld [vmem:[%s393 + $0xa8] sm:$0xff]
          %v2972 = vld [vmem:[%s393 + $0xb0] sm:$0xff]
          %v2973 = vld [vmem:[%s393 + $0xb8] sm:$0xff]
          %v2974 = vld [vmem:[%s393 + $0xc0] sm:$0xff]
          %v2975 = vld [vmem:[%s393 + $0xc8] sm:$0xff]
          %v2976 = vld [vmem:[%s393 + $0xd0] sm:$0xff]
          %v2977 = vld [vmem:[%s393 + $0xd8] sm:$0xff]
          %v2978 = vld [vmem:[%s393 + $0xe0] sm:$0xff]
          %v2979 = vld [vmem:[%s393 + $0xe8] sm:$0xff]
          %v2980 = vld [vmem:[%s393 + $0xf0] sm:$0xff]
          %v2981 = vld [vmem:[%s393 + $0xf8] sm:$0xff]
          %v2982 = vadd.f32 %v2871, %v2950
          %v2983 = vadd.f32 %v2873, %v2951
          %v2984 = vadd.f32 %v2876, %v2952
          %v2985 = vadd.f32 %v2878, %v2953
          %v2986 = vadd.f32 %v2881, %v2954
          %v2987 = vadd.f32 %v2883, %v2955
          %v2988 = vadd.f32 %v2886, %v2956
          %v2989 = vadd.f32 %v2888, %v2957
          %v2990 = vadd.f32 %v2891, %v2958
          %v2991 = vadd.f32 %v2893, %v2959
          %v2992 = vadd.f32 %v2896, %v2960
          %v2993 = vadd.f32 %v2898, %v2961
          %v2994 = vadd.f32 %v2901, %v2962
          %v2995 = vadd.f32 %v2903, %v2963
          %v2996 = vadd.f32 %v2906, %v2964
          %v2997 = vadd.f32 %v2908, %v2965
          %v2998 = vadd.f32 %v2911, %v2966
          %v2999 = vadd.f32 %v2913, %v2967
          %v3000 = vadd.f32 %v2916, %v2968
          %v3001 = vadd.f32 %v2918, %v2969
          %v3002 = vadd.f32 %v2921, %v2970
          %v3003 = vadd.f32 %v2923, %v2971
          %v3004 = vadd.f32 %v2926, %v2972
          %v3005 = vadd.f32 %v2928, %v2973
          %v3006 = vadd.f32 %v2931, %v2974
          %v3007 = vadd.f32 %v2933, %v2975
          %v3008 = vadd.f32 %v2936, %v2976
          %v3009 = vadd.f32 %v2938, %v2977
          %v3010 = vadd.f32 %v2941, %v2978
          %v3011 = vadd.f32 %v2943, %v2979
          %v3012 = vadd.f32 %v2946, %v2980
          %v3013 = vadd.f32 %v2948, %v2981
          %3014 = vst [vmem:[%s354] sm:$0xff] %v2982
          %3015 = vst [vmem:[%s354 + $0x8] sm:$0xff] %v2983
          %3016 = vst [vmem:[%s354 + $0x10] sm:$0xff] %v2984
          %3017 = vst [vmem:[%s354 + $0x18] sm:$0xff] %v2985
          %3018 = vst [vmem:[%s354 + $0x20] sm:$0xff] %v2986
          %3019 = vst [vmem:[%s354 + $0x28] sm:$0xff] %v2987
          %3020 = vst [vmem:[%s354 + $0x30] sm:$0xff] %v2988
          %3021 = vst [vmem:[%s354 + $0x38] sm:$0xff] %v2989
          %3022 = vst [vmem:[%s354 + $0x40] sm:$0xff] %v2990
          %3023 = vst [vmem:[%s354 + $0x48] sm:$0xff] %v2991
          %3024 = vst [vmem:[%s354 + $0x50] sm:$0xff] %v2992
          %3025 = vst [vmem:[%s354 + $0x58] sm:$0xff] %v2993
          %3026 = vst [vmem:[%s354 + $0x60] sm:$0xff] %v2994
          %3027 = vst [vmem:[%s354 + $0x68] sm:$0xff] %v2995
          %3028 = vst [vmem:[%s354 + $0x70] sm:$0xff] %v2996
          %3029 = vst [vmem:[%s354 + $0x78] sm:$0xff] %v2997
          %3030 = vst [vmem:[%s354 + $0x80] sm:$0xff] %v2998
          %3031 = vst [vmem:[%s354 + $0x88] sm:$0xff] %v2999
          %3032 = vst [vmem:[%s354 + $0x90] sm:$0xff] %v3000
          %3033 = vst [vmem:[%s354 + $0x98] sm:$0xff] %v3001
          %3034 = vst [vmem:[%s354 + $0xa0] sm:$0xff] %v3002
          %3035 = vst [vmem:[%s354 + $0xa8] sm:$0xff] %v3003
          %3036 = vst [vmem:[%s354 + $0xb0] sm:$0xff] %v3004
          %3037 = vst [vmem:[%s354 + $0xb8] sm:$0xff] %v3005
          %3038 = vst [vmem:[%s354 + $0xc0] sm:$0xff] %v3006
          %3039 = vst [vmem:[%s354 + $0xc8] sm:$0xff] %v3007
          %3040 = vst [vmem:[%s354 + $0xd0] sm:$0xff] %v3008
          %3041 = vst [vmem:[%s354 + $0xd8] sm:$0xff] %v3009
          %3042 = vst [vmem:[%s354 + $0xe0] sm:$0xff] %v3010
          %3043 = vst [vmem:[%s354 + $0xe8] sm:$0xff] %v3011
          %3044 = vst [vmem:[%s354 + $0xf0] sm:$0xff] %v3012
          %3045 = vst [vmem:[%s354 + $0xf8] sm:$0xff] %v3013
        $region52: #{attn_block_forward.3} parent=43 // pred_fallthru
          _
        %s3046 = sand.u32 %s203, 1
        %s3047 = scalar_lea.sflag [#allocation6], %s3046
        %s3048 = sand.u32 %s203, 1
        %s3049 = smul.addr %s3048, 256
        %s3050 = scalar_lea.vmem [#allocation5], %s3049
        // Predicated region
        $region53: #{attn_block_forward.3} parent=43 // pred_check
          %p3051 = pneg %p213
        $region54: #{attn_block_forward.3} parent=43 // pred_check_branch
          %3053 = sbr.rel (%p3051) target = $region56
        $region55: #{attn_block_forward.3} parent=43 // pred_region
          %s3054 = smul.u32 32, %s26
          %3056 = vsyncadd %s3047, 0
          %s3057 = smul.addr %s25, 32
          %s3058 = sadd.s32 %s3054, %s3057
          %s3059 = smul.addr %s3058, 8
          %s3060 = scalar_lea.hbm %s6, %s3059
          %s3061 = sshll.u32 %s3050, 4
          %s3062 = int_to_ptr.vmem [resolvable:$true] %s3061
          %s3063 = sshll.u32 %s3060, 4
          %s3064 = int_to_ptr.hbm [resolvable:$true] %s3063
          %3069 = dma.vmem_to_hbm [thread:$0]  %s3062, 4096, %s3064, %s3047, 128, 128, 8
        $region56: #{attn_block_forward.3} parent=43 // pred_fallthru
          _
      $region44: #{attn_block_forward.3} parent=5 // pred_fallthru
        _
      %p3070 = scmp.le.s32.totalorder 2, %s15
      // Predicated region
      $region57: #{attn_block_forward.3} parent=5 // pred_check
        %p3071 = pneg %p3070
      $region58: #{attn_block_forward.3} parent=5 // pred_check_branch
        %3073 = sbr.rel (%p3071) target = $region60
      $region59: #{attn_block_forward.3} parent=5 // pred_region
        %s3074 = ssub.s32 %s15, 2
        // Predicated region
        $region61: #{attn_block_forward.3} parent=59 // pred_check
          %p3075 = pneg %p219
        $region62: #{attn_block_forward.3} parent=59 // pred_check_branch
          %3077 = sbr.rel (%p3075) target = $region64
        $region63: #{attn_block_forward.3} parent=59 // pred_region
          %s3078 = sand.u32 %s204, 1
          %s3079 = scalar_lea.sflag [#allocation6], %s3078
          %s3080 = sand.u32 %s204, 1
          %s3081 = smul.addr %s3080, 256
          %s3082 = scalar_lea.vmem [#allocation5], %s3081
          %3084 = dma.done %s3079, 4096
        $region64: #{attn_block_forward.3} parent=59 // pred_fallthru
          _
      $region60: #{attn_block_forward.3} parent=5 // pred_fallthru
        _
    $region6: #{attn_block_forward.3} parent=1 // loop_footer
      %s19 = sadd.s32 1, %s15
    $region7: #{attn_block_forward.3} parent=1 // loop_footer_branch
      %14 = sbr.rel target = $region3
    $region8: #{attn_block_forward.3} parent=1 // loop_exit
      _
    %3085 = vsyncpa [#allocation6], 1
    %s3086 = scalar_lea.sflag [#allocation6], 1
    %3087 = vsyncpa %s3086, 1

</llo_original>
